<compile_context>
chip_gen: v5e
topology: v5e:2x2
jax: 0.10.0
libtpu: 0.0.40
codegen_flags: <defaults>
</compile_context>

<pallas_src>
import math

import jax
import jax.numpy as jnp
from jax.experimental import pallas as pl
from jax.experimental.pallas import tpu as pltpu

_INV_SQRT2 = 1.0 / math.sqrt(2.0)


def _mlp_kernel(x_ref, w1_ref, b1_ref, w2_ref, b2_ref, o_ref):
    # x_ref: (tm, in_f) f32      w1_ref: (in_f, hidden) bf16   b1_ref: (1, hidden) f32
    # w2_ref: (hidden, out_f) bf16   b2_ref: (1, out_f) f32    o_ref: (tm, out_f)
    x_bf = x_ref[...].astype(jnp.bfloat16)
    h = jnp.dot(x_bf, w1_ref[...], preferred_element_type=jnp.float32)
    h = h + b1_ref[...]
    # Exact (erf) GELU in f32, matching PyTorch nn.GELU default.
    h = 0.5 * h * (1.0 + jax.lax.erf(h * _INV_SQRT2))
    y = jnp.dot(h.astype(jnp.bfloat16), w2_ref[...],
                preferred_element_type=jnp.float32)
    y = y + b2_ref[...]
    o_ref[...] = y.astype(o_ref.dtype)


def _round_up(x, m):
    return (x + m - 1) // m * m


def prepare_mlp_params(w1, b1, w2, b2, *, param_dtype=jnp.bfloat16):
    """One-time parameter preparation (do this at load time, NOT per forward).

    PyTorch layout in: w1 (hidden, in), b1 (hidden,), w2 (out, hidden), b2 (out,).
    Returns MXU-friendly (K, N) bf16 weights and (1, N) f32 biases.
    """
    w1_t = jnp.asarray(jnp.transpose(w1), param_dtype)      # (in_f, hidden)
    w2_t = jnp.asarray(jnp.transpose(w2), param_dtype)      # (hidden, out_f)
    b1_r = jnp.asarray(b1, jnp.float32).reshape(1, -1)       # (1, hidden)
    b2_r = jnp.asarray(b2, jnp.float32).reshape(1, -1)       # (1, out_f)
    return (w1_t, b1_r, w2_t, b2_r)


def mlp_forward(x, prepared_params, *, tm=256):
    """Fused Linear -> GELU -> Linear using pre-prepared (bf16, transposed) weights."""
    w1_t, b1_r, w2_t, b2_r = prepared_params
    in_f, hidden = w1_t.shape
    out_f = w2_t.shape[1]
    assert x.shape[-1] == in_f

    lead = x.shape[:-1]
    M = 1
    for d in lead:
        M *= int(d)
    x2 = x.reshape(M, in_f)

    # Tile size: multiple of 8, capped so the "parallel" grid has >= ~4 steps
    # (>= 2 steps per TensorCore on a 2-TC v7x so DMA pipelining can hide
    # prefetch/writeback), but still large (<= tm) when M is big.
    tm = _round_up(max(8, min(tm, _round_up(pl.cdiv(M, 4), 8))), 8)
    grid_m = pl.cdiv(M, tm)

    itemsize = x.dtype.itemsize
    wbytes = w1_t.size * w1_t.dtype.itemsize + w2_t.size * w2_t.dtype.itemsize

    # Explicit VMEM budget: double-buffered weights/biases + x/out tiles +
    # f32/bf16 temporaries, with 2x headroom, clamped to [32 MiB, 64 MiB].
    est = (2 * wbytes
           + 2 * tm * (in_f + out_f) * itemsize
           + 4 * tm * (2 * hidden + 2 * out_f))
    vmem_limit = int(min(64 * 1024 * 1024, max(32 * 1024 * 1024, 2 * est)))

    cost = pl.CostEstimate(
        flops=2 * M * (in_f * hidden + hidden * out_f),
        transcendentals=M * hidden,                       # erf per hidden element
        bytes_accessed=M * in_f * itemsize + wbytes + M * out_f * itemsize,
    )

    out = pl.pallas_call(
        _mlp_kernel,
        out_shape=jax.ShapeDtypeStruct((M, out_f), x.dtype),
        grid_spec=pltpu.PrefetchScalarGridSpec(
            num_scalar_prefetch=0,
            grid=(grid_m,),
            in_specs=[
                pl.BlockSpec((tm, in_f), lambda i: (i, 0)),
                pl.BlockSpec((in_f, hidden), lambda i: (0, 0)),
                pl.BlockSpec((1, hidden), lambda i: (0, 0)),
                pl.BlockSpec((hidden, out_f), lambda i: (0, 0)),
                pl.BlockSpec((1, out_f), lambda i: (0, 0)),
            ],
            out_specs=pl.BlockSpec((tm, out_f), lambda i: (i, 0)),
        ),
        compiler_params=pltpu.CompilerParams(
            dimension_semantics=("parallel",),
            vmem_limit_bytes=vmem_limit,
        ),
        cost_estimate=cost,
    )(x2, w1_t, b1_r, w2_t, b2_r)

    return out.reshape(*lead, out_f)


def _reference(x, params):
    # Plain-JAX f32 reference matching the PyTorch module (exact erf GELU).
    w1, b1, w2, b2 = params
    h = x @ w1.T + b1
    h = 0.5 * h * (1.0 + jax.lax.erf(h * _INV_SQRT2))
    return h @ w2.T + b2


if __name__ == "__main__":
    # Small TPU-friendly shapes: B=2, seq=256 tokens, in=128, hidden=512, out=128.
    B, N = 2, 256
    in_features, hidden_features, out_features = 128, 512, 128

    key = jax.random.PRNGKey(0)
    k1, k2, k3, k4, k5 = jax.random.split(key, 5)
    x = jax.random.normal(k1, (B, N, in_features), jnp.float32)
    w1 = jax.random.normal(k2, (hidden_features, in_features), jnp.float32) * 0.05
    b1 = jax.random.normal(k3, (hidden_features,), jnp.float32) * 0.05
    w2 = jax.random.normal(k4, (out_features, hidden_features), jnp.float32) * 0.05
    b2 = jax.random.normal(k5, (out_features,), jnp.float32) * 0.05
    torch_params = (w1, b1, w2, b2)

    # One-time weight prep (transpose + bf16 cast), hoisted out of the forward.
    prepared = prepare_mlp_params(*torch_params)

    y = mlp_forward(x, prepared, tm=256)
    y = jax.block_until_ready(y)
    assert y.shape == (B, N, out_features), y.shape

    ref = _reference(x, torch_params)
    max_err = float(jnp.max(jnp.abs(y - ref)))
    # Tolerance reflects bf16 MXU operands with f32 accumulation.
    assert jnp.allclose(y, ref, atol=2e-2, rtol=2e-2), max_err

    # Ragged token count (M not a multiple of the tile) exercises the
    # partial-last-block path (no pad / no slice).
    x_ragged = jax.random.normal(k1, (2, 100, in_features), jnp.float32)
    y_ragged = jax.block_until_ready(mlp_forward(x_ragged, prepared, tm=256))
    assert y_ragged.shape == (2, 100, out_features), y_ragged.shape
    ref_ragged = _reference(x_ragged, torch_params)
    max_err_r = float(jnp.max(jnp.abs(y_ragged - ref_ragged)))
    assert jnp.allclose(y_ragged, ref_ragged, atol=2e-2, rtol=2e-2), max_err_r

    print("KERNEL_OK")
</pallas_src>

<mosaic_0001>
module attributes {stable_mosaic.version = 11 : i64} {
  func.func @_mlp_kernel(%arg0: i32, %arg1: memref<128x128xf32, #tpu.memory_space<vmem>>, %arg2: memref<128x512xbf16, #tpu.memory_space<vmem>>, %arg3: memref<1x512xf32, #tpu.memory_space<vmem>>, %arg4: memref<512x128xbf16, #tpu.memory_space<vmem>>, %arg5: memref<1x128xf32, #tpu.memory_space<vmem>>, %arg6: memref<128x128xf32, #tpu.memory_space<vmem>>) attributes {dimension_semantics = [#tpu.dimension_semantics<parallel>], iteration_bounds = array<i64: 4>, scalar_prefetch = 0 : i64, scratch_operands = 0 : i64, tpu.core_type = #tpu.core_type<tc>, window_params = [{transform_indices = @transform_0, window_bounds = array<i64: 128, 128>}, {pipeline_mode = #tpu.pipeline_mode<synchronous>, transform_indices = @transform_1, window_bounds = array<i64: 128, 512>}, {pipeline_mode = #tpu.pipeline_mode<synchronous>, transform_indices = @transform_2, window_bounds = array<i64: 1, 512>}, {pipeline_mode = #tpu.pipeline_mode<synchronous>, transform_indices = @transform_3, window_bounds = array<i64: 512, 128>}, {pipeline_mode = #tpu.pipeline_mode<synchronous>, transform_indices = @transform_4, window_bounds = array<i64: 1, 128>}, {transform_indices = @transform_5, window_bounds = array<i64: 128, 128>}]} {
    %c0 = arith.constant 0 : index
    %c0_0 = arith.constant 0 : index
    %0 = vector.load %arg1[%c0, %c0_0] : memref<128x128xf32, #tpu.memory_space<vmem>>, vector<128x128xf32>
    %1 = arith.truncf %0 : vector<128x128xf32> to vector<128x128xbf16>
    %c0_1 = arith.constant 0 : index
    %c0_2 = arith.constant 0 : index
    %2 = vector.load %arg2[%c0_1, %c0_2] : memref<128x512xbf16, #tpu.memory_space<vmem>>, vector<128x512xbf16>
    %cst = arith.constant dense<0.000000e+00> : vector<128x512xf32>
    %3 = tpu.matmul %1, %2, %cst {dimension_numbers = #tpu.dot_dimension_numbers<[1], [0], [0], [1], [0, 0, 1, 1], [], []>} : vector<128x128xbf16>, vector<128x512xbf16>, vector<128x512xf32> -> vector<128x512xf32>
    %c0_3 = arith.constant 0 : index
    %c0_4 = arith.constant 0 : index
    %4 = vector.load %arg3[%c0_3, %c0_4] : memref<1x512xf32, #tpu.memory_space<vmem>>, vector<1x512xf32>
    %5 = vector.broadcast %4 : vector<1x512xf32> to vector<128x512xf32>
    %6 = arith.addf %3, %5 : vector<128x512xf32>
    %cst_5 = arith.constant 5.000000e-01 : f32
    %7 = vector.broadcast %cst_5 : f32 to vector<128x512xf32>
    %8 = arith.mulf %7, %6 : vector<128x512xf32>
    %cst_6 = arith.constant 0.707106769 : f32
    %9 = vector.broadcast %cst_6 : f32 to vector<128x512xf32>
    %10 = arith.mulf %6, %9 : vector<128x512xf32>
    %11 = math.erf %10 : vector<128x512xf32>
    %cst_7 = arith.constant 1.000000e+00 : f32
    %12 = vector.broadcast %cst_7 : f32 to vector<128x512xf32>
    %13 = arith.addf %12, %11 : vector<128x512xf32>
    %14 = arith.mulf %8, %13 : vector<128x512xf32>
    %15 = arith.truncf %14 : vector<128x512xf32> to vector<128x512xbf16>
    %c0_8 = arith.constant 0 : index
    %c0_9 = arith.constant 0 : index
    %16 = vector.load %arg4[%c0_8, %c0_9] : memref<512x128xbf16, #tpu.memory_space<vmem>>, vector<512x128xbf16>
    %cst_10 = arith.constant dense<0.000000e+00> : vector<128x128xf32>
    %17 = tpu.matmul %15, %16, %cst_10 {dimension_numbers = #tpu.dot_dimension_numbers<[1], [0], [0], [1], [0, 0, 1, 1], [], []>} : vector<128x512xbf16>, vector<512x128xbf16>, vector<128x128xf32> -> vector<128x128xf32>
    %c0_11 = arith.constant 0 : index
    %c0_12 = arith.constant 0 : index
    %18 = vector.load %arg5[%c0_11, %c0_12] : memref<1x128xf32, #tpu.memory_space<vmem>>, vector<1x128xf32>
    %19 = vector.broadcast %18 : vector<1x128xf32> to vector<128x128xf32>
    %20 = arith.addf %17, %19 : vector<128x128xf32>
    %c0_13 = arith.constant 0 : index
    %c0_14 = arith.constant 0 : index
    %21 = vector.load %arg6[%c0_13, %c0_14] : memref<128x128xf32, #tpu.memory_space<vmem>>, vector<128x128xf32>
    tpu.vector_store %arg6[%c0_13, %c0_14], %20 {strides = array<i32>} : memref<128x128xf32, #tpu.memory_space<vmem>>, vector<128x128xf32>,
    return
  }
  func.func @transform_0(%arg0: i32) -> (i32, i32) {
    %c0_i32 = arith.constant 0 : i32
    %c0_i32_0 = arith.constant 0 : i32
    return %arg0, %c0_i32 : i32, i32
  }
  func.func @transform_1(%arg0: i32) -> (i32, i32) {
    %c0_i32 = arith.constant 0 : i32
    %c0_i32_0 = arith.constant 0 : i32
    %c0_i32_1 = arith.constant 0 : i32
    return %c0_i32, %c0_i32_0 : i32, i32
  }
  func.func @transform_2(%arg0: i32) -> (i32, i32) {
    %c0_i32 = arith.constant 0 : i32
    %c0_i32_0 = arith.constant 0 : i32
    %c0_i32_1 = arith.constant 0 : i32
    return %c0_i32, %c0_i32_0 : i32, i32
  }
  func.func @transform_3(%arg0: i32) -> (i32, i32) {
    %c0_i32 = arith.constant 0 : i32
    %c0_i32_0 = arith.constant 0 : i32
    %c0_i32_1 = arith.constant 0 : i32
    return %c0_i32, %c0_i32_0 : i32, i32
  }
  func.func @transform_4(%arg0: i32) -> (i32, i32) {
    %c0_i32 = arith.constant 0 : i32
    %c0_i32_0 = arith.constant 0 : i32
    %c0_i32_1 = arith.constant 0 : i32
    return %c0_i32, %c0_i32_0 : i32, i32
  }
  func.func @transform_5(%arg0: i32) -> (i32, i32) {
    %c0_i32 = arith.constant 0 : i32
    %c0_i32_0 = arith.constant 0 : i32
    return %arg0, %c0_i32 : i32, i32
  }
}

</mosaic_0001>

<llo_original>
// kernel: tpu_custom_call.1
$region0: #{tpu_custom_call.1}
  #allocation0 [shape = 'u32[]', space=smem, size = 0x4, offset = 0x4, fixed_abs, tag = 'smem constant byte address 0x4 - core index']
  #allocation1 [shape = 'u32[72,128]{1,0:T(1,128)}', space=vmem, size = 0x9000, scoped, tag = 'internal scratch']
  %s0 = inlined_call_operand.hbm [shape: f32[512,128], index: 0, kind: input, shape index: {}]
  %s1 = inlined_call_operand.hbm [shape: bf16[128,512], index: 1, kind: input, shape index: {}]
  %s2 = inlined_call_operand.hbm [shape: f32[1,512], index: 2, kind: input, shape index: {}]
  %s3 = inlined_call_operand.hbm [shape: bf16[512,128], index: 3, kind: input, shape index: {}]
  %s4 = inlined_call_operand.vmem [shape: f32[1,128], index: 4, kind: input, shape index: {}]
  %s5 = inlined_call_operand.hbm [shape: f32[512,128], index: 5, kind: output, shape index: {}]
  %s6 = sld [smem:[#allocation0]]
  $region69: #{tpu_custom_call.1} parent=0
    _
  %s8 = ssub.s32 1, %s6
  %s9 = scalar_select 0, %s8, %s6
  $region1: #{tpu_custom_call.1} parent=0
    #allocation2 [shape = 'u8[131072]{0}', space=vmem, size = 0x20000, scoped, tag = 'input window, operand 0']
    #allocation3 [shape = 's32[2]{0}', space=sflag, size = 0x8, scoped, tag = 'scoped memory for tpu_custom_call.1']
    #allocation4 [shape = 's32[2]{0}', space=sflag, size = 0x8, scoped, tag = 'scoped memory for tpu_custom_call.1']
    #allocation5 [shape = 'u8[131072]{0}', space=vmem, size = 0x20000, scoped, tag = 'input window, operand 1, single buffered']
    #allocation6 [shape = 's32[1]{0}', space=sflag, size = 0x4, scoped, tag = 'scoped memory for tpu_custom_call.1']
    #allocation7 [shape = 'u8[2048]{0}', space=vmem, size = 0x800, scoped, tag = 'input window, operand 2, single buffered']
    #allocation8 [shape = 'u8[131072]{0}', space=vmem, size = 0x20000, scoped, tag = 'input window, operand 3, single buffered']
    #allocation9 [shape = 's32[1]{0}', space=sflag, size = 0x4, scoped, tag = 'scoped memory for tpu_custom_call.1']
    #allocation10 [shape = 'u8[131072]{0}', space=vmem, size = 0x20000, scoped, tag = 'output window, operand 0']
    %10 = vsyncpa [#allocation3], 0
    %s11 = scalar_lea.sflag [#allocation3], 1
    %12 = vsyncpa %s11, 0
    %13 = vsyncpa [#allocation6], 0
    %14 = vsyncpa [#allocation9], 0
    %15 = vsyncpa [#allocation4], 0
    %s16 = scalar_lea.sflag [#allocation4], 1
    %17 = vsyncpa %s16, 0
    loop: start=0, step=1, limit=6
    $region2: #{tpu_custom_call.1} parent=1 // loop_pre_header
      _
    $region3: #{tpu_custom_call.1} parent=1 // loop_header
      %s19 = sphi 0, %s23
      %p20 = scmp.ge.s32.totalorder %s19, 6
      %s29 = sphi 0, %s31
      %s32 = sphi 0, %s29
      %s33 = sphi 0, %s32
      %s49 = sphi 0, %s33
      %s53 = sphi 0, %s53
      %s55 = sphi 0, %s53
      %s56 = sphi 0, %s55
      %s70 = sphi 0, %s56
      %s74 = sphi 0, %s74
      %s76 = sphi 0, %s74
      %s77 = sphi 0, %s76
      %s91 = sphi 0, %s77
      %s95 = sphi 0, %s95
      %s97 = sphi 0, %s95
      %s98 = sphi 0, %s97
      %s112 = sphi 0, %s98
      %s116 = sphi 0, %s116
      %s118 = sphi 0, %s116
      %s119 = sphi 0, %s118
      %s133 = sphi 0, %s119
      %s139 = sphi 0, %s141
      %s142 = sphi 0, %s139
      %s143 = sphi 0, %s142
      %s159 = sphi 0, %s143
    $region4: #{tpu_custom_call.1} parent=1 // loop_header_branch
      %22 = sbr.rel (%p20) target = $region8
    $region5: #{tpu_custom_call.1} parent=1 // loop_body
      %s24 = ssub.s32 %s19, 1
      %s25 = ssub.s32 %s19, 2
      %s26 = sadd.s32 %s19, 1
      %s27 = ssub.s32 %s19, %s26
      %p28 = scmp.eq.s32.totalorder %s27, 0
      %s30 = sadd.s32 %s29, 1
      %s31 = scalar_select %p28, %s29, %s30
      %p34 = pneg %p28
      %p35 = scmp.eq.s32.totalorder %s19, 3
      %p36 = por %p34, %p35
      %p37 = scmp.ne.s32.totalorder %s29, %s32
      %p38 = scmp.eq.s32.totalorder %s19, 0
      %p39 = por %p37, %p38
      %p40 = scmp.ne.s32.totalorder %s29, %s32
      %p41 = scmp.eq.s32.totalorder %s24, 3
      %p42 = por %p40, %p41
      %p43 = scmp.ne.s32.totalorder %s32, %s33
      %p44 = scmp.eq.s32.totalorder %s24, 0
      %p45 = por %p43, %p44
      %p46 = scmp.ne.s32.totalorder %s32, %s33
      %p47 = scmp.eq.s32.totalorder %s25, 3
      %p48 = por %p46, %p47
      %p50 = scmp.ne.s32.totalorder %s33, %s49
      %p51 = scmp.eq.s32.totalorder %s25, 0
      %p52 = por %p50, %p51
      %s54 = sadd.s32 %s53, 1
      %p57 = scmp.eq.s32.totalorder %s19, 3
      %p58 = scmp.ne.s32.totalorder %s53, %s55
      %p59 = scmp.eq.s32.totalorder %s19, 0
      %p60 = por %p58, %p59
      %p61 = scmp.ne.s32.totalorder %s53, %s55
      %p62 = scmp.eq.s32.totalorder %s24, 3
      %p63 = por %p61, %p62
      %p64 = scmp.ne.s32.totalorder %s55, %s56
      %p65 = scmp.eq.s32.totalorder %s24, 0
      %p66 = por %p64, %p65
      %p67 = scmp.ne.s32.totalorder %s55, %s56
      %p68 = scmp.eq.s32.totalorder %s25, 3
      %p69 = por %p67, %p68
      %p71 = scmp.ne.s32.totalorder %s56, %s70
      %p72 = scmp.eq.s32.totalorder %s25, 0
      %p73 = por %p71, %p72
      %s75 = sadd.s32 %s74, 1
      %p78 = scmp.eq.s32.totalorder %s19, 3
      %p79 = scmp.ne.s32.totalorder %s74, %s76
      %p80 = scmp.eq.s32.totalorder %s19, 0
      %p81 = por %p79, %p80
      %p82 = scmp.ne.s32.totalorder %s74, %s76
      %p83 = scmp.eq.s32.totalorder %s24, 3
      %p84 = por %p82, %p83
      %p85 = scmp.ne.s32.totalorder %s76, %s77
      %p86 = scmp.eq.s32.totalorder %s24, 0
      %p87 = por %p85, %p86
      %p88 = scmp.ne.s32.totalorder %s76, %s77
      %p89 = scmp.eq.s32.totalorder %s25, 3
      %p90 = por %p88, %p89
      %p92 = scmp.ne.s32.totalorder %s77, %s91
      %p93 = scmp.eq.s32.totalorder %s25, 0
      %p94 = por %p92, %p93
      %s96 = sadd.s32 %s95, 1
      %p99 = scmp.eq.s32.totalorder %s19, 3
      %p100 = scmp.ne.s32.totalorder %s95, %s97
      %p101 = scmp.eq.s32.totalorder %s19, 0
      %p102 = por %p100, %p101
      %p103 = scmp.ne.s32.totalorder %s95, %s97
      %p104 = scmp.eq.s32.totalorder %s24, 3
      %p105 = por %p103, %p104
      %p106 = scmp.ne.s32.totalorder %s97, %s98
      %p107 = scmp.eq.s32.totalorder %s24, 0
      %p108 = por %p106, %p107
      %p109 = scmp.ne.s32.totalorder %s97, %s98
      %p110 = scmp.eq.s32.totalorder %s25, 3
      %p111 = por %p109, %p110
      %p113 = scmp.ne.s32.totalorder %s98, %s112
      %p114 = scmp.eq.s32.totalorder %s25, 0
      %p115 = por %p113, %p114
      %s117 = sadd.s32 %s116, 1
      %p120 = scmp.eq.s32.totalorder %s19, 3
      %p121 = scmp.ne.s32.totalorder %s116, %s118
      %p122 = scmp.eq.s32.totalorder %s19, 0
      %p123 = por %p121, %p122
      %p124 = scmp.ne.s32.totalorder %s116, %s118
      %p125 = scmp.eq.s32.totalorder %s24, 3
      %p126 = por %p124, %p125
      %p127 = scmp.ne.s32.totalorder %s118, %s119
      %p128 = scmp.eq.s32.totalorder %s24, 0
      %p129 = por %p127, %p128
      %p130 = scmp.ne.s32.totalorder %s118, %s119
      %p131 = scmp.eq.s32.totalorder %s25, 3
      %p132 = por %p130, %p131
      %p134 = scmp.ne.s32.totalorder %s119, %s133
      %p135 = scmp.eq.s32.totalorder %s25, 0
      %p136 = por %p134, %p135
      %s137 = ssub.s32 %s19, %s26
      %p138 = scmp.eq.s32.totalorder %s137, 0
      %s140 = sadd.s32 %s139, 1
      %s141 = scalar_select %p138, %s139, %s140
      %p144 = pneg %p138
      %p145 = scmp.eq.s32.totalorder %s19, 3
      %p146 = por %p144, %p145
      %p147 = scmp.ne.s32.totalorder %s139, %s142
      %p148 = scmp.eq.s32.totalorder %s19, 0
      %p149 = por %p147, %p148
      %p150 = scmp.ne.s32.totalorder %s139, %s142
      %p151 = scmp.eq.s32.totalorder %s24, 3
      %p152 = por %p150, %p151
      %p153 = scmp.ne.s32.totalorder %s142, %s143
      %p154 = scmp.eq.s32.totalorder %s24, 0
      %p155 = por %p153, %p154
      %p156 = scmp.ne.s32.totalorder %s142, %s143
      %p157 = scmp.eq.s32.totalorder %s25, 3
      %p158 = por %p156, %p157
      %p160 = scmp.ne.s32.totalorder %s143, %s159
      %p161 = scmp.eq.s32.totalorder %s25, 0
      %p162 = por %p160, %p161
      %p163 = scmp.le.s32.totalorder 1, %s19
      %p164 = scmp.lt.s32.totalorder %s19, 5
      %p165 = pnand %p163, %p164
      %p166 = pneg %p165
      // Predicated region
      $region9: #{tpu_custom_call.1} parent=5 // pred_check
        _
      $region10: #{tpu_custom_call.1} parent=5 // pred_check_branch
        %168 = sbr.rel (%p165) target = $region12
      $region11: #{tpu_custom_call.1} parent=5 // pred_region
        %s169 = ssub.s32 %s19, 1
        // Predicated region
        $region13: #{tpu_custom_call.1} parent=11 // pred_check
          %p170 = pneg %p66
        $region14: #{tpu_custom_call.1} parent=11 // pred_check_branch
          %172 = sbr.rel (%p170) target = $region16
        $region15: #{tpu_custom_call.1} parent=11 // pred_region
          %174 = vsyncadd [#allocation6], 0
          %s175 = sshll.u32 %s1, 4
          %s176 = int_to_ptr.hbm [resolvable:$true] %s175
          %s177 = sshll.u32 [#allocation5], 4
          %s178 = int_to_ptr.vmem [resolvable:$true] %s177
          %183 = dma.hbm_to_vmem [thread:$0]  %s176, 4096, %s178, [#allocation6], 256, 256, 16
        $region16: #{tpu_custom_call.1} parent=11 // pred_fallthru
          _
        // Predicated region
        $region17: #{tpu_custom_call.1} parent=11 // pred_check
          %p184 = pneg %p87
        $region18: #{tpu_custom_call.1} parent=11 // pred_check_branch
          %186 = sbr.rel (%p184) target = $region20
        $region19: #{tpu_custom_call.1} parent=11 // pred_region
          %188 = vsyncadd [#allocation6], 0
          %s190 = sshll.u32 %s2, 4
          %s191 = int_to_ptr.hbm [resolvable:$true] %s190
          %s192 = sshll.u32 [#allocation7], 4
          %s193 = int_to_ptr.vmem [resolvable:$true] %s192
          %195 = dma.hbm_to_vmem [thread:$0]  %s191, 64, %s193, [#allocation6]
        $region20: #{tpu_custom_call.1} parent=11 // pred_fallthru
          _
        // Predicated region
        $region21: #{tpu_custom_call.1} parent=11 // pred_check
          %p196 = pneg %p108
        $region22: #{tpu_custom_call.1} parent=11 // pred_check_branch
          %198 = sbr.rel (%p196) target = $region24
        $region23: #{tpu_custom_call.1} parent=11 // pred_region
          %200 = vsyncadd [#allocation9], 0
          %s201 = sshll.u32 %s3, 4
          %s202 = int_to_ptr.hbm [resolvable:$true] %s201
          %s203 = sshll.u32 [#allocation8], 4
          %s204 = int_to_ptr.vmem [resolvable:$true] %s203
          %209 = dma.hbm_to_vmem [thread:$0]  %s202, 4096, %s204, [#allocation9], 64, 64, 4
        $region24: #{tpu_custom_call.1} parent=11 // pred_fallthru
          _
        // Predicated region
        $region25: #{tpu_custom_call.1} parent=11 // pred_check
          %p210 = pneg %p129
        $region26: #{tpu_custom_call.1} parent=11 // pred_check_branch
          %212 = sbr.rel (%p210) target = $region28
        $region27: #{tpu_custom_call.1} parent=11 // pred_region
          _
        $region28: #{tpu_custom_call.1} parent=11 // pred_fallthru
          _
      $region12: #{tpu_custom_call.1} parent=5 // pred_fallthru
        _
      %p213 = scmp.lt.s32.totalorder %s19, 4
      // Predicated region
      $region29: #{tpu_custom_call.1} parent=5 // pred_check
        %p214 = pneg %p213
      $region30: #{tpu_custom_call.1} parent=5 // pred_check_branch
        %216 = sbr.rel (%p214) target = $region32
      $region31: #{tpu_custom_call.1} parent=5 // pred_region
        // Predicated region
        $region33: #{tpu_custom_call.1} parent=31 // pred_check
          %p217 = pneg %p39
        $region34: #{tpu_custom_call.1} parent=31 // pred_check_branch
          %219 = sbr.rel (%p217) target = $region36
        $region35: #{tpu_custom_call.1} parent=31 // pred_region
          %s220 = sand.u32 %s29, 1
          %s221 = scalar_lea.sflag [#allocation3], %s220
          %s222 = sand.u32 %s29, 1
          %s223 = smul.addr %s222, 128
          %s224 = scalar_lea.vmem [#allocation2], %s223
          %s225 = smul.u32 16, %s19
          %227 = vsyncadd %s221, 0
          %s228 = smul.addr %s225, 8
          %s229 = scalar_lea.hbm %s0, %s228
          %s230 = sshll.u32 %s229, 4
          %s231 = int_to_ptr.hbm [resolvable:$true] %s230
          %s232 = sshll.u32 %s224, 4
          %s233 = int_to_ptr.vmem [resolvable:$true] %s232
          %238 = dma.hbm_to_vmem [thread:$0]  %s231, 2048, %s233, %s221, 128, 128, 8
        $region36: #{tpu_custom_call.1} parent=31 // pred_fallthru
          _
      $region32: #{tpu_custom_call.1} parent=5 // pred_fallthru
        _
      %p239 = scmp.le.s32.totalorder 1, %s19
      %p240 = scmp.lt.s32.totalorder %s19, 5
      %p241 = pnand %p239, %p240
      %p242 = pneg %p241
      // Predicated region
      $region37: #{tpu_custom_call.1} parent=5 // pred_check
        _
      $region38: #{tpu_custom_call.1} parent=5 // pred_check_branch
        %244 = sbr.rel (%p241) target = $region40
      $region39: #{tpu_custom_call.1} parent=5 // pred_region
        %s245 = ssub.s32 %s19, 1
        %s246 = sand.u32 %s32, 1
        %s247 = scalar_lea.sflag [#allocation3], %s246
        %s248 = sand.u32 %s32, 1
        %s249 = smul.addr %s248, 128
        %s250 = scalar_lea.vmem [#allocation2], %s249
        // Predicated region
        $region41: #{tpu_custom_call.1} parent=39 // pred_check
          %p251 = pneg %p45
        $region42: #{tpu_custom_call.1} parent=39 // pred_check_branch
          %253 = sbr.rel (%p251) target = $region44
        $region43: #{tpu_custom_call.1} parent=39 // pred_region
          %255 = dma.done %s247, 2048
        $region44: #{tpu_custom_call.1} parent=39 // pred_fallthru
          _
        // Predicated region
        $region45: #{tpu_custom_call.1} parent=39 // pred_check
          %p256 = pneg %p66
        $region46: #{tpu_custom_call.1} parent=39 // pred_check_branch
          %258 = sbr.rel (%p256) target = $region48
        $region47: #{tpu_custom_call.1} parent=39 // pred_region
          %260 = dma.done [#allocation6], 4096
        $region48: #{tpu_custom_call.1} parent=39 // pred_fallthru
          _
        // Predicated region
        $region49: #{tpu_custom_call.1} parent=39 // pred_check
          %p261 = pneg %p87
        $region50: #{tpu_custom_call.1} parent=39 // pred_check_branch
          %263 = sbr.rel (%p261) target = $region52
        $region51: #{tpu_custom_call.1} parent=39 // pred_region
          %265 = dma.done [#allocation6], 64
        $region52: #{tpu_custom_call.1} parent=39 // pred_fallthru
          _
        // Predicated region
        $region53: #{tpu_custom_call.1} parent=39 // pred_check
          %p266 = pneg %p108
        $region54: #{tpu_custom_call.1} parent=39 // pred_check_branch
          %268 = sbr.rel (%p266) target = $region56
        $region55: #{tpu_custom_call.1} parent=39 // pred_region
          %270 = dma.done [#allocation9], 4096
        $region56: #{tpu_custom_call.1} parent=39 // pred_fallthru
          _
        %s271 = sand.u32 %s32, 1
        %s272 = scalar_lea.sflag [#allocation3], %s271
        %s273 = sand.u32 %s32, 1
        %s274 = smul.addr %s273, 128
        %s275 = scalar_lea.vmem [#allocation2], %s274
        %p276 = pneg %p45
        %p277 = pneg %p42
        %p278 = pneg %p66
        %p279 = pneg %p63
        %p280 = pneg %p87
        %p281 = pneg %p84
        %p282 = pneg %p108
        %p283 = pneg %p105
        %p284 = pneg %p129
        %p285 = pneg %p126
        %p286 = pneg %p155
        %p287 = pneg %p152
        %s288 = sand.u32 %s142, 1
        %s289 = scalar_lea.sflag [#allocation4], %s288
        %s290 = sand.u32 %s142, 1
        %s291 = smul.addr %s290, 128
        %s292 = scalar_lea.vmem [#allocation10], %s291
        %s293 = smul.u32 16, %s24
        %s294 = smul.u32 16, %s24
        %v295 = vld [vmem:[%s250] sm:$0xff]
        %v296 = vld [vmem:[%s250 + $0x8] sm:$0xff]
        %v297 = vld [vmem:[%s250 + $0x10] sm:$0xff]
        %v298 = vld [vmem:[%s250 + $0x18] sm:$0xff]
        %v299 = vld [vmem:[%s250 + $0x20] sm:$0xff]
        %v300 = vld [vmem:[%s250 + $0x28] sm:$0xff]
        %v301 = vld [vmem:[%s250 + $0x30] sm:$0xff]
        %v302 = vld [vmem:[%s250 + $0x38] sm:$0xff]
        %v303 = vld [vmem:[%s250 + $0x40] sm:$0xff]
        %v304 = vld [vmem:[%s250 + $0x48] sm:$0xff]
        %v305 = vld [vmem:[%s250 + $0x50] sm:$0xff]
        %v306 = vld [vmem:[%s250 + $0x58] sm:$0xff]
        %v307 = vld [vmem:[%s250 + $0x60] sm:$0xff]
        %v308 = vld [vmem:[%s250 + $0x68] sm:$0xff]
        %v309 = vld [vmem:[%s250 + $0x70] sm:$0xff]
        %v310 = vld [vmem:[%s250 + $0x78] sm:$0xff]
        %v311 = vpack.c.bf16 %v296, %v295
        %v312 = vpack.c.bf16 %v298, %v297
        %v313 = vpack.c.bf16 %v300, %v299
        %v314 = vpack.c.bf16 %v302, %v301
        %v315 = vpack.c.bf16 %v304, %v303
        %v316 = vpack.c.bf16 %v306, %v305
        %v317 = vpack.c.bf16 %v308, %v307
        %v318 = vpack.c.bf16 %v310, %v309
        %v319 = vld [vmem:[#allocation5] sm:$0xff]
        %v320 = vld [vmem:[#allocation5 + $0x8] sm:$0xff]
        %v321 = vld [vmem:[#allocation5 + $0x10] sm:$0xff]
        %v322 = vld [vmem:[#allocation5 + $0x18] sm:$0xff]
        %v323 = vld [vmem:[#allocation5 + $0x20] sm:$0xff]
        %v324 = vld [vmem:[#allocation5 + $0x28] sm:$0xff]
        %v325 = vld [vmem:[#allocation5 + $0x30] sm:$0xff]
        %v326 = vld [vmem:[#allocation5 + $0x38] sm:$0xff]
        %v327 = vld [vmem:[#allocation5 + $0x40] sm:$0xff]
        %v328 = vld [vmem:[#allocation5 + $0x48] sm:$0xff]
        %v329 = vld [vmem:[#allocation5 + $0x50] sm:$0xff]
        %v330 = vld [vmem:[#allocation5 + $0x58] sm:$0xff]
        %v331 = vld [vmem:[#allocation5 + $0x60] sm:$0xff]
        %v332 = vld [vmem:[#allocation5 + $0x68] sm:$0xff]
        %v333 = vld [vmem:[#allocation5 + $0x70] sm:$0xff]
        %v334 = vld [vmem:[#allocation5 + $0x78] sm:$0xff]
        %v335 = vld [vmem:[#allocation5 + $0x80] sm:$0xff]
        %v336 = vld [vmem:[#allocation5 + $0x88] sm:$0xff]
        %v337 = vld [vmem:[#allocation5 + $0x90] sm:$0xff]
        %v338 = vld [vmem:[#allocation5 + $0x98] sm:$0xff]
        %v339 = vld [vmem:[#allocation5 + $0xa0] sm:$0xff]
        %v340 = vld [vmem:[#allocation5 + $0xa8] sm:$0xff]
        %v341 = vld [vmem:[#allocation5 + $0xb0] sm:$0xff]
        %v342 = vld [vmem:[#allocation5 + $0xb8] sm:$0xff]
        %v343 = vld [vmem:[#allocation5 + $0xc0] sm:$0xff]
        %v344 = vld [vmem:[#allocation5 + $0xc8] sm:$0xff]
        %v345 = vld [vmem:[#allocation5 + $0xd0] sm:$0xff]
        %v346 = vld [vmem:[#allocation5 + $0xd8] sm:$0xff]
        %v347 = vld [vmem:[#allocation5 + $0xe0] sm:$0xff]
        %v348 = vld [vmem:[#allocation5 + $0xe8] sm:$0xff]
        %v349 = vld [vmem:[#allocation5 + $0xf0] sm:$0xff]
        %v350 = vld [vmem:[#allocation5 + $0xf8] sm:$0xff]
        %v351 = vld [vmem:[#allocation7] sm:$0xf]
        %v353 = vperm.slane %v351, 0
        %v354 = vperm.slane %v351, 1
        %v355 = vperm.slane %v351, 2
        %v356 = vperm.slane %v351, 3
        %v393 = vunpack.c.l.b16 %v319
        %v394 = vunpack.c.h.b16 %v319
        %v395 = vunpack.c.l.b16 %v320
        %v396 = vunpack.c.h.b16 %v320
        %v397 = vunpack.c.l.b16 %v321
        %v398 = vunpack.c.h.b16 %v321
        %v399 = vunpack.c.l.b16 %v322
        %v400 = vunpack.c.h.b16 %v322
        %v401 = vunpack.c.l.b16 %v323
        %v402 = vunpack.c.h.b16 %v323
        %v403 = vunpack.c.l.b16 %v324
        %v404 = vunpack.c.h.b16 %v324
        %v405 = vunpack.c.l.b16 %v325
        %v406 = vunpack.c.h.b16 %v325
        %v407 = vunpack.c.l.b16 %v326
        %v408 = vunpack.c.h.b16 %v326
        %v409 = vunpack.c.l.b16 %v327
        %v410 = vunpack.c.h.b16 %v327
        %v411 = vunpack.c.l.b16 %v328
        %v412 = vunpack.c.h.b16 %v328
        %v413 = vunpack.c.l.b16 %v329
        %v414 = vunpack.c.h.b16 %v329
        %v415 = vunpack.c.l.b16 %v330
        %v416 = vunpack.c.h.b16 %v330
        %v417 = vunpack.c.l.b16 %v331
        %v418 = vunpack.c.h.b16 %v331
        %v419 = vunpack.c.l.b16 %v332
        %v420 = vunpack.c.h.b16 %v332
        %v421 = vunpack.c.l.b16 %v333
        %v422 = vunpack.c.h.b16 %v333
        %v423 = vunpack.c.l.b16 %v334
        %v424 = vunpack.c.h.b16 %v334
        %v425 = vunpack.c.l.b16 %v335
        %v426 = vunpack.c.h.b16 %v335
        %v427 = vunpack.c.l.b16 %v336
        %v428 = vunpack.c.h.b16 %v336
        %v429 = vunpack.c.l.b16 %v337
        %v430 = vunpack.c.h.b16 %v337
        %v431 = vunpack.c.l.b16 %v338
        %v432 = vunpack.c.h.b16 %v338
        %v433 = vunpack.c.l.b16 %v339
        %v434 = vunpack.c.h.b16 %v339
        %v435 = vunpack.c.l.b16 %v340
        %v436 = vunpack.c.h.b16 %v340
        %v437 = vunpack.c.l.b16 %v341
        %v438 = vunpack.c.h.b16 %v341
        %v439 = vunpack.c.l.b16 %v342
        %v440 = vunpack.c.h.b16 %v342
        %v441 = vunpack.c.l.b16 %v343
        %v442 = vunpack.c.h.b16 %v343
        %v443 = vunpack.c.l.b16 %v344
        %v444 = vunpack.c.h.b16 %v344
        %v445 = vunpack.c.l.b16 %v345
        %v446 = vunpack.c.h.b16 %v345
        %v447 = vunpack.c.l.b16 %v346
        %v448 = vunpack.c.h.b16 %v346
        %v449 = vunpack.c.l.b16 %v347
        %v450 = vunpack.c.h.b16 %v347
        %v451 = vunpack.c.l.b16 %v348
        %v452 = vunpack.c.h.b16 %v348
        %v453 = vunpack.c.l.b16 %v349
        %v454 = vunpack.c.h.b16 %v349
        %v455 = vunpack.c.l.b16 %v350
        %v456 = vunpack.c.h.b16 %v350
        %v457 = vpack.c.b16 %v397, %v393
        %v458 = vpack.c.b16 %v398, %v394
        %v459 = vpack.c.b16 %v399, %v395
        %v460 = vpack.c.b16 %v400, %v396
        %v461 = vpack.c.b16 %v405, %v401
        %v462 = vpack.c.b16 %v406, %v402
        %v463 = vpack.c.b16 %v407, %v403
        %v464 = vpack.c.b16 %v408, %v404
        %v465 = vpack.c.b16 %v413, %v409
        %v466 = vpack.c.b16 %v414, %v410
        %v467 = vpack.c.b16 %v415, %v411
        %v468 = vpack.c.b16 %v416, %v412
        %v469 = vpack.c.b16 %v421, %v417
        %v470 = vpack.c.b16 %v422, %v418
        %v471 = vpack.c.b16 %v423, %v419
        %v472 = vpack.c.b16 %v424, %v420
        %v473 = vpack.c.b16 %v429, %v425
        %v474 = vpack.c.b16 %v430, %v426
        %v475 = vpack.c.b16 %v431, %v427
        %v476 = vpack.c.b16 %v432, %v428
        %v477 = vpack.c.b16 %v437, %v433
        %v478 = vpack.c.b16 %v438, %v434
        %v479 = vpack.c.b16 %v439, %v435
        %v480 = vpack.c.b16 %v440, %v436
        %v481 = vpack.c.b16 %v445, %v441
        %v482 = vpack.c.b16 %v446, %v442
        %v483 = vpack.c.b16 %v447, %v443
        %v484 = vpack.c.b16 %v448, %v444
        %v485 = vpack.c.b16 %v453, %v449
        %v486 = vpack.c.b16 %v454, %v450
        %v487 = vpack.c.b16 %v455, %v451
        %v488 = vpack.c.b16 %v456, %v452
        %521 = vmatpush.bf16.msra.mxu0 %v485
        %522 = vmatpush.bf16.msra.mxu0 %v481
        %523 = vmatpush.bf16.msra.mxu0 %v477
        %524 = vmatpush.bf16.msra.mxu0 %v473
        %525 = vmatpush.bf16.msra.mxu0 %v469
        %526 = vmatpush.bf16.msra.mxu0 %v465
        %527 = vmatpush.bf16.msra.mxu0 %v461
        %528 = vmatpush.bf16.msra.mxu0 %v457
        %529 = vmatmul.bf16.gmra.mxu0 %v311
        %v530 = vpop.f32.mrf.mxu0
        %v531 = vadd.f32 %v353, %v530
        %v532 = vpop.f32.mrf.mxu0
        %v533 = vadd.f32 %v353, %v532
        %534 = vmatmul.bf16.gmra.mxu0 %v312
        %v535 = vpop.f32.mrf.mxu0
        %v536 = vadd.f32 %v353, %v535
        %v537 = vpop.f32.mrf.mxu0
        %v538 = vadd.f32 %v353, %v537
        %539 = vmatmul.bf16.gmra.mxu0 %v313
        %v540 = vpop.f32.mrf.mxu0
        %v541 = vadd.f32 %v353, %v540
        %v542 = vpop.f32.mrf.mxu0
        %v543 = vadd.f32 %v353, %v542
        %544 = vmatmul.bf16.gmra.mxu0 %v314
        %v545 = vpop.f32.mrf.mxu0
        %v546 = vadd.f32 %v353, %v545
        %v547 = vpop.f32.mrf.mxu0
        %v548 = vadd.f32 %v353, %v547
        %549 = vmatmul.bf16.gmra.mxu0 %v315
        %v550 = vpop.f32.mrf.mxu0
        %v551 = vadd.f32 %v353, %v550
        %v552 = vpop.f32.mrf.mxu0
        %v553 = vadd.f32 %v353, %v552
        %554 = vmatmul.bf16.gmra.mxu0 %v316
        %v555 = vpop.f32.mrf.mxu0
        %v556 = vadd.f32 %v353, %v555
        %v557 = vpop.f32.mrf.mxu0
        %v558 = vadd.f32 %v353, %v557
        %559 = vmatmul.bf16.gmra.mxu0 %v317
        %v560 = vpop.f32.mrf.mxu0
        %v561 = vadd.f32 %v353, %v560
        %v562 = vpop.f32.mrf.mxu0
        %v563 = vadd.f32 %v353, %v562
        %564 = vmatmul.bf16.gmra.mxu0 %v318
        %v565 = vpop.f32.mrf.mxu0
        %v566 = vadd.f32 %v353, %v565
        %v567 = vpop.f32.mrf.mxu0
        %v568 = vadd.f32 %v353, %v567
        %569 = vdwg.mxu0
        %570 = vmatpush.bf16.msra.mxu0 %v486
        %571 = vmatpush.bf16.msra.mxu0 %v482
        %572 = vmatpush.bf16.msra.mxu0 %v478
        %573 = vmatpush.bf16.msra.mxu0 %v474
        %574 = vmatpush.bf16.msra.mxu0 %v470
        %575 = vmatpush.bf16.msra.mxu0 %v466
        %576 = vmatpush.bf16.msra.mxu0 %v462
        %577 = vmatpush.bf16.msra.mxu0 %v458
        %578 = vmatmul.bf16.gmra.mxu0 %v311
        %v579 = vpop.f32.mrf.mxu0
        %v580 = vadd.f32 %v354, %v579
        %v581 = vpop.f32.mrf.mxu0
        %v582 = vadd.f32 %v354, %v581
        %583 = vmatmul.bf16.gmra.mxu0 %v312
        %v584 = vpop.f32.mrf.mxu0
        %v585 = vadd.f32 %v354, %v584
        %v586 = vpop.f32.mrf.mxu0
        %v587 = vadd.f32 %v354, %v586
        %588 = vmatmul.bf16.gmra.mxu0 %v313
        %v589 = vpop.f32.mrf.mxu0
        %v590 = vadd.f32 %v354, %v589
        %v591 = vpop.f32.mrf.mxu0
        %v592 = vadd.f32 %v354, %v591
        %593 = vmatmul.bf16.gmra.mxu0 %v314
        %v594 = vpop.f32.mrf.mxu0
        %v595 = vadd.f32 %v354, %v594
        %v596 = vpop.f32.mrf.mxu0
        %v597 = vadd.f32 %v354, %v596
        %598 = vmatmul.bf16.gmra.mxu0 %v315
        %v599 = vpop.f32.mrf.mxu0
        %v600 = vadd.f32 %v354, %v599
        %v601 = vpop.f32.mrf.mxu0
        %v602 = vadd.f32 %v354, %v601
        %603 = vmatmul.bf16.gmra.mxu0 %v316
        %v604 = vpop.f32.mrf.mxu0
        %v605 = vadd.f32 %v354, %v604
        %v606 = vpop.f32.mrf.mxu0
        %v607 = vadd.f32 %v354, %v606
        %608 = vmatmul.bf16.gmra.mxu0 %v317
        %v609 = vpop.f32.mrf.mxu0
        %v610 = vadd.f32 %v354, %v609
        %v611 = vpop.f32.mrf.mxu0
        %v612 = vadd.f32 %v354, %v611
        %613 = vmatmul.bf16.gmra.mxu0 %v318
        %v614 = vpop.f32.mrf.mxu0
        %v615 = vadd.f32 %v354, %v614
        %v616 = vpop.f32.mrf.mxu0
        %v617 = vadd.f32 %v354, %v616
        %618 = vdwg.mxu0
        %619 = vmatpush.bf16.msra.mxu0 %v487
        %620 = vmatpush.bf16.msra.mxu0 %v483
        %621 = vmatpush.bf16.msra.mxu0 %v479
        %622 = vmatpush.bf16.msra.mxu0 %v475
        %623 = vmatpush.bf16.msra.mxu0 %v471
        %624 = vmatpush.bf16.msra.mxu0 %v467
        %625 = vmatpush.bf16.msra.mxu0 %v463
        %626 = vmatpush.bf16.msra.mxu0 %v459
        %627 = vmatmul.bf16.gmra.mxu0 %v311
        %v628 = vpop.f32.mrf.mxu0
        %v629 = vadd.f32 %v355, %v628
        %v630 = vpop.f32.mrf.mxu0
        %v631 = vadd.f32 %v355, %v630
        %632 = vmatmul.bf16.gmra.mxu0 %v312
        %v633 = vpop.f32.mrf.mxu0
        %v634 = vadd.f32 %v355, %v633
        %v635 = vpop.f32.mrf.mxu0
        %v636 = vadd.f32 %v355, %v635
        %637 = vmatmul.bf16.gmra.mxu0 %v313
        %v638 = vpop.f32.mrf.mxu0
        %v639 = vadd.f32 %v355, %v638
        %v640 = vpop.f32.mrf.mxu0
        %v641 = vadd.f32 %v355, %v640
        %642 = vmatmul.bf16.gmra.mxu0 %v314
        %v643 = vpop.f32.mrf.mxu0
        %v644 = vadd.f32 %v355, %v643
        %v645 = vpop.f32.mrf.mxu0
        %v646 = vadd.f32 %v355, %v645
        %647 = vmatmul.bf16.gmra.mxu0 %v315
        %v648 = vpop.f32.mrf.mxu0
        %v649 = vadd.f32 %v355, %v648
        %v650 = vpop.f32.mrf.mxu0
        %v651 = vadd.f32 %v355, %v650
        %652 = vmatmul.bf16.gmra.mxu0 %v316
        %v653 = vpop.f32.mrf.mxu0
        %v654 = vadd.f32 %v355, %v653
        %v655 = vpop.f32.mrf.mxu0
        %v656 = vadd.f32 %v355, %v655
        %657 = vmatmul.bf16.gmra.mxu0 %v317
        %v658 = vpop.f32.mrf.mxu0
        %v659 = vadd.f32 %v355, %v658
        %v660 = vpop.f32.mrf.mxu0
        %v661 = vadd.f32 %v355, %v660
        %662 = vmatmul.bf16.gmra.mxu0 %v318
        %v663 = vpop.f32.mrf.mxu0
        %v664 = vadd.f32 %v355, %v663
        %v665 = vpop.f32.mrf.mxu0
        %v666 = vadd.f32 %v355, %v665
        %667 = vdwg.mxu0
        %668 = vmatpush.bf16.msra.mxu0 %v488
        %669 = vmatpush.bf16.msra.mxu0 %v484
        %670 = vmatpush.bf16.msra.mxu0 %v480
        %671 = vmatpush.bf16.msra.mxu0 %v476
        %672 = vmatpush.bf16.msra.mxu0 %v472
        %673 = vmatpush.bf16.msra.mxu0 %v468
        %674 = vmatpush.bf16.msra.mxu0 %v464
        %675 = vmatpush.bf16.msra.mxu0 %v460
        %676 = vmatmul.bf16.gmra.mxu0 %v311
        %v677 = vpop.f32.mrf.mxu0
        %v678 = vadd.f32 %v356, %v677
        %v679 = vpop.f32.mrf.mxu0
        %v680 = vadd.f32 %v356, %v679
        %681 = vmatmul.bf16.gmra.mxu0 %v312
        %v682 = vpop.f32.mrf.mxu0
        %v683 = vadd.f32 %v356, %v682
        %v684 = vpop.f32.mrf.mxu0
        %v685 = vadd.f32 %v356, %v684
        %686 = vmatmul.bf16.gmra.mxu0 %v313
        %v687 = vpop.f32.mrf.mxu0
        %v688 = vadd.f32 %v356, %v687
        %v689 = vpop.f32.mrf.mxu0
        %v690 = vadd.f32 %v356, %v689
        %691 = vmatmul.bf16.gmra.mxu0 %v314
        %v692 = vpop.f32.mrf.mxu0
        %v693 = vadd.f32 %v356, %v692
        %v694 = vpop.f32.mrf.mxu0
        %v695 = vadd.f32 %v356, %v694
        %696 = vmatmul.bf16.gmra.mxu0 %v315
        %v697 = vpop.f32.mrf.mxu0
        %v698 = vadd.f32 %v356, %v697
        %v699 = vpop.f32.mrf.mxu0
        %v700 = vadd.f32 %v356, %v699
        %701 = vmatmul.bf16.gmra.mxu0 %v316
        %v702 = vpop.f32.mrf.mxu0
        %v703 = vadd.f32 %v356, %v702
        %v704 = vpop.f32.mrf.mxu0
        %v705 = vadd.f32 %v356, %v704
        %706 = vmatmul.bf16.gmra.mxu0 %v317
        %v707 = vpop.f32.mrf.mxu0
        %v708 = vadd.f32 %v356, %v707
        %v709 = vpop.f32.mrf.mxu0
        %v710 = vadd.f32 %v356, %v709
        %711 = vmatmul.bf16.gmra.mxu0 %v318
        %v712 = vpop.f32.mrf.mxu0
        %v713 = vadd.f32 %v356, %v712
        %v714 = vpop.f32.mrf.mxu0
        %v715 = vadd.f32 %v356, %v714
        %716 = vdwg.mxu0
        %v717 = vmul.f32 %v531, 0.5
        %v718 = vmul.f32 %v580, 0.5
        %v719 = vmul.f32 %v629, 0.5
        %v720 = vmul.f32 %v678, 0.5
        %v721 = vmul.f32 %v533, 0.5
        %v722 = vmul.f32 %v582, 0.5
        %v723 = vmul.f32 %v631, 0.5
        %v724 = vmul.f32 %v680, 0.5
        %v725 = vmul.f32 %v536, 0.5
        %v726 = vmul.f32 %v585, 0.5
        %v727 = vmul.f32 %v634, 0.5
        %v728 = vmul.f32 %v683, 0.5
        %v729 = vmul.f32 %v538, 0.5
        %v730 = vmul.f32 %v587, 0.5
        %v731 = vmul.f32 %v636, 0.5
        %v732 = vmul.f32 %v685, 0.5
        %v733 = vmul.f32 %v541, 0.5
        %v734 = vmul.f32 %v590, 0.5
        %v735 = vmul.f32 %v639, 0.5
        %v736 = vmul.f32 %v688, 0.5
        %v737 = vmul.f32 %v543, 0.5
        %v738 = vmul.f32 %v592, 0.5
        %v739 = vmul.f32 %v641, 0.5
        %v740 = vmul.f32 %v690, 0.5
        %v741 = vmul.f32 %v546, 0.5
        %v742 = vmul.f32 %v595, 0.5
        %v743 = vmul.f32 %v644, 0.5
        %v744 = vmul.f32 %v693, 0.5
        %v745 = vmul.f32 %v548, 0.5
        %v746 = vmul.f32 %v597, 0.5
        %v747 = vmul.f32 %v646, 0.5
        %v748 = vmul.f32 %v695, 0.5
        %v749 = vmul.f32 %v551, 0.5
        %v750 = vmul.f32 %v600, 0.5
        %v751 = vmul.f32 %v649, 0.5
        %v752 = vmul.f32 %v698, 0.5
        %v753 = vmul.f32 %v553, 0.5
        %v754 = vmul.f32 %v602, 0.5
        %v755 = vmul.f32 %v651, 0.5
        %v756 = vmul.f32 %v700, 0.5
        %v757 = vmul.f32 %v556, 0.5
        %v758 = vmul.f32 %v605, 0.5
        %v759 = vmul.f32 %v654, 0.5
        %v760 = vmul.f32 %v703, 0.5
        %v761 = vmul.f32 %v558, 0.5
        %v762 = vmul.f32 %v607, 0.5
        %v763 = vmul.f32 %v656, 0.5
        %v764 = vmul.f32 %v705, 0.5
        %v765 = vmul.f32 %v561, 0.5
        %v766 = vmul.f32 %v610, 0.5
        %v767 = vmul.f32 %v659, 0.5
        %v768 = vmul.f32 %v708, 0.5
        %v769 = vmul.f32 %v563, 0.5
        %v770 = vmul.f32 %v612, 0.5
        %v771 = vmul.f32 %v661, 0.5
        %v772 = vmul.f32 %v710, 0.5
        %v773 = vmul.f32 %v566, 0.5
        %v774 = vmul.f32 %v615, 0.5
        %v775 = vmul.f32 %v664, 0.5
        %v776 = vmul.f32 %v713, 0.5
        %v777 = vmul.f32 %v568, 0.5
        %v778 = vmul.f32 %v617, 0.5
        %v779 = vmul.f32 %v666, 0.5
        %v780 = vmul.f32 %v715, 0.5
        %v781 = vmul.f32 %v531, 0.70710677
        %v782 = vmul.f32 %v580, 0.70710677
        %v783 = vmul.f32 %v629, 0.70710677
        %v784 = vmul.f32 %v678, 0.70710677
        %v785 = vmul.f32 %v533, 0.70710677
        %v786 = vmul.f32 %v582, 0.70710677
        %v787 = vmul.f32 %v631, 0.70710677
        %v788 = vmul.f32 %v680, 0.70710677
        %v789 = vmul.f32 %v536, 0.70710677
        %v790 = vmul.f32 %v585, 0.70710677
        %v791 = vmul.f32 %v634, 0.70710677
        %v792 = vmul.f32 %v683, 0.70710677
        %v793 = vmul.f32 %v538, 0.70710677
        %v794 = vmul.f32 %v587, 0.70710677
        %v795 = vmul.f32 %v636, 0.70710677
        %v796 = vmul.f32 %v685, 0.70710677
        %v797 = vmul.f32 %v541, 0.70710677
        %v798 = vmul.f32 %v590, 0.70710677
        %v799 = vmul.f32 %v639, 0.70710677
        %v800 = vmul.f32 %v688, 0.70710677
        %v801 = vmul.f32 %v543, 0.70710677
        %v802 = vmul.f32 %v592, 0.70710677
        %v803 = vmul.f32 %v641, 0.70710677
        %v804 = vmul.f32 %v690, 0.70710677
        %v805 = vmul.f32 %v546, 0.70710677
        %v806 = vmul.f32 %v595, 0.70710677
        %v807 = vmul.f32 %v644, 0.70710677
        %v808 = vmul.f32 %v693, 0.70710677
        %v809 = vmul.f32 %v548, 0.70710677
        %v810 = vmul.f32 %v597, 0.70710677
        %v811 = vmul.f32 %v646, 0.70710677
        %v812 = vmul.f32 %v695, 0.70710677
        %v813 = vmul.f32 %v551, 0.70710677
        %v814 = vmul.f32 %v600, 0.70710677
        %v815 = vmul.f32 %v649, 0.70710677
        %v816 = vmul.f32 %v698, 0.70710677
        %v817 = vmul.f32 %v553, 0.70710677
        %v818 = vmul.f32 %v602, 0.70710677
        %v819 = vmul.f32 %v651, 0.70710677
        %v820 = vmul.f32 %v700, 0.70710677
        %v821 = vmul.f32 %v556, 0.70710677
        %v822 = vmul.f32 %v605, 0.70710677
        %v823 = vmul.f32 %v654, 0.70710677
        %v824 = vmul.f32 %v703, 0.70710677
        %v825 = vmul.f32 %v558, 0.70710677
        %v826 = vmul.f32 %v607, 0.70710677
        %v827 = vmul.f32 %v656, 0.70710677
        %v828 = vmul.f32 %v705, 0.70710677
        %v829 = vmul.f32 %v561, 0.70710677
        %v830 = vmul.f32 %v610, 0.70710677
        %v831 = vmul.f32 %v659, 0.70710677
        %v832 = vmul.f32 %v708, 0.70710677
        %v833 = vmul.f32 %v563, 0.70710677
        %v834 = vmul.f32 %v612, 0.70710677
        %v835 = vmul.f32 %v661, 0.70710677
        %v836 = vmul.f32 %v710, 0.70710677
        %v837 = vmul.f32 %v566, 0.70710677
        %v838 = vmul.f32 %v615, 0.70710677
        %v839 = vmul.f32 %v664, 0.70710677
        %v840 = vmul.f32 %v713, 0.70710677
        %v841 = vmul.f32 %v568, 0.70710677
        %v842 = vmul.f32 %v617, 0.70710677
        %v843 = vmul.f32 %v666, 0.70710677
        %v844 = vmul.f32 %v715, 0.70710677
        %v845 = vmul.f32 %v781, %v781
        %v846 = vmin.f32 16.0, %v845
        %v847 = vmul.f32 %v846, 2.1237322e-06
        %v848 = vadd.f32 %v847, 0.00028619796
        %v849 = vmul.f32 %v846, %v848
        %v850 = vadd.f32 %v849, 0.0036580483
        %v851 = vmul.f32 %v846, %v850
        %v852 = vadd.f32 %v851, 0.05243302
        %v853 = vmul.f32 %v846, %v852
        %v854 = vadd.f32 %v853, 0.18741608
        %v855 = vmul.f32 %v846, %v854
        %v856 = vadd.f32 %v855, 1.1283791
        %v857 = vmul.f32 %v781, %v856
        %v858 = vmul.f32 %v846, 3.8918573e-05
        %v859 = vadd.f32 %v858, 0.001143296
        %v860 = vmul.f32 %v846, %v859
        %v861 = vadd.f32 %v860, 0.014752088
        %v862 = vmul.f32 %v846, %v861
        %v863 = vadd.f32 %v862, 0.112945676
        %v864 = vmul.f32 %v846, %v863
        %v865 = vadd.f32 %v864, 0.4994258
        %v866 = vmul.f32 %v846, %v865
        %v867 = vadd.f32 %v866, 1.0
        %v868 = vrcp.pop %v867
        %v869 = vmul.f32 %v867, %v868
        %v870 = vsub.f32 1.0, %v869
        %v871 = vmul.f32 %v868, %v870
        %v872 = vadd.f32 %v868, %v871
        %vm873 = vweird.f32 %v867
        %vm874 = vweird.f32 %v868
        %vm875 = vmor %vm873, %vm874
        %v876 = vsel %vm875, %v868, %v872
        %v877 = vand.u32 2147483647, %v867
        %vm878 = vcmp.eq.f32.partialorder %v877, 8.507059e+37
        %v879 = vand.u32 %v867, 2147483648
        %v880 = vor.u32 1.1754944e-38, %v879
        %v881 = vsel %vm878, %v880, %v876
        %v882 = vmul.f32 %v857, %v881
        %v883 = vmin.f32 %v882, 1.0
        %v884 = vmax.f32 %v883, -1.0
        %v885 = vmul.f32 %v782, %v782
        %v886 = vmin.f32 16.0, %v885
        %v887 = vmul.f32 %v886, 2.1237322e-06
        %v888 = vadd.f32 %v887, 0.00028619796
        %v889 = vmul.f32 %v886, %v888
        %v890 = vadd.f32 %v889, 0.0036580483
        %v891 = vmul.f32 %v886, %v890
        %v892 = vadd.f32 %v891, 0.05243302
        %v893 = vmul.f32 %v886, %v892
        %v894 = vadd.f32 %v893, 0.18741608
        %v895 = vmul.f32 %v886, %v894
        %v896 = vadd.f32 %v895, 1.1283791
        %v897 = vmul.f32 %v782, %v896
        %v898 = vmul.f32 %v886, 3.8918573e-05
        %v899 = vadd.f32 %v898, 0.001143296
        %v900 = vmul.f32 %v886, %v899
        %v901 = vadd.f32 %v900, 0.014752088
        %v902 = vmul.f32 %v886, %v901
        %v903 = vadd.f32 %v902, 0.112945676
        %v904 = vmul.f32 %v886, %v903
        %v905 = vadd.f32 %v904, 0.4994258
        %v906 = vmul.f32 %v886, %v905
        %v907 = vadd.f32 %v906, 1.0
        %v908 = vrcp.pop %v907
        %v909 = vmul.f32 %v907, %v908
        %v910 = vsub.f32 1.0, %v909
        %v911 = vmul.f32 %v908, %v910
        %v912 = vadd.f32 %v908, %v911
        %vm913 = vweird.f32 %v907
        %vm914 = vweird.f32 %v908
        %vm915 = vmor %vm913, %vm914
        %v916 = vsel %vm915, %v908, %v912
        %v917 = vand.u32 2147483647, %v907
        %vm918 = vcmp.eq.f32.partialorder %v917, 8.507059e+37
        %v919 = vand.u32 %v907, 2147483648
        %v920 = vor.u32 1.1754944e-38, %v919
        %v921 = vsel %vm918, %v920, %v916
        %v922 = vmul.f32 %v897, %v921
        %v923 = vmin.f32 %v922, 1.0
        %v924 = vmax.f32 %v923, -1.0
        %v925 = vmul.f32 %v783, %v783
        %v926 = vmin.f32 16.0, %v925
        %v927 = vmul.f32 %v926, 2.1237322e-06
        %v928 = vadd.f32 %v927, 0.00028619796
        %v929 = vmul.f32 %v926, %v928
        %v930 = vadd.f32 %v929, 0.0036580483
        %v931 = vmul.f32 %v926, %v930
        %v932 = vadd.f32 %v931, 0.05243302
        %v933 = vmul.f32 %v926, %v932
        %v934 = vadd.f32 %v933, 0.18741608
        %v935 = vmul.f32 %v926, %v934
        %v936 = vadd.f32 %v935, 1.1283791
        %v937 = vmul.f32 %v783, %v936
        %v938 = vmul.f32 %v926, 3.8918573e-05
        %v939 = vadd.f32 %v938, 0.001143296
        %v940 = vmul.f32 %v926, %v939
        %v941 = vadd.f32 %v940, 0.014752088
        %v942 = vmul.f32 %v926, %v941
        %v943 = vadd.f32 %v942, 0.112945676
        %v944 = vmul.f32 %v926, %v943
        %v945 = vadd.f32 %v944, 0.4994258
        %v946 = vmul.f32 %v926, %v945
        %v947 = vadd.f32 %v946, 1.0
        %v948 = vrcp.pop %v947
        %v949 = vmul.f32 %v947, %v948
        %v950 = vsub.f32 1.0, %v949
        %v951 = vmul.f32 %v948, %v950
        %v952 = vadd.f32 %v948, %v951
        %vm953 = vweird.f32 %v947
        %vm954 = vweird.f32 %v948
        %vm955 = vmor %vm953, %vm954
        %v956 = vsel %vm955, %v948, %v952
        %v957 = vand.u32 2147483647, %v947
        %vm958 = vcmp.eq.f32.partialorder %v957, 8.507059e+37
        %v959 = vand.u32 %v947, 2147483648
        %v960 = vor.u32 1.1754944e-38, %v959
        %v961 = vsel %vm958, %v960, %v956
        %v962 = vmul.f32 %v937, %v961
        %v963 = vmin.f32 %v962, 1.0
        %v964 = vmax.f32 %v963, -1.0
        %v965 = vmul.f32 %v784, %v784
        %v966 = vmin.f32 16.0, %v965
        %v967 = vmul.f32 %v966, 2.1237322e-06
        %v968 = vadd.f32 %v967, 0.00028619796
        %v969 = vmul.f32 %v966, %v968
        %v970 = vadd.f32 %v969, 0.0036580483
        %v971 = vmul.f32 %v966, %v970
        %v972 = vadd.f32 %v971, 0.05243302
        %v973 = vmul.f32 %v966, %v972
        %v974 = vadd.f32 %v973, 0.18741608
        %v975 = vmul.f32 %v966, %v974
        %v976 = vadd.f32 %v975, 1.1283791
        %v977 = vmul.f32 %v784, %v976
        %v978 = vmul.f32 %v966, 3.8918573e-05
        %v979 = vadd.f32 %v978, 0.001143296
        %v980 = vmul.f32 %v966, %v979
        %v981 = vadd.f32 %v980, 0.014752088
        %v982 = vmul.f32 %v966, %v981
        %v983 = vadd.f32 %v982, 0.112945676
        %v984 = vmul.f32 %v966, %v983
        %v985 = vadd.f32 %v984, 0.4994258
        %v986 = vmul.f32 %v966, %v985
        %v987 = vadd.f32 %v986, 1.0
        %v988 = vrcp.pop %v987
        %v989 = vmul.f32 %v987, %v988
        %v990 = vsub.f32 1.0, %v989
        %v991 = vmul.f32 %v988, %v990
        %v992 = vadd.f32 %v988, %v991
        %vm993 = vweird.f32 %v987
        %vm994 = vweird.f32 %v988
        %vm995 = vmor %vm993, %vm994
        %v996 = vsel %vm995, %v988, %v992
        %v997 = vand.u32 2147483647, %v987
        %vm998 = vcmp.eq.f32.partialorder %v997, 8.507059e+37
        %v999 = vand.u32 %v987, 2147483648
        %v1000 = vor.u32 1.1754944e-38, %v999
        %v1001 = vsel %vm998, %v1000, %v996
        %v1002 = vmul.f32 %v977, %v1001
        %v1003 = vmin.f32 %v1002, 1.0
        %v1004 = vmax.f32 %v1003, -1.0
        %v1005 = vmul.f32 %v785, %v785
        %v1006 = vmin.f32 16.0, %v1005
        %v1007 = vmul.f32 %v1006, 2.1237322e-06
        %v1008 = vadd.f32 %v1007, 0.00028619796
        %v1009 = vmul.f32 %v1006, %v1008
        %v1010 = vadd.f32 %v1009, 0.0036580483
        %v1011 = vmul.f32 %v1006, %v1010
        %v1012 = vadd.f32 %v1011, 0.05243302
        %v1013 = vmul.f32 %v1006, %v1012
        %v1014 = vadd.f32 %v1013, 0.18741608
        %v1015 = vmul.f32 %v1006, %v1014
        %v1016 = vadd.f32 %v1015, 1.1283791
        %v1017 = vmul.f32 %v785, %v1016
        %v1018 = vmul.f32 %v1006, 3.8918573e-05
        %v1019 = vadd.f32 %v1018, 0.001143296
        %v1020 = vmul.f32 %v1006, %v1019
        %v1021 = vadd.f32 %v1020, 0.014752088
        %v1022 = vmul.f32 %v1006, %v1021
        %v1023 = vadd.f32 %v1022, 0.112945676
        %v1024 = vmul.f32 %v1006, %v1023
        %v1025 = vadd.f32 %v1024, 0.4994258
        %v1026 = vmul.f32 %v1006, %v1025
        %v1027 = vadd.f32 %v1026, 1.0
        %v1028 = vrcp.pop %v1027
        %v1029 = vmul.f32 %v1027, %v1028
        %v1030 = vsub.f32 1.0, %v1029
        %v1031 = vmul.f32 %v1028, %v1030
        %v1032 = vadd.f32 %v1028, %v1031
        %vm1033 = vweird.f32 %v1027
        %vm1034 = vweird.f32 %v1028
        %vm1035 = vmor %vm1033, %vm1034
        %v1036 = vsel %vm1035, %v1028, %v1032
        %v1037 = vand.u32 2147483647, %v1027
        %vm1038 = vcmp.eq.f32.partialorder %v1037, 8.507059e+37
        %v1039 = vand.u32 %v1027, 2147483648
        %v1040 = vor.u32 1.1754944e-38, %v1039
        %v1041 = vsel %vm1038, %v1040, %v1036
        %v1042 = vmul.f32 %v1017, %v1041
        %v1043 = vmin.f32 %v1042, 1.0
        %v1044 = vmax.f32 %v1043, -1.0
        %v1045 = vmul.f32 %v786, %v786
        %v1046 = vmin.f32 16.0, %v1045
        %v1047 = vmul.f32 %v1046, 2.1237322e-06
        %v1048 = vadd.f32 %v1047, 0.00028619796
        %v1049 = vmul.f32 %v1046, %v1048
        %v1050 = vadd.f32 %v1049, 0.0036580483
        %v1051 = vmul.f32 %v1046, %v1050
        %v1052 = vadd.f32 %v1051, 0.05243302
        %v1053 = vmul.f32 %v1046, %v1052
        %v1054 = vadd.f32 %v1053, 0.18741608
        %v1055 = vmul.f32 %v1046, %v1054
        %v1056 = vadd.f32 %v1055, 1.1283791
        %v1057 = vmul.f32 %v786, %v1056
        %v1058 = vmul.f32 %v1046, 3.8918573e-05
        %v1059 = vadd.f32 %v1058, 0.001143296
        %v1060 = vmul.f32 %v1046, %v1059
        %v1061 = vadd.f32 %v1060, 0.014752088
        %v1062 = vmul.f32 %v1046, %v1061
        %v1063 = vadd.f32 %v1062, 0.112945676
        %v1064 = vmul.f32 %v1046, %v1063
        %v1065 = vadd.f32 %v1064, 0.4994258
        %v1066 = vmul.f32 %v1046, %v1065
        %v1067 = vadd.f32 %v1066, 1.0
        %v1068 = vrcp.pop %v1067
        %v1069 = vmul.f32 %v1067, %v1068
        %v1070 = vsub.f32 1.0, %v1069
        %v1071 = vmul.f32 %v1068, %v1070
        %v1072 = vadd.f32 %v1068, %v1071
        %vm1073 = vweird.f32 %v1067
        %vm1074 = vweird.f32 %v1068
        %vm1075 = vmor %vm1073, %vm1074
        %v1076 = vsel %vm1075, %v1068, %v1072
        %v1077 = vand.u32 2147483647, %v1067
        %vm1078 = vcmp.eq.f32.partialorder %v1077, 8.507059e+37
        %v1079 = vand.u32 %v1067, 2147483648
        %v1080 = vor.u32 1.1754944e-38, %v1079
        %v1081 = vsel %vm1078, %v1080, %v1076
        %v1082 = vmul.f32 %v1057, %v1081
        %v1083 = vmin.f32 %v1082, 1.0
        %v1084 = vmax.f32 %v1083, -1.0
        %v1085 = vmul.f32 %v787, %v787
        %v1086 = vmin.f32 16.0, %v1085
        %v1087 = vmul.f32 %v1086, 2.1237322e-06
        %v1088 = vadd.f32 %v1087, 0.00028619796
        %v1089 = vmul.f32 %v1086, %v1088
        %v1090 = vadd.f32 %v1089, 0.0036580483
        %v1091 = vmul.f32 %v1086, %v1090
        %v1092 = vadd.f32 %v1091, 0.05243302
        %v1093 = vmul.f32 %v1086, %v1092
        %v1094 = vadd.f32 %v1093, 0.18741608
        %v1095 = vmul.f32 %v1086, %v1094
        %v1096 = vadd.f32 %v1095, 1.1283791
        %v1097 = vmul.f32 %v787, %v1096
        %v1098 = vmul.f32 %v1086, 3.8918573e-05
        %v1099 = vadd.f32 %v1098, 0.001143296
        %v1100 = vmul.f32 %v1086, %v1099
        %v1101 = vadd.f32 %v1100, 0.014752088
        %v1102 = vmul.f32 %v1086, %v1101
        %v1103 = vadd.f32 %v1102, 0.112945676
        %v1104 = vmul.f32 %v1086, %v1103
        %v1105 = vadd.f32 %v1104, 0.4994258
        %v1106 = vmul.f32 %v1086, %v1105
        %v1107 = vadd.f32 %v1106, 1.0
        %v1108 = vrcp.pop %v1107
        %v1109 = vmul.f32 %v1107, %v1108
        %v1110 = vsub.f32 1.0, %v1109
        %v1111 = vmul.f32 %v1108, %v1110
        %v1112 = vadd.f32 %v1108, %v1111
        %vm1113 = vweird.f32 %v1107
        %vm1114 = vweird.f32 %v1108
        %vm1115 = vmor %vm1113, %vm1114
        %v1116 = vsel %vm1115, %v1108, %v1112
        %v1117 = vand.u32 2147483647, %v1107
        %vm1118 = vcmp.eq.f32.partialorder %v1117, 8.507059e+37
        %v1119 = vand.u32 %v1107, 2147483648
        %v1120 = vor.u32 1.1754944e-38, %v1119
        %v1121 = vsel %vm1118, %v1120, %v1116
        %v1122 = vmul.f32 %v1097, %v1121
        %v1123 = vmin.f32 %v1122, 1.0
        %v1124 = vmax.f32 %v1123, -1.0
        %v1125 = vmul.f32 %v788, %v788
        %v1126 = vmin.f32 16.0, %v1125
        %v1127 = vmul.f32 %v1126, 2.1237322e-06
        %v1128 = vadd.f32 %v1127, 0.00028619796
        %v1129 = vmul.f32 %v1126, %v1128
        %v1130 = vadd.f32 %v1129, 0.0036580483
        %v1131 = vmul.f32 %v1126, %v1130
        %v1132 = vadd.f32 %v1131, 0.05243302
        %v1133 = vmul.f32 %v1126, %v1132
        %v1134 = vadd.f32 %v1133, 0.18741608
        %v1135 = vmul.f32 %v1126, %v1134
        %v1136 = vadd.f32 %v1135, 1.1283791
        %v1137 = vmul.f32 %v788, %v1136
        %v1138 = vmul.f32 %v1126, 3.8918573e-05
        %v1139 = vadd.f32 %v1138, 0.001143296
        %v1140 = vmul.f32 %v1126, %v1139
        %v1141 = vadd.f32 %v1140, 0.014752088
        %v1142 = vmul.f32 %v1126, %v1141
        %v1143 = vadd.f32 %v1142, 0.112945676
        %v1144 = vmul.f32 %v1126, %v1143
        %v1145 = vadd.f32 %v1144, 0.4994258
        %v1146 = vmul.f32 %v1126, %v1145
        %v1147 = vadd.f32 %v1146, 1.0
        %v1148 = vrcp.pop %v1147
        %v1149 = vmul.f32 %v1147, %v1148
        %v1150 = vsub.f32 1.0, %v1149
        %v1151 = vmul.f32 %v1148, %v1150
        %v1152 = vadd.f32 %v1148, %v1151
        %vm1153 = vweird.f32 %v1147
        %vm1154 = vweird.f32 %v1148
        %vm1155 = vmor %vm1153, %vm1154
        %v1156 = vsel %vm1155, %v1148, %v1152
        %v1157 = vand.u32 2147483647, %v1147
        %vm1158 = vcmp.eq.f32.partialorder %v1157, 8.507059e+37
        %v1159 = vand.u32 %v1147, 2147483648
        %v1160 = vor.u32 1.1754944e-38, %v1159
        %v1161 = vsel %vm1158, %v1160, %v1156
        %v1162 = vmul.f32 %v1137, %v1161
        %v1163 = vmin.f32 %v1162, 1.0
        %v1164 = vmax.f32 %v1163, -1.0
        %v1165 = vmul.f32 %v789, %v789
        %v1166 = vmin.f32 16.0, %v1165
        %v1167 = vmul.f32 %v1166, 2.1237322e-06
        %v1168 = vadd.f32 %v1167, 0.00028619796
        %v1169 = vmul.f32 %v1166, %v1168
        %v1170 = vadd.f32 %v1169, 0.0036580483
        %v1171 = vmul.f32 %v1166, %v1170
        %v1172 = vadd.f32 %v1171, 0.05243302
        %v1173 = vmul.f32 %v1166, %v1172
        %v1174 = vadd.f32 %v1173, 0.18741608
        %v1175 = vmul.f32 %v1166, %v1174
        %v1176 = vadd.f32 %v1175, 1.1283791
        %v1177 = vmul.f32 %v789, %v1176
        %v1178 = vmul.f32 %v1166, 3.8918573e-05
        %v1179 = vadd.f32 %v1178, 0.001143296
        %v1180 = vmul.f32 %v1166, %v1179
        %v1181 = vadd.f32 %v1180, 0.014752088
        %v1182 = vmul.f32 %v1166, %v1181
        %v1183 = vadd.f32 %v1182, 0.112945676
        %v1184 = vmul.f32 %v1166, %v1183
        %v1185 = vadd.f32 %v1184, 0.4994258
        %v1186 = vmul.f32 %v1166, %v1185
        %v1187 = vadd.f32 %v1186, 1.0
        %v1188 = vrcp.pop %v1187
        %v1189 = vmul.f32 %v1187, %v1188
        %v1190 = vsub.f32 1.0, %v1189
        %v1191 = vmul.f32 %v1188, %v1190
        %v1192 = vadd.f32 %v1188, %v1191
        %vm1193 = vweird.f32 %v1187
        %vm1194 = vweird.f32 %v1188
        %vm1195 = vmor %vm1193, %vm1194
        %v1196 = vsel %vm1195, %v1188, %v1192
        %v1197 = vand.u32 2147483647, %v1187
        %vm1198 = vcmp.eq.f32.partialorder %v1197, 8.507059e+37
        %v1199 = vand.u32 %v1187, 2147483648
        %v1200 = vor.u32 1.1754944e-38, %v1199
        %v1201 = vsel %vm1198, %v1200, %v1196
        %v1202 = vmul.f32 %v1177, %v1201
        %v1203 = vmin.f32 %v1202, 1.0
        %v1204 = vmax.f32 %v1203, -1.0
        %v1205 = vmul.f32 %v790, %v790
        %v1206 = vmin.f32 16.0, %v1205
        %v1207 = vmul.f32 %v1206, 2.1237322e-06
        %v1208 = vadd.f32 %v1207, 0.00028619796
        %v1209 = vmul.f32 %v1206, %v1208
        %v1210 = vadd.f32 %v1209, 0.0036580483
        %v1211 = vmul.f32 %v1206, %v1210
        %v1212 = vadd.f32 %v1211, 0.05243302
        %v1213 = vmul.f32 %v1206, %v1212
        %v1214 = vadd.f32 %v1213, 0.18741608
        %v1215 = vmul.f32 %v1206, %v1214
        %v1216 = vadd.f32 %v1215, 1.1283791
        %v1217 = vmul.f32 %v790, %v1216
        %v1218 = vmul.f32 %v1206, 3.8918573e-05
        %v1219 = vadd.f32 %v1218, 0.001143296
        %v1220 = vmul.f32 %v1206, %v1219
        %v1221 = vadd.f32 %v1220, 0.014752088
        %v1222 = vmul.f32 %v1206, %v1221
        %v1223 = vadd.f32 %v1222, 0.112945676
        %v1224 = vmul.f32 %v1206, %v1223
        %v1225 = vadd.f32 %v1224, 0.4994258
        %v1226 = vmul.f32 %v1206, %v1225
        %v1227 = vadd.f32 %v1226, 1.0
        %v1228 = vrcp.pop %v1227
        %v1229 = vmul.f32 %v1227, %v1228
        %v1230 = vsub.f32 1.0, %v1229
        %v1231 = vmul.f32 %v1228, %v1230
        %v1232 = vadd.f32 %v1228, %v1231
        %vm1233 = vweird.f32 %v1227
        %vm1234 = vweird.f32 %v1228
        %vm1235 = vmor %vm1233, %vm1234
        %v1236 = vsel %vm1235, %v1228, %v1232
        %v1237 = vand.u32 2147483647, %v1227
        %vm1238 = vcmp.eq.f32.partialorder %v1237, 8.507059e+37
        %v1239 = vand.u32 %v1227, 2147483648
        %v1240 = vor.u32 1.1754944e-38, %v1239
        %v1241 = vsel %vm1238, %v1240, %v1236
        %v1242 = vmul.f32 %v1217, %v1241
        %v1243 = vmin.f32 %v1242, 1.0
        %v1244 = vmax.f32 %v1243, -1.0
        %v1245 = vmul.f32 %v791, %v791
        %v1246 = vmin.f32 16.0, %v1245
        %v1247 = vmul.f32 %v1246, 2.1237322e-06
        %v1248 = vadd.f32 %v1247, 0.00028619796
        %v1249 = vmul.f32 %v1246, %v1248
        %v1250 = vadd.f32 %v1249, 0.0036580483
        %v1251 = vmul.f32 %v1246, %v1250
        %v1252 = vadd.f32 %v1251, 0.05243302
        %v1253 = vmul.f32 %v1246, %v1252
        %v1254 = vadd.f32 %v1253, 0.18741608
        %v1255 = vmul.f32 %v1246, %v1254
        %v1256 = vadd.f32 %v1255, 1.1283791
        %v1257 = vmul.f32 %v791, %v1256
        %v1258 = vmul.f32 %v1246, 3.8918573e-05
        %v1259 = vadd.f32 %v1258, 0.001143296
        %v1260 = vmul.f32 %v1246, %v1259
        %v1261 = vadd.f32 %v1260, 0.014752088
        %v1262 = vmul.f32 %v1246, %v1261
        %v1263 = vadd.f32 %v1262, 0.112945676
        %v1264 = vmul.f32 %v1246, %v1263
        %v1265 = vadd.f32 %v1264, 0.4994258
        %v1266 = vmul.f32 %v1246, %v1265
        %v1267 = vadd.f32 %v1266, 1.0
        %v1268 = vrcp.pop %v1267
        %v1269 = vmul.f32 %v1267, %v1268
        %v1270 = vsub.f32 1.0, %v1269
        %v1271 = vmul.f32 %v1268, %v1270
        %v1272 = vadd.f32 %v1268, %v1271
        %vm1273 = vweird.f32 %v1267
        %vm1274 = vweird.f32 %v1268
        %vm1275 = vmor %vm1273, %vm1274
        %v1276 = vsel %vm1275, %v1268, %v1272
        %v1277 = vand.u32 2147483647, %v1267
        %vm1278 = vcmp.eq.f32.partialorder %v1277, 8.507059e+37
        %v1279 = vand.u32 %v1267, 2147483648
        %v1280 = vor.u32 1.1754944e-38, %v1279
        %v1281 = vsel %vm1278, %v1280, %v1276
        %v1282 = vmul.f32 %v1257, %v1281
        %v1283 = vmin.f32 %v1282, 1.0
        %v1284 = vmax.f32 %v1283, -1.0
        %v1285 = vmul.f32 %v792, %v792
        %v1286 = vmin.f32 16.0, %v1285
        %v1287 = vmul.f32 %v1286, 2.1237322e-06
        %v1288 = vadd.f32 %v1287, 0.00028619796
        %v1289 = vmul.f32 %v1286, %v1288
        %v1290 = vadd.f32 %v1289, 0.0036580483
        %v1291 = vmul.f32 %v1286, %v1290
        %v1292 = vadd.f32 %v1291, 0.05243302
        %v1293 = vmul.f32 %v1286, %v1292
        %v1294 = vadd.f32 %v1293, 0.18741608
        %v1295 = vmul.f32 %v1286, %v1294
        %v1296 = vadd.f32 %v1295, 1.1283791
        %v1297 = vmul.f32 %v792, %v1296
        %v1298 = vmul.f32 %v1286, 3.8918573e-05
        %v1299 = vadd.f32 %v1298, 0.001143296
        %v1300 = vmul.f32 %v1286, %v1299
        %v1301 = vadd.f32 %v1300, 0.014752088
        %v1302 = vmul.f32 %v1286, %v1301
        %v1303 = vadd.f32 %v1302, 0.112945676
        %v1304 = vmul.f32 %v1286, %v1303
        %v1305 = vadd.f32 %v1304, 0.4994258
        %v1306 = vmul.f32 %v1286, %v1305
        %v1307 = vadd.f32 %v1306, 1.0
        %v1308 = vrcp.pop %v1307
        %v1309 = vmul.f32 %v1307, %v1308
        %v1310 = vsub.f32 1.0, %v1309
        %v1311 = vmul.f32 %v1308, %v1310
        %v1312 = vadd.f32 %v1308, %v1311
        %vm1313 = vweird.f32 %v1307
        %vm1314 = vweird.f32 %v1308
        %vm1315 = vmor %vm1313, %vm1314
        %v1316 = vsel %vm1315, %v1308, %v1312
        %v1317 = vand.u32 2147483647, %v1307
        %vm1318 = vcmp.eq.f32.partialorder %v1317, 8.507059e+37
        %v1319 = vand.u32 %v1307, 2147483648
        %v1320 = vor.u32 1.1754944e-38, %v1319
        %v1321 = vsel %vm1318, %v1320, %v1316
        %v1322 = vmul.f32 %v1297, %v1321
        %v1323 = vmin.f32 %v1322, 1.0
        %v1324 = vmax.f32 %v1323, -1.0
        %v1325 = vmul.f32 %v793, %v793
        %v1326 = vmin.f32 16.0, %v1325
        %v1327 = vmul.f32 %v1326, 2.1237322e-06
        %v1328 = vadd.f32 %v1327, 0.00028619796
        %v1329 = vmul.f32 %v1326, %v1328
        %v1330 = vadd.f32 %v1329, 0.0036580483
        %v1331 = vmul.f32 %v1326, %v1330
        %v1332 = vadd.f32 %v1331, 0.05243302
        %v1333 = vmul.f32 %v1326, %v1332
        %v1334 = vadd.f32 %v1333, 0.18741608
        %v1335 = vmul.f32 %v1326, %v1334
        %v1336 = vadd.f32 %v1335, 1.1283791
        %v1337 = vmul.f32 %v793, %v1336
        %v1338 = vmul.f32 %v1326, 3.8918573e-05
        %v1339 = vadd.f32 %v1338, 0.001143296
        %v1340 = vmul.f32 %v1326, %v1339
        %v1341 = vadd.f32 %v1340, 0.014752088
        %v1342 = vmul.f32 %v1326, %v1341
        %v1343 = vadd.f32 %v1342, 0.112945676
        %v1344 = vmul.f32 %v1326, %v1343
        %v1345 = vadd.f32 %v1344, 0.4994258
        %v1346 = vmul.f32 %v1326, %v1345
        %v1347 = vadd.f32 %v1346, 1.0
        %v1348 = vrcp.pop %v1347
        %v1349 = vmul.f32 %v1347, %v1348
        %v1350 = vsub.f32 1.0, %v1349
        %v1351 = vmul.f32 %v1348, %v1350
        %v1352 = vadd.f32 %v1348, %v1351
        %vm1353 = vweird.f32 %v1347
        %vm1354 = vweird.f32 %v1348
        %vm1355 = vmor %vm1353, %vm1354
        %v1356 = vsel %vm1355, %v1348, %v1352
        %v1357 = vand.u32 2147483647, %v1347
        %vm1358 = vcmp.eq.f32.partialorder %v1357, 8.507059e+37
        %v1359 = vand.u32 %v1347, 2147483648
        %v1360 = vor.u32 1.1754944e-38, %v1359
        %v1361 = vsel %vm1358, %v1360, %v1356
        %v1362 = vmul.f32 %v1337, %v1361
        %v1363 = vmin.f32 %v1362, 1.0
        %v1364 = vmax.f32 %v1363, -1.0
        %v1365 = vmul.f32 %v794, %v794
        %v1366 = vmin.f32 16.0, %v1365
        %v1367 = vmul.f32 %v1366, 2.1237322e-06
        %v1368 = vadd.f32 %v1367, 0.00028619796
        %v1369 = vmul.f32 %v1366, %v1368
        %v1370 = vadd.f32 %v1369, 0.0036580483
        %v1371 = vmul.f32 %v1366, %v1370
        %v1372 = vadd.f32 %v1371, 0.05243302
        %v1373 = vmul.f32 %v1366, %v1372
        %v1374 = vadd.f32 %v1373, 0.18741608
        %v1375 = vmul.f32 %v1366, %v1374
        %v1376 = vadd.f32 %v1375, 1.1283791
        %v1377 = vmul.f32 %v794, %v1376
        %v1378 = vmul.f32 %v1366, 3.8918573e-05
        %v1379 = vadd.f32 %v1378, 0.001143296
        %v1380 = vmul.f32 %v1366, %v1379
        %v1381 = vadd.f32 %v1380, 0.014752088
        %v1382 = vmul.f32 %v1366, %v1381
        %v1383 = vadd.f32 %v1382, 0.112945676
        %v1384 = vmul.f32 %v1366, %v1383
        %v1385 = vadd.f32 %v1384, 0.4994258
        %v1386 = vmul.f32 %v1366, %v1385
        %v1387 = vadd.f32 %v1386, 1.0
        %v1388 = vrcp.pop %v1387
        %v1389 = vmul.f32 %v1387, %v1388
        %v1390 = vsub.f32 1.0, %v1389
        %v1391 = vmul.f32 %v1388, %v1390
        %v1392 = vadd.f32 %v1388, %v1391
        %vm1393 = vweird.f32 %v1387
        %vm1394 = vweird.f32 %v1388
        %vm1395 = vmor %vm1393, %vm1394
        %v1396 = vsel %vm1395, %v1388, %v1392
        %v1397 = vand.u32 2147483647, %v1387
        %vm1398 = vcmp.eq.f32.partialorder %v1397, 8.507059e+37
        %v1399 = vand.u32 %v1387, 2147483648
        %v1400 = vor.u32 1.1754944e-38, %v1399
        %v1401 = vsel %vm1398, %v1400, %v1396
        %v1402 = vmul.f32 %v1377, %v1401
        %v1403 = vmin.f32 %v1402, 1.0
        %v1404 = vmax.f32 %v1403, -1.0
        %v1405 = vmul.f32 %v795, %v795
        %v1406 = vmin.f32 16.0, %v1405
        %v1407 = vmul.f32 %v1406, 2.1237322e-06
        %v1408 = vadd.f32 %v1407, 0.00028619796
        %v1409 = vmul.f32 %v1406, %v1408
        %v1410 = vadd.f32 %v1409, 0.0036580483
        %v1411 = vmul.f32 %v1406, %v1410
        %v1412 = vadd.f32 %v1411, 0.05243302
        %v1413 = vmul.f32 %v1406, %v1412
        %v1414 = vadd.f32 %v1413, 0.18741608
        %v1415 = vmul.f32 %v1406, %v1414
        %v1416 = vadd.f32 %v1415, 1.1283791
        %v1417 = vmul.f32 %v795, %v1416
        %v1418 = vmul.f32 %v1406, 3.8918573e-05
        %v1419 = vadd.f32 %v1418, 0.001143296
        %v1420 = vmul.f32 %v1406, %v1419
        %v1421 = vadd.f32 %v1420, 0.014752088
        %v1422 = vmul.f32 %v1406, %v1421
        %v1423 = vadd.f32 %v1422, 0.112945676
        %v1424 = vmul.f32 %v1406, %v1423
        %v1425 = vadd.f32 %v1424, 0.4994258
        %v1426 = vmul.f32 %v1406, %v1425
        %v1427 = vadd.f32 %v1426, 1.0
        %v1428 = vrcp.pop %v1427
        %v1429 = vmul.f32 %v1427, %v1428
        %v1430 = vsub.f32 1.0, %v1429
        %v1431 = vmul.f32 %v1428, %v1430
        %v1432 = vadd.f32 %v1428, %v1431
        %vm1433 = vweird.f32 %v1427
        %vm1434 = vweird.f32 %v1428
        %vm1435 = vmor %vm1433, %vm1434
        %v1436 = vsel %vm1435, %v1428, %v1432
        %v1437 = vand.u32 2147483647, %v1427
        %vm1438 = vcmp.eq.f32.partialorder %v1437, 8.507059e+37
        %v1439 = vand.u32 %v1427, 2147483648
        %v1440 = vor.u32 1.1754944e-38, %v1439
        %v1441 = vsel %vm1438, %v1440, %v1436
        %v1442 = vmul.f32 %v1417, %v1441
        %v1443 = vmin.f32 %v1442, 1.0
        %v1444 = vmax.f32 %v1443, -1.0
        %v1445 = vmul.f32 %v796, %v796
        %v1446 = vmin.f32 16.0, %v1445
        %v1447 = vmul.f32 %v1446, 2.1237322e-06
        %v1448 = vadd.f32 %v1447, 0.00028619796
        %v1449 = vmul.f32 %v1446, %v1448
        %v1450 = vadd.f32 %v1449, 0.0036580483
        %v1451 = vmul.f32 %v1446, %v1450
        %v1452 = vadd.f32 %v1451, 0.05243302
        %v1453 = vmul.f32 %v1446, %v1452
        %v1454 = vadd.f32 %v1453, 0.18741608
        %v1455 = vmul.f32 %v1446, %v1454
        %v1456 = vadd.f32 %v1455, 1.1283791
        %v1457 = vmul.f32 %v796, %v1456
        %v1458 = vmul.f32 %v1446, 3.8918573e-05
        %v1459 = vadd.f32 %v1458, 0.001143296
        %v1460 = vmul.f32 %v1446, %v1459
        %v1461 = vadd.f32 %v1460, 0.014752088
        %v1462 = vmul.f32 %v1446, %v1461
        %v1463 = vadd.f32 %v1462, 0.112945676
        %v1464 = vmul.f32 %v1446, %v1463
        %v1465 = vadd.f32 %v1464, 0.4994258
        %v1466 = vmul.f32 %v1446, %v1465
        %v1467 = vadd.f32 %v1466, 1.0
        %v1468 = vrcp.pop %v1467
        %v1469 = vmul.f32 %v1467, %v1468
        %v1470 = vsub.f32 1.0, %v1469
        %v1471 = vmul.f32 %v1468, %v1470
        %v1472 = vadd.f32 %v1468, %v1471
        %vm1473 = vweird.f32 %v1467
        %vm1474 = vweird.f32 %v1468
        %vm1475 = vmor %vm1473, %vm1474
        %v1476 = vsel %vm1475, %v1468, %v1472
        %v1477 = vand.u32 2147483647, %v1467
        %vm1478 = vcmp.eq.f32.partialorder %v1477, 8.507059e+37
        %v1479 = vand.u32 %v1467, 2147483648
        %v1480 = vor.u32 1.1754944e-38, %v1479
        %v1481 = vsel %vm1478, %v1480, %v1476
        %v1482 = vmul.f32 %v1457, %v1481
        %v1483 = vmin.f32 %v1482, 1.0
        %v1484 = vmax.f32 %v1483, -1.0
        %v1485 = vmul.f32 %v797, %v797
        %v1486 = vmin.f32 16.0, %v1485
        %v1487 = vmul.f32 %v1486, 2.1237322e-06
        %v1488 = vadd.f32 %v1487, 0.00028619796
        %v1489 = vmul.f32 %v1486, %v1488
        %v1490 = vadd.f32 %v1489, 0.0036580483
        %v1491 = vmul.f32 %v1486, %v1490
        %v1492 = vadd.f32 %v1491, 0.05243302
        %v1493 = vmul.f32 %v1486, %v1492
        %v1494 = vadd.f32 %v1493, 0.18741608
        %v1495 = vmul.f32 %v1486, %v1494
        %v1496 = vadd.f32 %v1495, 1.1283791
        %v1497 = vmul.f32 %v797, %v1496
        %v1498 = vmul.f32 %v1486, 3.8918573e-05
        %v1499 = vadd.f32 %v1498, 0.001143296
        %v1500 = vmul.f32 %v1486, %v1499
        %v1501 = vadd.f32 %v1500, 0.014752088
        %v1502 = vmul.f32 %v1486, %v1501
        %v1503 = vadd.f32 %v1502, 0.112945676
        %v1504 = vmul.f32 %v1486, %v1503
        %v1505 = vadd.f32 %v1504, 0.4994258
        %v1506 = vmul.f32 %v1486, %v1505
        %v1507 = vadd.f32 %v1506, 1.0
        %v1508 = vrcp.pop %v1507
        %v1509 = vmul.f32 %v1507, %v1508
        %v1510 = vsub.f32 1.0, %v1509
        %v1511 = vmul.f32 %v1508, %v1510
        %v1512 = vadd.f32 %v1508, %v1511
        %vm1513 = vweird.f32 %v1507
        %vm1514 = vweird.f32 %v1508
        %vm1515 = vmor %vm1513, %vm1514
        %v1516 = vsel %vm1515, %v1508, %v1512
        %v1517 = vand.u32 2147483647, %v1507
        %vm1518 = vcmp.eq.f32.partialorder %v1517, 8.507059e+37
        %v1519 = vand.u32 %v1507, 2147483648
        %v1520 = vor.u32 1.1754944e-38, %v1519
        %v1521 = vsel %vm1518, %v1520, %v1516
        %v1522 = vmul.f32 %v1497, %v1521
        %v1523 = vmin.f32 %v1522, 1.0
        %v1524 = vmax.f32 %v1523, -1.0
        %v1525 = vmul.f32 %v798, %v798
        %v1526 = vmin.f32 16.0, %v1525
        %v1527 = vmul.f32 %v1526, 2.1237322e-06
        %v1528 = vadd.f32 %v1527, 0.00028619796
        %v1529 = vmul.f32 %v1526, %v1528
        %v1530 = vadd.f32 %v1529, 0.0036580483
        %v1531 = vmul.f32 %v1526, %v1530
        %v1532 = vadd.f32 %v1531, 0.05243302
        %v1533 = vmul.f32 %v1526, %v1532
        %v1534 = vadd.f32 %v1533, 0.18741608
        %v1535 = vmul.f32 %v1526, %v1534
        %v1536 = vadd.f32 %v1535, 1.1283791
        %v1537 = vmul.f32 %v798, %v1536
        %v1538 = vmul.f32 %v1526, 3.8918573e-05
        %v1539 = vadd.f32 %v1538, 0.001143296
        %v1540 = vmul.f32 %v1526, %v1539
        %v1541 = vadd.f32 %v1540, 0.014752088
        %v1542 = vmul.f32 %v1526, %v1541
        %v1543 = vadd.f32 %v1542, 0.112945676
        %v1544 = vmul.f32 %v1526, %v1543
        %v1545 = vadd.f32 %v1544, 0.4994258
        %v1546 = vmul.f32 %v1526, %v1545
        %v1547 = vadd.f32 %v1546, 1.0
        %v1548 = vrcp.pop %v1547
        %v1549 = vmul.f32 %v1547, %v1548
        %v1550 = vsub.f32 1.0, %v1549
        %v1551 = vmul.f32 %v1548, %v1550
        %v1552 = vadd.f32 %v1548, %v1551
        %vm1553 = vweird.f32 %v1547
        %vm1554 = vweird.f32 %v1548
        %vm1555 = vmor %vm1553, %vm1554
        %v1556 = vsel %vm1555, %v1548, %v1552
        %v1557 = vand.u32 2147483647, %v1547
        %vm1558 = vcmp.eq.f32.partialorder %v1557, 8.507059e+37
        %v1559 = vand.u32 %v1547, 2147483648
        %v1560 = vor.u32 1.1754944e-38, %v1559
        %v1561 = vsel %vm1558, %v1560, %v1556
        %v1562 = vmul.f32 %v1537, %v1561
        %v1563 = vmin.f32 %v1562, 1.0
        %v1564 = vmax.f32 %v1563, -1.0
        %v1565 = vmul.f32 %v799, %v799
        %v1566 = vmin.f32 16.0, %v1565
        %v1567 = vmul.f32 %v1566, 2.1237322e-06
        %v1568 = vadd.f32 %v1567, 0.00028619796
        %v1569 = vmul.f32 %v1566, %v1568
        %v1570 = vadd.f32 %v1569, 0.0036580483
        %v1571 = vmul.f32 %v1566, %v1570
        %v1572 = vadd.f32 %v1571, 0.05243302
        %v1573 = vmul.f32 %v1566, %v1572
        %v1574 = vadd.f32 %v1573, 0.18741608
        %v1575 = vmul.f32 %v1566, %v1574
        %v1576 = vadd.f32 %v1575, 1.1283791
        %v1577 = vmul.f32 %v799, %v1576
        %v1578 = vmul.f32 %v1566, 3.8918573e-05
        %v1579 = vadd.f32 %v1578, 0.001143296
        %v1580 = vmul.f32 %v1566, %v1579
        %v1581 = vadd.f32 %v1580, 0.014752088
        %v1582 = vmul.f32 %v1566, %v1581
        %v1583 = vadd.f32 %v1582, 0.112945676
        %v1584 = vmul.f32 %v1566, %v1583
        %v1585 = vadd.f32 %v1584, 0.4994258
        %v1586 = vmul.f32 %v1566, %v1585
        %v1587 = vadd.f32 %v1586, 1.0
        %v1588 = vrcp.pop %v1587
        %v1589 = vmul.f32 %v1587, %v1588
        %v1590 = vsub.f32 1.0, %v1589
        %v1591 = vmul.f32 %v1588, %v1590
        %v1592 = vadd.f32 %v1588, %v1591
        %vm1593 = vweird.f32 %v1587
        %vm1594 = vweird.f32 %v1588
        %vm1595 = vmor %vm1593, %vm1594
        %v1596 = vsel %vm1595, %v1588, %v1592
        %v1597 = vand.u32 2147483647, %v1587
        %vm1598 = vcmp.eq.f32.partialorder %v1597, 8.507059e+37
        %v1599 = vand.u32 %v1587, 2147483648
        %v1600 = vor.u32 1.1754944e-38, %v1599
        %v1601 = vsel %vm1598, %v1600, %v1596
        %v1602 = vmul.f32 %v1577, %v1601
        %v1603 = vmin.f32 %v1602, 1.0
        %v1604 = vmax.f32 %v1603, -1.0
        %v1605 = vmul.f32 %v800, %v800
        %v1606 = vmin.f32 16.0, %v1605
        %v1607 = vmul.f32 %v1606, 2.1237322e-06
        %v1608 = vadd.f32 %v1607, 0.00028619796
        %v1609 = vmul.f32 %v1606, %v1608
        %v1610 = vadd.f32 %v1609, 0.0036580483
        %v1611 = vmul.f32 %v1606, %v1610
        %v1612 = vadd.f32 %v1611, 0.05243302
        %v1613 = vmul.f32 %v1606, %v1612
        %v1614 = vadd.f32 %v1613, 0.18741608
        %v1615 = vmul.f32 %v1606, %v1614
        %v1616 = vadd.f32 %v1615, 1.1283791
        %v1617 = vmul.f32 %v800, %v1616
        %v1618 = vmul.f32 %v1606, 3.8918573e-05
        %v1619 = vadd.f32 %v1618, 0.001143296
        %v1620 = vmul.f32 %v1606, %v1619
        %v1621 = vadd.f32 %v1620, 0.014752088
        %v1622 = vmul.f32 %v1606, %v1621
        %v1623 = vadd.f32 %v1622, 0.112945676
        %v1624 = vmul.f32 %v1606, %v1623
        %v1625 = vadd.f32 %v1624, 0.4994258
        %v1626 = vmul.f32 %v1606, %v1625
        %v1627 = vadd.f32 %v1626, 1.0
        %v1628 = vrcp.pop %v1627
        %v1629 = vmul.f32 %v1627, %v1628
        %v1630 = vsub.f32 1.0, %v1629
        %v1631 = vmul.f32 %v1628, %v1630
        %v1632 = vadd.f32 %v1628, %v1631
        %vm1633 = vweird.f32 %v1627
        %vm1634 = vweird.f32 %v1628
        %vm1635 = vmor %vm1633, %vm1634
        %v1636 = vsel %vm1635, %v1628, %v1632
        %v1637 = vand.u32 2147483647, %v1627
        %vm1638 = vcmp.eq.f32.partialorder %v1637, 8.507059e+37
        %v1639 = vand.u32 %v1627, 2147483648
        %v1640 = vor.u32 1.1754944e-38, %v1639
        %v1641 = vsel %vm1638, %v1640, %v1636
        %v1642 = vmul.f32 %v1617, %v1641
        %v1643 = vmin.f32 %v1642, 1.0
        %v1644 = vmax.f32 %v1643, -1.0
        %v1645 = vmul.f32 %v801, %v801
        %v1646 = vmin.f32 16.0, %v1645
        %v1647 = vmul.f32 %v1646, 2.1237322e-06
        %v1648 = vadd.f32 %v1647, 0.00028619796
        %v1649 = vmul.f32 %v1646, %v1648
        %v1650 = vadd.f32 %v1649, 0.0036580483
        %v1651 = vmul.f32 %v1646, %v1650
        %v1652 = vadd.f32 %v1651, 0.05243302
        %v1653 = vmul.f32 %v1646, %v1652
        %v1654 = vadd.f32 %v1653, 0.18741608
        %v1655 = vmul.f32 %v1646, %v1654
        %v1656 = vadd.f32 %v1655, 1.1283791
        %v1657 = vmul.f32 %v801, %v1656
        %v1658 = vmul.f32 %v1646, 3.8918573e-05
        %v1659 = vadd.f32 %v1658, 0.001143296
        %v1660 = vmul.f32 %v1646, %v1659
        %v1661 = vadd.f32 %v1660, 0.014752088
        %v1662 = vmul.f32 %v1646, %v1661
        %v1663 = vadd.f32 %v1662, 0.112945676
        %v1664 = vmul.f32 %v1646, %v1663
        %v1665 = vadd.f32 %v1664, 0.4994258
        %v1666 = vmul.f32 %v1646, %v1665
        %v1667 = vadd.f32 %v1666, 1.0
        %v1668 = vrcp.pop %v1667
        %v1669 = vmul.f32 %v1667, %v1668
        %v1670 = vsub.f32 1.0, %v1669
        %v1671 = vmul.f32 %v1668, %v1670
        %v1672 = vadd.f32 %v1668, %v1671
        %vm1673 = vweird.f32 %v1667
        %vm1674 = vweird.f32 %v1668
        %vm1675 = vmor %vm1673, %vm1674
        %v1676 = vsel %vm1675, %v1668, %v1672
        %v1677 = vand.u32 2147483647, %v1667
        %vm1678 = vcmp.eq.f32.partialorder %v1677, 8.507059e+37
        %v1679 = vand.u32 %v1667, 2147483648
        %v1680 = vor.u32 1.1754944e-38, %v1679
        %v1681 = vsel %vm1678, %v1680, %v1676
        %v1682 = vmul.f32 %v1657, %v1681
        %v1683 = vmin.f32 %v1682, 1.0
        %v1684 = vmax.f32 %v1683, -1.0
        %v1685 = vmul.f32 %v802, %v802
        %v1686 = vmin.f32 16.0, %v1685
        %v1687 = vmul.f32 %v1686, 2.1237322e-06
        %v1688 = vadd.f32 %v1687, 0.00028619796
        %v1689 = vmul.f32 %v1686, %v1688
        %v1690 = vadd.f32 %v1689, 0.0036580483
        %v1691 = vmul.f32 %v1686, %v1690
        %v1692 = vadd.f32 %v1691, 0.05243302
        %v1693 = vmul.f32 %v1686, %v1692
        %v1694 = vadd.f32 %v1693, 0.18741608
        %v1695 = vmul.f32 %v1686, %v1694
        %v1696 = vadd.f32 %v1695, 1.1283791
        %v1697 = vmul.f32 %v802, %v1696
        %v1698 = vmul.f32 %v1686, 3.8918573e-05
        %v1699 = vadd.f32 %v1698, 0.001143296
        %v1700 = vmul.f32 %v1686, %v1699
        %v1701 = vadd.f32 %v1700, 0.014752088
        %v1702 = vmul.f32 %v1686, %v1701
        %v1703 = vadd.f32 %v1702, 0.112945676
        %v1704 = vmul.f32 %v1686, %v1703
        %v1705 = vadd.f32 %v1704, 0.4994258
        %v1706 = vmul.f32 %v1686, %v1705
        %v1707 = vadd.f32 %v1706, 1.0
        %v1708 = vrcp.pop %v1707
        %v1709 = vmul.f32 %v1707, %v1708
        %v1710 = vsub.f32 1.0, %v1709
        %v1711 = vmul.f32 %v1708, %v1710
        %v1712 = vadd.f32 %v1708, %v1711
        %vm1713 = vweird.f32 %v1707
        %vm1714 = vweird.f32 %v1708
        %vm1715 = vmor %vm1713, %vm1714
        %v1716 = vsel %vm1715, %v1708, %v1712
        %v1717 = vand.u32 2147483647, %v1707
        %vm1718 = vcmp.eq.f32.partialorder %v1717, 8.507059e+37
        %v1719 = vand.u32 %v1707, 2147483648
        %v1720 = vor.u32 1.1754944e-38, %v1719
        %v1721 = vsel %vm1718, %v1720, %v1716
        %v1722 = vmul.f32 %v1697, %v1721
        %v1723 = vmin.f32 %v1722, 1.0
        %v1724 = vmax.f32 %v1723, -1.0
        %v1725 = vmul.f32 %v803, %v803
        %v1726 = vmin.f32 16.0, %v1725
        %v1727 = vmul.f32 %v1726, 2.1237322e-06
        %v1728 = vadd.f32 %v1727, 0.00028619796
        %v1729 = vmul.f32 %v1726, %v1728
        %v1730 = vadd.f32 %v1729, 0.0036580483
        %v1731 = vmul.f32 %v1726, %v1730
        %v1732 = vadd.f32 %v1731, 0.05243302
        %v1733 = vmul.f32 %v1726, %v1732
        %v1734 = vadd.f32 %v1733, 0.18741608
        %v1735 = vmul.f32 %v1726, %v1734
        %v1736 = vadd.f32 %v1735, 1.1283791
        %v1737 = vmul.f32 %v803, %v1736
        %v1738 = vmul.f32 %v1726, 3.8918573e-05
        %v1739 = vadd.f32 %v1738, 0.001143296
        %v1740 = vmul.f32 %v1726, %v1739
        %v1741 = vadd.f32 %v1740, 0.014752088
        %v1742 = vmul.f32 %v1726, %v1741
        %v1743 = vadd.f32 %v1742, 0.112945676
        %v1744 = vmul.f32 %v1726, %v1743
        %v1745 = vadd.f32 %v1744, 0.4994258
        %v1746 = vmul.f32 %v1726, %v1745
        %v1747 = vadd.f32 %v1746, 1.0
        %v1748 = vrcp.pop %v1747
        %v1749 = vmul.f32 %v1747, %v1748
        %v1750 = vsub.f32 1.0, %v1749
        %v1751 = vmul.f32 %v1748, %v1750
        %v1752 = vadd.f32 %v1748, %v1751
        %vm1753 = vweird.f32 %v1747
        %vm1754 = vweird.f32 %v1748
        %vm1755 = vmor %vm1753, %vm1754
        %v1756 = vsel %vm1755, %v1748, %v1752
        %v1757 = vand.u32 2147483647, %v1747
        %vm1758 = vcmp.eq.f32.partialorder %v1757, 8.507059e+37
        %v1759 = vand.u32 %v1747, 2147483648
        %v1760 = vor.u32 1.1754944e-38, %v1759
        %v1761 = vsel %vm1758, %v1760, %v1756
        %v1762 = vmul.f32 %v1737, %v1761
        %v1763 = vmin.f32 %v1762, 1.0
        %v1764 = vmax.f32 %v1763, -1.0
        %v1765 = vmul.f32 %v804, %v804
        %v1766 = vmin.f32 16.0, %v1765
        %v1767 = vmul.f32 %v1766, 2.1237322e-06
        %v1768 = vadd.f32 %v1767, 0.00028619796
        %v1769 = vmul.f32 %v1766, %v1768
        %v1770 = vadd.f32 %v1769, 0.0036580483
        %v1771 = vmul.f32 %v1766, %v1770
        %v1772 = vadd.f32 %v1771, 0.05243302
        %v1773 = vmul.f32 %v1766, %v1772
        %v1774 = vadd.f32 %v1773, 0.18741608
        %v1775 = vmul.f32 %v1766, %v1774
        %v1776 = vadd.f32 %v1775, 1.1283791
        %v1777 = vmul.f32 %v804, %v1776
        %v1778 = vmul.f32 %v1766, 3.8918573e-05
        %v1779 = vadd.f32 %v1778, 0.001143296
        %v1780 = vmul.f32 %v1766, %v1779
        %v1781 = vadd.f32 %v1780, 0.014752088
        %v1782 = vmul.f32 %v1766, %v1781
        %v1783 = vadd.f32 %v1782, 0.112945676
        %v1784 = vmul.f32 %v1766, %v1783
        %v1785 = vadd.f32 %v1784, 0.4994258
        %v1786 = vmul.f32 %v1766, %v1785
        %v1787 = vadd.f32 %v1786, 1.0
        %v1788 = vrcp.pop %v1787
        %v1789 = vmul.f32 %v1787, %v1788
        %v1790 = vsub.f32 1.0, %v1789
        %v1791 = vmul.f32 %v1788, %v1790
        %v1792 = vadd.f32 %v1788, %v1791
        %vm1793 = vweird.f32 %v1787
        %vm1794 = vweird.f32 %v1788
        %vm1795 = vmor %vm1793, %vm1794
        %v1796 = vsel %vm1795, %v1788, %v1792
        %v1797 = vand.u32 2147483647, %v1787
        %vm1798 = vcmp.eq.f32.partialorder %v1797, 8.507059e+37
        %v1799 = vand.u32 %v1787, 2147483648
        %v1800 = vor.u32 1.1754944e-38, %v1799
        %v1801 = vsel %vm1798, %v1800, %v1796
        %v1802 = vmul.f32 %v1777, %v1801
        %v1803 = vmin.f32 %v1802, 1.0
        %v1804 = vmax.f32 %v1803, -1.0
        %v1805 = vmul.f32 %v805, %v805
        %v1806 = vmin.f32 16.0, %v1805
        %v1807 = vmul.f32 %v1806, 2.1237322e-06
        %v1808 = vadd.f32 %v1807, 0.00028619796
        %v1809 = vmul.f32 %v1806, %v1808
        %v1810 = vadd.f32 %v1809, 0.0036580483
        %v1811 = vmul.f32 %v1806, %v1810
        %v1812 = vadd.f32 %v1811, 0.05243302
        %v1813 = vmul.f32 %v1806, %v1812
        %v1814 = vadd.f32 %v1813, 0.18741608
        %v1815 = vmul.f32 %v1806, %v1814
        %v1816 = vadd.f32 %v1815, 1.1283791
        %v1817 = vmul.f32 %v805, %v1816
        %v1818 = vmul.f32 %v1806, 3.8918573e-05
        %v1819 = vadd.f32 %v1818, 0.001143296
        %v1820 = vmul.f32 %v1806, %v1819
        %v1821 = vadd.f32 %v1820, 0.014752088
        %v1822 = vmul.f32 %v1806, %v1821
        %v1823 = vadd.f32 %v1822, 0.112945676
        %v1824 = vmul.f32 %v1806, %v1823
        %v1825 = vadd.f32 %v1824, 0.4994258
        %v1826 = vmul.f32 %v1806, %v1825
        %v1827 = vadd.f32 %v1826, 1.0
        %v1828 = vrcp.pop %v1827
        %v1829 = vmul.f32 %v1827, %v1828
        %v1830 = vsub.f32 1.0, %v1829
        %v1831 = vmul.f32 %v1828, %v1830
        %v1832 = vadd.f32 %v1828, %v1831
        %vm1833 = vweird.f32 %v1827
        %vm1834 = vweird.f32 %v1828
        %vm1835 = vmor %vm1833, %vm1834
        %v1836 = vsel %vm1835, %v1828, %v1832
        %v1837 = vand.u32 2147483647, %v1827
        %vm1838 = vcmp.eq.f32.partialorder %v1837, 8.507059e+37
        %v1839 = vand.u32 %v1827, 2147483648
        %v1840 = vor.u32 1.1754944e-38, %v1839
        %v1841 = vsel %vm1838, %v1840, %v1836
        %v1842 = vmul.f32 %v1817, %v1841
        %v1843 = vmin.f32 %v1842, 1.0
        %v1844 = vmax.f32 %v1843, -1.0
        %v1845 = vmul.f32 %v806, %v806
        %v1846 = vmin.f32 16.0, %v1845
        %v1847 = vmul.f32 %v1846, 2.1237322e-06
        %v1848 = vadd.f32 %v1847, 0.00028619796
        %v1849 = vmul.f32 %v1846, %v1848
        %v1850 = vadd.f32 %v1849, 0.0036580483
        %v1851 = vmul.f32 %v1846, %v1850
        %v1852 = vadd.f32 %v1851, 0.05243302
        %v1853 = vmul.f32 %v1846, %v1852
        %v1854 = vadd.f32 %v1853, 0.18741608
        %v1855 = vmul.f32 %v1846, %v1854
        %v1856 = vadd.f32 %v1855, 1.1283791
        %v1857 = vmul.f32 %v806, %v1856
        %v1858 = vmul.f32 %v1846, 3.8918573e-05
        %v1859 = vadd.f32 %v1858, 0.001143296
        %v1860 = vmul.f32 %v1846, %v1859
        %v1861 = vadd.f32 %v1860, 0.014752088
        %v1862 = vmul.f32 %v1846, %v1861
        %v1863 = vadd.f32 %v1862, 0.112945676
        %v1864 = vmul.f32 %v1846, %v1863
        %v1865 = vadd.f32 %v1864, 0.4994258
        %v1866 = vmul.f32 %v1846, %v1865
        %v1867 = vadd.f32 %v1866, 1.0
        %v1868 = vrcp.pop %v1867
        %v1869 = vmul.f32 %v1867, %v1868
        %v1870 = vsub.f32 1.0, %v1869
        %v1871 = vmul.f32 %v1868, %v1870
        %v1872 = vadd.f32 %v1868, %v1871
        %vm1873 = vweird.f32 %v1867
        %vm1874 = vweird.f32 %v1868
        %vm1875 = vmor %vm1873, %vm1874
        %v1876 = vsel %vm1875, %v1868, %v1872
        %v1877 = vand.u32 2147483647, %v1867
        %vm1878 = vcmp.eq.f32.partialorder %v1877, 8.507059e+37
        %v1879 = vand.u32 %v1867, 2147483648
        %v1880 = vor.u32 1.1754944e-38, %v1879
        %v1881 = vsel %vm1878, %v1880, %v1876
        %v1882 = vmul.f32 %v1857, %v1881
        %v1883 = vmin.f32 %v1882, 1.0
        %v1884 = vmax.f32 %v1883, -1.0
        %v1885 = vmul.f32 %v807, %v807
        %v1886 = vmin.f32 16.0, %v1885
        %v1887 = vmul.f32 %v1886, 2.1237322e-06
        %v1888 = vadd.f32 %v1887, 0.00028619796
        %v1889 = vmul.f32 %v1886, %v1888
        %v1890 = vadd.f32 %v1889, 0.0036580483
        %v1891 = vmul.f32 %v1886, %v1890
        %v1892 = vadd.f32 %v1891, 0.05243302
        %v1893 = vmul.f32 %v1886, %v1892
        %v1894 = vadd.f32 %v1893, 0.18741608
        %v1895 = vmul.f32 %v1886, %v1894
        %v1896 = vadd.f32 %v1895, 1.1283791
        %v1897 = vmul.f32 %v807, %v1896
        %v1898 = vmul.f32 %v1886, 3.8918573e-05
        %v1899 = vadd.f32 %v1898, 0.001143296
        %v1900 = vmul.f32 %v1886, %v1899
        %v1901 = vadd.f32 %v1900, 0.014752088
        %v1902 = vmul.f32 %v1886, %v1901
        %v1903 = vadd.f32 %v1902, 0.112945676
        %v1904 = vmul.f32 %v1886, %v1903
        %v1905 = vadd.f32 %v1904, 0.4994258
        %v1906 = vmul.f32 %v1886, %v1905
        %v1907 = vadd.f32 %v1906, 1.0
        %v1908 = vrcp.pop %v1907
        %v1909 = vmul.f32 %v1907, %v1908
        %v1910 = vsub.f32 1.0, %v1909
        %v1911 = vmul.f32 %v1908, %v1910
        %v1912 = vadd.f32 %v1908, %v1911
        %vm1913 = vweird.f32 %v1907
        %vm1914 = vweird.f32 %v1908
        %vm1915 = vmor %vm1913, %vm1914
        %v1916 = vsel %vm1915, %v1908, %v1912
        %v1917 = vand.u32 2147483647, %v1907
        %vm1918 = vcmp.eq.f32.partialorder %v1917, 8.507059e+37
        %v1919 = vand.u32 %v1907, 2147483648
        %v1920 = vor.u32 1.1754944e-38, %v1919
        %v1921 = vsel %vm1918, %v1920, %v1916
        %v1922 = vmul.f32 %v1897, %v1921
        %v1923 = vmin.f32 %v1922, 1.0
        %v1924 = vmax.f32 %v1923, -1.0
        %v1925 = vmul.f32 %v808, %v808
        %v1926 = vmin.f32 16.0, %v1925
        %v1927 = vmul.f32 %v1926, 2.1237322e-06
        %v1928 = vadd.f32 %v1927, 0.00028619796
        %v1929 = vmul.f32 %v1926, %v1928
        %v1930 = vadd.f32 %v1929, 0.0036580483
        %v1931 = vmul.f32 %v1926, %v1930
        %v1932 = vadd.f32 %v1931, 0.05243302
        %v1933 = vmul.f32 %v1926, %v1932
        %v1934 = vadd.f32 %v1933, 0.18741608
        %v1935 = vmul.f32 %v1926, %v1934
        %v1936 = vadd.f32 %v1935, 1.1283791
        %v1937 = vmul.f32 %v808, %v1936
        %v1938 = vmul.f32 %v1926, 3.8918573e-05
        %v1939 = vadd.f32 %v1938, 0.001143296
        %v1940 = vmul.f32 %v1926, %v1939
        %v1941 = vadd.f32 %v1940, 0.014752088
        %v1942 = vmul.f32 %v1926, %v1941
        %v1943 = vadd.f32 %v1942, 0.112945676
        %v1944 = vmul.f32 %v1926, %v1943
        %v1945 = vadd.f32 %v1944, 0.4994258
        %v1946 = vmul.f32 %v1926, %v1945
        %v1947 = vadd.f32 %v1946, 1.0
        %v1948 = vrcp.pop %v1947
        %v1949 = vmul.f32 %v1947, %v1948
        %v1950 = vsub.f32 1.0, %v1949
        %v1951 = vmul.f32 %v1948, %v1950
        %v1952 = vadd.f32 %v1948, %v1951
        %vm1953 = vweird.f32 %v1947
        %vm1954 = vweird.f32 %v1948
        %vm1955 = vmor %vm1953, %vm1954
        %v1956 = vsel %vm1955, %v1948, %v1952
        %v1957 = vand.u32 2147483647, %v1947
        %vm1958 = vcmp.eq.f32.partialorder %v1957, 8.507059e+37
        %v1959 = vand.u32 %v1947, 2147483648
        %v1960 = vor.u32 1.1754944e-38, %v1959
        %v1961 = vsel %vm1958, %v1960, %v1956
        %v1962 = vmul.f32 %v1937, %v1961
        %v1963 = vmin.f32 %v1962, 1.0
        %v1964 = vmax.f32 %v1963, -1.0
        %v1965 = vmul.f32 %v809, %v809
        %v1966 = vmin.f32 16.0, %v1965
        %v1967 = vmul.f32 %v1966, 2.1237322e-06
        %v1968 = vadd.f32 %v1967, 0.00028619796
        %v1969 = vmul.f32 %v1966, %v1968
        %v1970 = vadd.f32 %v1969, 0.0036580483
        %v1971 = vmul.f32 %v1966, %v1970
        %v1972 = vadd.f32 %v1971, 0.05243302
        %v1973 = vmul.f32 %v1966, %v1972
        %v1974 = vadd.f32 %v1973, 0.18741608
        %v1975 = vmul.f32 %v1966, %v1974
        %v1976 = vadd.f32 %v1975, 1.1283791
        %v1977 = vmul.f32 %v809, %v1976
        %v1978 = vmul.f32 %v1966, 3.8918573e-05
        %v1979 = vadd.f32 %v1978, 0.001143296
        %v1980 = vmul.f32 %v1966, %v1979
        %v1981 = vadd.f32 %v1980, 0.014752088
        %v1982 = vmul.f32 %v1966, %v1981
        %v1983 = vadd.f32 %v1982, 0.112945676
        %v1984 = vmul.f32 %v1966, %v1983
        %v1985 = vadd.f32 %v1984, 0.4994258
        %v1986 = vmul.f32 %v1966, %v1985
        %v1987 = vadd.f32 %v1986, 1.0
        %v1988 = vrcp.pop %v1987
        %v1989 = vmul.f32 %v1987, %v1988
        %v1990 = vsub.f32 1.0, %v1989
        %v1991 = vmul.f32 %v1988, %v1990
        %v1992 = vadd.f32 %v1988, %v1991
        %vm1993 = vweird.f32 %v1987
        %vm1994 = vweird.f32 %v1988
        %vm1995 = vmor %vm1993, %vm1994
        %v1996 = vsel %vm1995, %v1988, %v1992
        %v1997 = vand.u32 2147483647, %v1987
        %vm1998 = vcmp.eq.f32.partialorder %v1997, 8.507059e+37
        %v1999 = vand.u32 %v1987, 2147483648
        %v2000 = vor.u32 1.1754944e-38, %v1999
        %v2001 = vsel %vm1998, %v2000, %v1996
        %v2002 = vmul.f32 %v1977, %v2001
        %v2003 = vmin.f32 %v2002, 1.0
        %v2004 = vmax.f32 %v2003, -1.0
        %v2005 = vmul.f32 %v810, %v810
        %v2006 = vmin.f32 16.0, %v2005
        %v2007 = vmul.f32 %v2006, 2.1237322e-06
        %v2008 = vadd.f32 %v2007, 0.00028619796
        %v2009 = vmul.f32 %v2006, %v2008
        %v2010 = vadd.f32 %v2009, 0.0036580483
        %v2011 = vmul.f32 %v2006, %v2010
        %v2012 = vadd.f32 %v2011, 0.05243302
        %v2013 = vmul.f32 %v2006, %v2012
        %v2014 = vadd.f32 %v2013, 0.18741608
        %v2015 = vmul.f32 %v2006, %v2014
        %v2016 = vadd.f32 %v2015, 1.1283791
        %v2017 = vmul.f32 %v810, %v2016
        %v2018 = vmul.f32 %v2006, 3.8918573e-05
        %v2019 = vadd.f32 %v2018, 0.001143296
        %v2020 = vmul.f32 %v2006, %v2019
        %v2021 = vadd.f32 %v2020, 0.014752088
        %v2022 = vmul.f32 %v2006, %v2021
        %v2023 = vadd.f32 %v2022, 0.112945676
        %v2024 = vmul.f32 %v2006, %v2023
        %v2025 = vadd.f32 %v2024, 0.4994258
        %v2026 = vmul.f32 %v2006, %v2025
        %v2027 = vadd.f32 %v2026, 1.0
        %v2028 = vrcp.pop %v2027
        %v2029 = vmul.f32 %v2027, %v2028
        %v2030 = vsub.f32 1.0, %v2029
        %v2031 = vmul.f32 %v2028, %v2030
        %v2032 = vadd.f32 %v2028, %v2031
        %vm2033 = vweird.f32 %v2027
        %vm2034 = vweird.f32 %v2028
        %vm2035 = vmor %vm2033, %vm2034
        %v2036 = vsel %vm2035, %v2028, %v2032
        %v2037 = vand.u32 2147483647, %v2027
        %vm2038 = vcmp.eq.f32.partialorder %v2037, 8.507059e+37
        %v2039 = vand.u32 %v2027, 2147483648
        %v2040 = vor.u32 1.1754944e-38, %v2039
        %v2041 = vsel %vm2038, %v2040, %v2036
        %v2042 = vmul.f32 %v2017, %v2041
        %v2043 = vmin.f32 %v2042, 1.0
        %v2044 = vmax.f32 %v2043, -1.0
        %v2045 = vmul.f32 %v811, %v811
        %v2046 = vmin.f32 16.0, %v2045
        %v2047 = vmul.f32 %v2046, 2.1237322e-06
        %v2048 = vadd.f32 %v2047, 0.00028619796
        %v2049 = vmul.f32 %v2046, %v2048
        %v2050 = vadd.f32 %v2049, 0.0036580483
        %v2051 = vmul.f32 %v2046, %v2050
        %v2052 = vadd.f32 %v2051, 0.05243302
        %v2053 = vmul.f32 %v2046, %v2052
        %v2054 = vadd.f32 %v2053, 0.18741608
        %v2055 = vmul.f32 %v2046, %v2054
        %v2056 = vadd.f32 %v2055, 1.1283791
        %v2057 = vmul.f32 %v811, %v2056
        %v2058 = vmul.f32 %v2046, 3.8918573e-05
        %v2059 = vadd.f32 %v2058, 0.001143296
        %v2060 = vmul.f32 %v2046, %v2059
        %v2061 = vadd.f32 %v2060, 0.014752088
        %v2062 = vmul.f32 %v2046, %v2061
        %v2063 = vadd.f32 %v2062, 0.112945676
        %v2064 = vmul.f32 %v2046, %v2063
        %v2065 = vadd.f32 %v2064, 0.4994258
        %v2066 = vmul.f32 %v2046, %v2065
        %v2067 = vadd.f32 %v2066, 1.0
        %v2068 = vrcp.pop %v2067
        %v2069 = vmul.f32 %v2067, %v2068
        %v2070 = vsub.f32 1.0, %v2069
        %v2071 = vmul.f32 %v2068, %v2070
        %v2072 = vadd.f32 %v2068, %v2071
        %vm2073 = vweird.f32 %v2067
        %vm2074 = vweird.f32 %v2068
        %vm2075 = vmor %vm2073, %vm2074
        %v2076 = vsel %vm2075, %v2068, %v2072
        %v2077 = vand.u32 2147483647, %v2067
        %vm2078 = vcmp.eq.f32.partialorder %v2077, 8.507059e+37
        %v2079 = vand.u32 %v2067, 2147483648
        %v2080 = vor.u32 1.1754944e-38, %v2079
        %v2081 = vsel %vm2078, %v2080, %v2076
        %v2082 = vmul.f32 %v2057, %v2081
        %v2083 = vmin.f32 %v2082, 1.0
        %v2084 = vmax.f32 %v2083, -1.0
        %v2085 = vmul.f32 %v812, %v812
        %v2086 = vmin.f32 16.0, %v2085
        %v2087 = vmul.f32 %v2086, 2.1237322e-06
        %v2088 = vadd.f32 %v2087, 0.00028619796
        %v2089 = vmul.f32 %v2086, %v2088
        %v2090 = vadd.f32 %v2089, 0.0036580483
        %v2091 = vmul.f32 %v2086, %v2090
        %v2092 = vadd.f32 %v2091, 0.05243302
        %v2093 = vmul.f32 %v2086, %v2092
        %v2094 = vadd.f32 %v2093, 0.18741608
        %v2095 = vmul.f32 %v2086, %v2094
        %v2096 = vadd.f32 %v2095, 1.1283791
        %v2097 = vmul.f32 %v812, %v2096
        %v2098 = vmul.f32 %v2086, 3.8918573e-05
        %v2099 = vadd.f32 %v2098, 0.001143296
        %v2100 = vmul.f32 %v2086, %v2099
        %v2101 = vadd.f32 %v2100, 0.014752088
        %v2102 = vmul.f32 %v2086, %v2101
        %v2103 = vadd.f32 %v2102, 0.112945676
        %v2104 = vmul.f32 %v2086, %v2103
        %v2105 = vadd.f32 %v2104, 0.4994258
        %v2106 = vmul.f32 %v2086, %v2105
        %v2107 = vadd.f32 %v2106, 1.0
        %v2108 = vrcp.pop %v2107
        %v2109 = vmul.f32 %v2107, %v2108
        %v2110 = vsub.f32 1.0, %v2109
        %v2111 = vmul.f32 %v2108, %v2110
        %v2112 = vadd.f32 %v2108, %v2111
        %vm2113 = vweird.f32 %v2107
        %vm2114 = vweird.f32 %v2108
        %vm2115 = vmor %vm2113, %vm2114
        %v2116 = vsel %vm2115, %v2108, %v2112
        %v2117 = vand.u32 2147483647, %v2107
        %vm2118 = vcmp.eq.f32.partialorder %v2117, 8.507059e+37
        %v2119 = vand.u32 %v2107, 2147483648
        %v2120 = vor.u32 1.1754944e-38, %v2119
        %v2121 = vsel %vm2118, %v2120, %v2116
        %v2122 = vmul.f32 %v2097, %v2121
        %v2123 = vmin.f32 %v2122, 1.0
        %v2124 = vmax.f32 %v2123, -1.0
        %v2125 = vmul.f32 %v813, %v813
        %v2126 = vmin.f32 16.0, %v2125
        %v2127 = vmul.f32 %v2126, 2.1237322e-06
        %v2128 = vadd.f32 %v2127, 0.00028619796
        %v2129 = vmul.f32 %v2126, %v2128
        %v2130 = vadd.f32 %v2129, 0.0036580483
        %v2131 = vmul.f32 %v2126, %v2130
        %v2132 = vadd.f32 %v2131, 0.05243302
        %v2133 = vmul.f32 %v2126, %v2132
        %v2134 = vadd.f32 %v2133, 0.18741608
        %v2135 = vmul.f32 %v2126, %v2134
        %v2136 = vadd.f32 %v2135, 1.1283791
        %v2137 = vmul.f32 %v813, %v2136
        %v2138 = vmul.f32 %v2126, 3.8918573e-05
        %v2139 = vadd.f32 %v2138, 0.001143296
        %v2140 = vmul.f32 %v2126, %v2139
        %v2141 = vadd.f32 %v2140, 0.014752088
        %v2142 = vmul.f32 %v2126, %v2141
        %v2143 = vadd.f32 %v2142, 0.112945676
        %v2144 = vmul.f32 %v2126, %v2143
        %v2145 = vadd.f32 %v2144, 0.4994258
        %v2146 = vmul.f32 %v2126, %v2145
        %v2147 = vadd.f32 %v2146, 1.0
        %v2148 = vrcp.pop %v2147
        %v2149 = vmul.f32 %v2147, %v2148
        %v2150 = vsub.f32 1.0, %v2149
        %v2151 = vmul.f32 %v2148, %v2150
        %v2152 = vadd.f32 %v2148, %v2151
        %vm2153 = vweird.f32 %v2147
        %vm2154 = vweird.f32 %v2148
        %vm2155 = vmor %vm2153, %vm2154
        %v2156 = vsel %vm2155, %v2148, %v2152
        %v2157 = vand.u32 2147483647, %v2147
        %vm2158 = vcmp.eq.f32.partialorder %v2157, 8.507059e+37
        %v2159 = vand.u32 %v2147, 2147483648
        %v2160 = vor.u32 1.1754944e-38, %v2159
        %v2161 = vsel %vm2158, %v2160, %v2156
        %v2162 = vmul.f32 %v2137, %v2161
        %v2163 = vmin.f32 %v2162, 1.0
        %v2164 = vmax.f32 %v2163, -1.0
        %v2165 = vmul.f32 %v814, %v814
        %v2166 = vmin.f32 16.0, %v2165
        %v2167 = vmul.f32 %v2166, 2.1237322e-06
        %v2168 = vadd.f32 %v2167, 0.00028619796
        %v2169 = vmul.f32 %v2166, %v2168
        %v2170 = vadd.f32 %v2169, 0.0036580483
        %v2171 = vmul.f32 %v2166, %v2170
        %v2172 = vadd.f32 %v2171, 0.05243302
        %v2173 = vmul.f32 %v2166, %v2172
        %v2174 = vadd.f32 %v2173, 0.18741608
        %v2175 = vmul.f32 %v2166, %v2174
        %v2176 = vadd.f32 %v2175, 1.1283791
        %v2177 = vmul.f32 %v814, %v2176
        %v2178 = vmul.f32 %v2166, 3.8918573e-05
        %v2179 = vadd.f32 %v2178, 0.001143296
        %v2180 = vmul.f32 %v2166, %v2179
        %v2181 = vadd.f32 %v2180, 0.014752088
        %v2182 = vmul.f32 %v2166, %v2181
        %v2183 = vadd.f32 %v2182, 0.112945676
        %v2184 = vmul.f32 %v2166, %v2183
        %v2185 = vadd.f32 %v2184, 0.4994258
        %v2186 = vmul.f32 %v2166, %v2185
        %v2187 = vadd.f32 %v2186, 1.0
        %v2188 = vrcp.pop %v2187
        %v2189 = vmul.f32 %v2187, %v2188
        %v2190 = vsub.f32 1.0, %v2189
        %v2191 = vmul.f32 %v2188, %v2190
        %v2192 = vadd.f32 %v2188, %v2191
        %vm2193 = vweird.f32 %v2187
        %vm2194 = vweird.f32 %v2188
        %vm2195 = vmor %vm2193, %vm2194
        %v2196 = vsel %vm2195, %v2188, %v2192
        %v2197 = vand.u32 2147483647, %v2187
        %vm2198 = vcmp.eq.f32.partialorder %v2197, 8.507059e+37
        %v2199 = vand.u32 %v2187, 2147483648
        %v2200 = vor.u32 1.1754944e-38, %v2199
        %v2201 = vsel %vm2198, %v2200, %v2196
        %v2202 = vmul.f32 %v2177, %v2201
        %v2203 = vmin.f32 %v2202, 1.0
        %v2204 = vmax.f32 %v2203, -1.0
        %v2205 = vmul.f32 %v815, %v815
        %v2206 = vmin.f32 16.0, %v2205
        %v2207 = vmul.f32 %v2206, 2.1237322e-06
        %v2208 = vadd.f32 %v2207, 0.00028619796
        %v2209 = vmul.f32 %v2206, %v2208
        %v2210 = vadd.f32 %v2209, 0.0036580483
        %v2211 = vmul.f32 %v2206, %v2210
        %v2212 = vadd.f32 %v2211, 0.05243302
        %v2213 = vmul.f32 %v2206, %v2212
        %v2214 = vadd.f32 %v2213, 0.18741608
        %v2215 = vmul.f32 %v2206, %v2214
        %v2216 = vadd.f32 %v2215, 1.1283791
        %v2217 = vmul.f32 %v815, %v2216
        %v2218 = vmul.f32 %v2206, 3.8918573e-05
        %v2219 = vadd.f32 %v2218, 0.001143296
        %v2220 = vmul.f32 %v2206, %v2219
        %v2221 = vadd.f32 %v2220, 0.014752088
        %v2222 = vmul.f32 %v2206, %v2221
        %v2223 = vadd.f32 %v2222, 0.112945676
        %v2224 = vmul.f32 %v2206, %v2223
        %v2225 = vadd.f32 %v2224, 0.4994258
        %v2226 = vmul.f32 %v2206, %v2225
        %v2227 = vadd.f32 %v2226, 1.0
        %v2228 = vrcp.pop %v2227
        %v2229 = vmul.f32 %v2227, %v2228
        %v2230 = vsub.f32 1.0, %v2229
        %v2231 = vmul.f32 %v2228, %v2230
        %v2232 = vadd.f32 %v2228, %v2231
        %vm2233 = vweird.f32 %v2227
        %vm2234 = vweird.f32 %v2228
        %vm2235 = vmor %vm2233, %vm2234
        %v2236 = vsel %vm2235, %v2228, %v2232
        %v2237 = vand.u32 2147483647, %v2227
        %vm2238 = vcmp.eq.f32.partialorder %v2237, 8.507059e+37
        %v2239 = vand.u32 %v2227, 2147483648
        %v2240 = vor.u32 1.1754944e-38, %v2239
        %v2241 = vsel %vm2238, %v2240, %v2236
        %v2242 = vmul.f32 %v2217, %v2241
        %v2243 = vmin.f32 %v2242, 1.0
        %v2244 = vmax.f32 %v2243, -1.0
        %v2245 = vmul.f32 %v816, %v816
        %v2246 = vmin.f32 16.0, %v2245
        %v2247 = vmul.f32 %v2246, 2.1237322e-06
        %v2248 = vadd.f32 %v2247, 0.00028619796
        %v2249 = vmul.f32 %v2246, %v2248
        %v2250 = vadd.f32 %v2249, 0.0036580483
        %v2251 = vmul.f32 %v2246, %v2250
        %v2252 = vadd.f32 %v2251, 0.05243302
        %v2253 = vmul.f32 %v2246, %v2252
        %v2254 = vadd.f32 %v2253, 0.18741608
        %v2255 = vmul.f32 %v2246, %v2254
        %v2256 = vadd.f32 %v2255, 1.1283791
        %v2257 = vmul.f32 %v816, %v2256
        %v2258 = vmul.f32 %v2246, 3.8918573e-05
        %v2259 = vadd.f32 %v2258, 0.001143296
        %v2260 = vmul.f32 %v2246, %v2259
        %v2261 = vadd.f32 %v2260, 0.014752088
        %v2262 = vmul.f32 %v2246, %v2261
        %v2263 = vadd.f32 %v2262, 0.112945676
        %v2264 = vmul.f32 %v2246, %v2263
        %v2265 = vadd.f32 %v2264, 0.4994258
        %v2266 = vmul.f32 %v2246, %v2265
        %v2267 = vadd.f32 %v2266, 1.0
        %v2268 = vrcp.pop %v2267
        %v2269 = vmul.f32 %v2267, %v2268
        %v2270 = vsub.f32 1.0, %v2269
        %v2271 = vmul.f32 %v2268, %v2270
        %v2272 = vadd.f32 %v2268, %v2271
        %vm2273 = vweird.f32 %v2267
        %vm2274 = vweird.f32 %v2268
        %vm2275 = vmor %vm2273, %vm2274
        %v2276 = vsel %vm2275, %v2268, %v2272
        %v2277 = vand.u32 2147483647, %v2267
        %vm2278 = vcmp.eq.f32.partialorder %v2277, 8.507059e+37
        %v2279 = vand.u32 %v2267, 2147483648
        %v2280 = vor.u32 1.1754944e-38, %v2279
        %v2281 = vsel %vm2278, %v2280, %v2276
        %v2282 = vmul.f32 %v2257, %v2281
        %v2283 = vmin.f32 %v2282, 1.0
        %v2284 = vmax.f32 %v2283, -1.0
        %v2285 = vmul.f32 %v817, %v817
        %v2286 = vmin.f32 16.0, %v2285
        %v2287 = vmul.f32 %v2286, 2.1237322e-06
        %v2288 = vadd.f32 %v2287, 0.00028619796
        %v2289 = vmul.f32 %v2286, %v2288
        %v2290 = vadd.f32 %v2289, 0.0036580483
        %v2291 = vmul.f32 %v2286, %v2290
        %v2292 = vadd.f32 %v2291, 0.05243302
        %v2293 = vmul.f32 %v2286, %v2292
        %v2294 = vadd.f32 %v2293, 0.18741608
        %v2295 = vmul.f32 %v2286, %v2294
        %v2296 = vadd.f32 %v2295, 1.1283791
        %v2297 = vmul.f32 %v817, %v2296
        %v2298 = vmul.f32 %v2286, 3.8918573e-05
        %v2299 = vadd.f32 %v2298, 0.001143296
        %v2300 = vmul.f32 %v2286, %v2299
        %v2301 = vadd.f32 %v2300, 0.014752088
        %v2302 = vmul.f32 %v2286, %v2301
        %v2303 = vadd.f32 %v2302, 0.112945676
        %v2304 = vmul.f32 %v2286, %v2303
        %v2305 = vadd.f32 %v2304, 0.4994258
        %v2306 = vmul.f32 %v2286, %v2305
        %v2307 = vadd.f32 %v2306, 1.0
        %v2308 = vrcp.pop %v2307
        %v2309 = vmul.f32 %v2307, %v2308
        %v2310 = vsub.f32 1.0, %v2309
        %v2311 = vmul.f32 %v2308, %v2310
        %v2312 = vadd.f32 %v2308, %v2311
        %vm2313 = vweird.f32 %v2307
        %vm2314 = vweird.f32 %v2308
        %vm2315 = vmor %vm2313, %vm2314
        %v2316 = vsel %vm2315, %v2308, %v2312
        %v2317 = vand.u32 2147483647, %v2307
        %vm2318 = vcmp.eq.f32.partialorder %v2317, 8.507059e+37
        %v2319 = vand.u32 %v2307, 2147483648
        %v2320 = vor.u32 1.1754944e-38, %v2319
        %v2321 = vsel %vm2318, %v2320, %v2316
        %v2322 = vmul.f32 %v2297, %v2321
        %v2323 = vmin.f32 %v2322, 1.0
        %v2324 = vmax.f32 %v2323, -1.0
        %v2325 = vmul.f32 %v818, %v818
        %v2326 = vmin.f32 16.0, %v2325
        %v2327 = vmul.f32 %v2326, 2.1237322e-06
        %v2328 = vadd.f32 %v2327, 0.00028619796
        %v2329 = vmul.f32 %v2326, %v2328
        %v2330 = vadd.f32 %v2329, 0.0036580483
        %v2331 = vmul.f32 %v2326, %v2330
        %v2332 = vadd.f32 %v2331, 0.05243302
        %v2333 = vmul.f32 %v2326, %v2332
        %v2334 = vadd.f32 %v2333, 0.18741608
        %v2335 = vmul.f32 %v2326, %v2334
        %v2336 = vadd.f32 %v2335, 1.1283791
        %v2337 = vmul.f32 %v818, %v2336
        %v2338 = vmul.f32 %v2326, 3.8918573e-05
        %v2339 = vadd.f32 %v2338, 0.001143296
        %v2340 = vmul.f32 %v2326, %v2339
        %v2341 = vadd.f32 %v2340, 0.014752088
        %v2342 = vmul.f32 %v2326, %v2341
        %v2343 = vadd.f32 %v2342, 0.112945676
        %v2344 = vmul.f32 %v2326, %v2343
        %v2345 = vadd.f32 %v2344, 0.4994258
        %v2346 = vmul.f32 %v2326, %v2345
        %v2347 = vadd.f32 %v2346, 1.0
        %v2348 = vrcp.pop %v2347
        %v2349 = vmul.f32 %v2347, %v2348
        %v2350 = vsub.f32 1.0, %v2349
        %v2351 = vmul.f32 %v2348, %v2350
        %v2352 = vadd.f32 %v2348, %v2351
        %vm2353 = vweird.f32 %v2347
        %vm2354 = vweird.f32 %v2348
        %vm2355 = vmor %vm2353, %vm2354
        %v2356 = vsel %vm2355, %v2348, %v2352
        %v2357 = vand.u32 2147483647, %v2347
        %vm2358 = vcmp.eq.f32.partialorder %v2357, 8.507059e+37
        %v2359 = vand.u32 %v2347, 2147483648
        %v2360 = vor.u32 1.1754944e-38, %v2359
        %v2361 = vsel %vm2358, %v2360, %v2356
        %v2362 = vmul.f32 %v2337, %v2361
        %v2363 = vmin.f32 %v2362, 1.0
        %v2364 = vmax.f32 %v2363, -1.0
        %v2365 = vmul.f32 %v819, %v819
        %v2366 = vmin.f32 16.0, %v2365
        %v2367 = vmul.f32 %v2366, 2.1237322e-06
        %v2368 = vadd.f32 %v2367, 0.00028619796
        %v2369 = vmul.f32 %v2366, %v2368
        %v2370 = vadd.f32 %v2369, 0.0036580483
        %v2371 = vmul.f32 %v2366, %v2370
        %v2372 = vadd.f32 %v2371, 0.05243302
        %v2373 = vmul.f32 %v2366, %v2372
        %v2374 = vadd.f32 %v2373, 0.18741608
        %v2375 = vmul.f32 %v2366, %v2374
        %v2376 = vadd.f32 %v2375, 1.1283791
        %v2377 = vmul.f32 %v819, %v2376
        %v2378 = vmul.f32 %v2366, 3.8918573e-05
        %v2379 = vadd.f32 %v2378, 0.001143296
        %v2380 = vmul.f32 %v2366, %v2379
        %v2381 = vadd.f32 %v2380, 0.014752088
        %v2382 = vmul.f32 %v2366, %v2381
        %v2383 = vadd.f32 %v2382, 0.112945676
        %v2384 = vmul.f32 %v2366, %v2383
        %v2385 = vadd.f32 %v2384, 0.4994258
        %v2386 = vmul.f32 %v2366, %v2385
        %v2387 = vadd.f32 %v2386, 1.0
        %v2388 = vrcp.pop %v2387
        %v2389 = vmul.f32 %v2387, %v2388
        %v2390 = vsub.f32 1.0, %v2389
        %v2391 = vmul.f32 %v2388, %v2390
        %v2392 = vadd.f32 %v2388, %v2391
        %vm2393 = vweird.f32 %v2387
        %vm2394 = vweird.f32 %v2388
        %vm2395 = vmor %vm2393, %vm2394
        %v2396 = vsel %vm2395, %v2388, %v2392
        %v2397 = vand.u32 2147483647, %v2387
        %vm2398 = vcmp.eq.f32.partialorder %v2397, 8.507059e+37
        %v2399 = vand.u32 %v2387, 2147483648
        %v2400 = vor.u32 1.1754944e-38, %v2399
        %v2401 = vsel %vm2398, %v2400, %v2396
        %v2402 = vmul.f32 %v2377, %v2401
        %v2403 = vmin.f32 %v2402, 1.0
        %v2404 = vmax.f32 %v2403, -1.0
        %v2405 = vmul.f32 %v820, %v820
        %v2406 = vmin.f32 16.0, %v2405
        %v2407 = vmul.f32 %v2406, 2.1237322e-06
        %v2408 = vadd.f32 %v2407, 0.00028619796
        %v2409 = vmul.f32 %v2406, %v2408
        %v2410 = vadd.f32 %v2409, 0.0036580483
        %v2411 = vmul.f32 %v2406, %v2410
        %v2412 = vadd.f32 %v2411, 0.05243302
        %v2413 = vmul.f32 %v2406, %v2412
        %v2414 = vadd.f32 %v2413, 0.18741608
        %v2415 = vmul.f32 %v2406, %v2414
        %v2416 = vadd.f32 %v2415, 1.1283791
        %v2417 = vmul.f32 %v820, %v2416
        %v2418 = vmul.f32 %v2406, 3.8918573e-05
        %v2419 = vadd.f32 %v2418, 0.001143296
        %v2420 = vmul.f32 %v2406, %v2419
        %v2421 = vadd.f32 %v2420, 0.014752088
        %v2422 = vmul.f32 %v2406, %v2421
        %v2423 = vadd.f32 %v2422, 0.112945676
        %v2424 = vmul.f32 %v2406, %v2423
        %v2425 = vadd.f32 %v2424, 0.4994258
        %v2426 = vmul.f32 %v2406, %v2425
        %v2427 = vadd.f32 %v2426, 1.0
        %v2428 = vrcp.pop %v2427
        %v2429 = vmul.f32 %v2427, %v2428
        %v2430 = vsub.f32 1.0, %v2429
        %v2431 = vmul.f32 %v2428, %v2430
        %v2432 = vadd.f32 %v2428, %v2431
        %vm2433 = vweird.f32 %v2427
        %vm2434 = vweird.f32 %v2428
        %vm2435 = vmor %vm2433, %vm2434
        %v2436 = vsel %vm2435, %v2428, %v2432
        %v2437 = vand.u32 2147483647, %v2427
        %vm2438 = vcmp.eq.f32.partialorder %v2437, 8.507059e+37
        %v2439 = vand.u32 %v2427, 2147483648
        %v2440 = vor.u32 1.1754944e-38, %v2439
        %v2441 = vsel %vm2438, %v2440, %v2436
        %v2442 = vmul.f32 %v2417, %v2441
        %v2443 = vmin.f32 %v2442, 1.0
        %v2444 = vmax.f32 %v2443, -1.0
        %v2445 = vmul.f32 %v821, %v821
        %v2446 = vmin.f32 16.0, %v2445
        %v2447 = vmul.f32 %v2446, 2.1237322e-06
        %v2448 = vadd.f32 %v2447, 0.00028619796
        %v2449 = vmul.f32 %v2446, %v2448
        %v2450 = vadd.f32 %v2449, 0.0036580483
        %v2451 = vmul.f32 %v2446, %v2450
        %v2452 = vadd.f32 %v2451, 0.05243302
        %v2453 = vmul.f32 %v2446, %v2452
        %v2454 = vadd.f32 %v2453, 0.18741608
        %v2455 = vmul.f32 %v2446, %v2454
        %v2456 = vadd.f32 %v2455, 1.1283791
        %v2457 = vmul.f32 %v821, %v2456
        %v2458 = vmul.f32 %v2446, 3.8918573e-05
        %v2459 = vadd.f32 %v2458, 0.001143296
        %v2460 = vmul.f32 %v2446, %v2459
        %v2461 = vadd.f32 %v2460, 0.014752088
        %v2462 = vmul.f32 %v2446, %v2461
        %v2463 = vadd.f32 %v2462, 0.112945676
        %v2464 = vmul.f32 %v2446, %v2463
        %v2465 = vadd.f32 %v2464, 0.4994258
        %v2466 = vmul.f32 %v2446, %v2465
        %v2467 = vadd.f32 %v2466, 1.0
        %v2468 = vrcp.pop %v2467
        %v2469 = vmul.f32 %v2467, %v2468
        %v2470 = vsub.f32 1.0, %v2469
        %v2471 = vmul.f32 %v2468, %v2470
        %v2472 = vadd.f32 %v2468, %v2471
        %vm2473 = vweird.f32 %v2467
        %vm2474 = vweird.f32 %v2468
        %vm2475 = vmor %vm2473, %vm2474
        %v2476 = vsel %vm2475, %v2468, %v2472
        %v2477 = vand.u32 2147483647, %v2467
        %vm2478 = vcmp.eq.f32.partialorder %v2477, 8.507059e+37
        %v2479 = vand.u32 %v2467, 2147483648
        %v2480 = vor.u32 1.1754944e-38, %v2479
        %v2481 = vsel %vm2478, %v2480, %v2476
        %v2482 = vmul.f32 %v2457, %v2481
        %v2483 = vmin.f32 %v2482, 1.0
        %v2484 = vmax.f32 %v2483, -1.0
        %v2485 = vmul.f32 %v822, %v822
        %v2486 = vmin.f32 16.0, %v2485
        %v2487 = vmul.f32 %v2486, 2.1237322e-06
        %v2488 = vadd.f32 %v2487, 0.00028619796
        %v2489 = vmul.f32 %v2486, %v2488
        %v2490 = vadd.f32 %v2489, 0.0036580483
        %v2491 = vmul.f32 %v2486, %v2490
        %v2492 = vadd.f32 %v2491, 0.05243302
        %v2493 = vmul.f32 %v2486, %v2492
        %v2494 = vadd.f32 %v2493, 0.18741608
        %v2495 = vmul.f32 %v2486, %v2494
        %v2496 = vadd.f32 %v2495, 1.1283791
        %v2497 = vmul.f32 %v822, %v2496
        %v2498 = vmul.f32 %v2486, 3.8918573e-05
        %v2499 = vadd.f32 %v2498, 0.001143296
        %v2500 = vmul.f32 %v2486, %v2499
        %v2501 = vadd.f32 %v2500, 0.014752088
        %v2502 = vmul.f32 %v2486, %v2501
        %v2503 = vadd.f32 %v2502, 0.112945676
        %v2504 = vmul.f32 %v2486, %v2503
        %v2505 = vadd.f32 %v2504, 0.4994258
        %v2506 = vmul.f32 %v2486, %v2505
        %v2507 = vadd.f32 %v2506, 1.0
        %v2508 = vrcp.pop %v2507
        %v2509 = vmul.f32 %v2507, %v2508
        %v2510 = vsub.f32 1.0, %v2509
        %v2511 = vmul.f32 %v2508, %v2510
        %v2512 = vadd.f32 %v2508, %v2511
        %vm2513 = vweird.f32 %v2507
        %vm2514 = vweird.f32 %v2508
        %vm2515 = vmor %vm2513, %vm2514
        %v2516 = vsel %vm2515, %v2508, %v2512
        %v2517 = vand.u32 2147483647, %v2507
        %vm2518 = vcmp.eq.f32.partialorder %v2517, 8.507059e+37
        %v2519 = vand.u32 %v2507, 2147483648
        %v2520 = vor.u32 1.1754944e-38, %v2519
        %v2521 = vsel %vm2518, %v2520, %v2516
        %v2522 = vmul.f32 %v2497, %v2521
        %v2523 = vmin.f32 %v2522, 1.0
        %v2524 = vmax.f32 %v2523, -1.0
        %v2525 = vmul.f32 %v823, %v823
        %v2526 = vmin.f32 16.0, %v2525
        %v2527 = vmul.f32 %v2526, 2.1237322e-06
        %v2528 = vadd.f32 %v2527, 0.00028619796
        %v2529 = vmul.f32 %v2526, %v2528
        %v2530 = vadd.f32 %v2529, 0.0036580483
        %v2531 = vmul.f32 %v2526, %v2530
        %v2532 = vadd.f32 %v2531, 0.05243302
        %v2533 = vmul.f32 %v2526, %v2532
        %v2534 = vadd.f32 %v2533, 0.18741608
        %v2535 = vmul.f32 %v2526, %v2534
        %v2536 = vadd.f32 %v2535, 1.1283791
        %v2537 = vmul.f32 %v823, %v2536
        %v2538 = vmul.f32 %v2526, 3.8918573e-05
        %v2539 = vadd.f32 %v2538, 0.001143296
        %v2540 = vmul.f32 %v2526, %v2539
        %v2541 = vadd.f32 %v2540, 0.014752088
        %v2542 = vmul.f32 %v2526, %v2541
        %v2543 = vadd.f32 %v2542, 0.112945676
        %v2544 = vmul.f32 %v2526, %v2543
        %v2545 = vadd.f32 %v2544, 0.4994258
        %v2546 = vmul.f32 %v2526, %v2545
        %v2547 = vadd.f32 %v2546, 1.0
        %v2548 = vrcp.pop %v2547
        %v2549 = vmul.f32 %v2547, %v2548
        %v2550 = vsub.f32 1.0, %v2549
        %v2551 = vmul.f32 %v2548, %v2550
        %v2552 = vadd.f32 %v2548, %v2551
        %vm2553 = vweird.f32 %v2547
        %vm2554 = vweird.f32 %v2548
        %vm2555 = vmor %vm2553, %vm2554
        %v2556 = vsel %vm2555, %v2548, %v2552
        %v2557 = vand.u32 2147483647, %v2547
        %vm2558 = vcmp.eq.f32.partialorder %v2557, 8.507059e+37
        %v2559 = vand.u32 %v2547, 2147483648
        %v2560 = vor.u32 1.1754944e-38, %v2559
        %v2561 = vsel %vm2558, %v2560, %v2556
        %v2562 = vmul.f32 %v2537, %v2561
        %v2563 = vmin.f32 %v2562, 1.0
        %v2564 = vmax.f32 %v2563, -1.0
        %v2565 = vmul.f32 %v824, %v824
        %v2566 = vmin.f32 16.0, %v2565
        %v2567 = vmul.f32 %v2566, 2.1237322e-06
        %v2568 = vadd.f32 %v2567, 0.00028619796
        %v2569 = vmul.f32 %v2566, %v2568
        %v2570 = vadd.f32 %v2569, 0.0036580483
        %v2571 = vmul.f32 %v2566, %v2570
        %v2572 = vadd.f32 %v2571, 0.05243302
        %v2573 = vmul.f32 %v2566, %v2572
        %v2574 = vadd.f32 %v2573, 0.18741608
        %v2575 = vmul.f32 %v2566, %v2574
        %v2576 = vadd.f32 %v2575, 1.1283791
        %v2577 = vmul.f32 %v824, %v2576
        %v2578 = vmul.f32 %v2566, 3.8918573e-05
        %v2579 = vadd.f32 %v2578, 0.001143296
        %v2580 = vmul.f32 %v2566, %v2579
        %v2581 = vadd.f32 %v2580, 0.014752088
        %v2582 = vmul.f32 %v2566, %v2581
        %v2583 = vadd.f32 %v2582, 0.112945676
        %v2584 = vmul.f32 %v2566, %v2583
        %v2585 = vadd.f32 %v2584, 0.4994258
        %v2586 = vmul.f32 %v2566, %v2585
        %v2587 = vadd.f32 %v2586, 1.0
        %v2588 = vrcp.pop %v2587
        %v2589 = vmul.f32 %v2587, %v2588
        %v2590 = vsub.f32 1.0, %v2589
        %v2591 = vmul.f32 %v2588, %v2590
        %v2592 = vadd.f32 %v2588, %v2591
        %vm2593 = vweird.f32 %v2587
        %vm2594 = vweird.f32 %v2588
        %vm2595 = vmor %vm2593, %vm2594
        %v2596 = vsel %vm2595, %v2588, %v2592
        %v2597 = vand.u32 2147483647, %v2587
        %vm2598 = vcmp.eq.f32.partialorder %v2597, 8.507059e+37
        %v2599 = vand.u32 %v2587, 2147483648
        %v2600 = vor.u32 1.1754944e-38, %v2599
        %v2601 = vsel %vm2598, %v2600, %v2596
        %v2602 = vmul.f32 %v2577, %v2601
        %v2603 = vmin.f32 %v2602, 1.0
        %v2604 = vmax.f32 %v2603, -1.0
        %v2605 = vmul.f32 %v825, %v825
        %v2606 = vmin.f32 16.0, %v2605
        %v2607 = vmul.f32 %v2606, 2.1237322e-06
        %v2608 = vadd.f32 %v2607, 0.00028619796
        %v2609 = vmul.f32 %v2606, %v2608
        %v2610 = vadd.f32 %v2609, 0.0036580483
        %v2611 = vmul.f32 %v2606, %v2610
        %v2612 = vadd.f32 %v2611, 0.05243302
        %v2613 = vmul.f32 %v2606, %v2612
        %v2614 = vadd.f32 %v2613, 0.18741608
        %v2615 = vmul.f32 %v2606, %v2614
        %v2616 = vadd.f32 %v2615, 1.1283791
        %v2617 = vmul.f32 %v825, %v2616
        %v2618 = vmul.f32 %v2606, 3.8918573e-05
        %v2619 = vadd.f32 %v2618, 0.001143296
        %v2620 = vmul.f32 %v2606, %v2619
        %v2621 = vadd.f32 %v2620, 0.014752088
        %v2622 = vmul.f32 %v2606, %v2621
        %v2623 = vadd.f32 %v2622, 0.112945676
        %v2624 = vmul.f32 %v2606, %v2623
        %v2625 = vadd.f32 %v2624, 0.4994258
        %v2626 = vmul.f32 %v2606, %v2625
        %v2627 = vadd.f32 %v2626, 1.0
        %v2628 = vrcp.pop %v2627
        %v2629 = vmul.f32 %v2627, %v2628
        %v2630 = vsub.f32 1.0, %v2629
        %v2631 = vmul.f32 %v2628, %v2630
        %v2632 = vadd.f32 %v2628, %v2631
        %vm2633 = vweird.f32 %v2627
        %vm2634 = vweird.f32 %v2628
        %vm2635 = vmor %vm2633, %vm2634
        %v2636 = vsel %vm2635, %v2628, %v2632
        %v2637 = vand.u32 2147483647, %v2627
        %vm2638 = vcmp.eq.f32.partialorder %v2637, 8.507059e+37
        %v2639 = vand.u32 %v2627, 2147483648
        %v2640 = vor.u32 1.1754944e-38, %v2639
        %v2641 = vsel %vm2638, %v2640, %v2636
        %v2642 = vmul.f32 %v2617, %v2641
        %v2643 = vmin.f32 %v2642, 1.0
        %v2644 = vmax.f32 %v2643, -1.0
        %v2645 = vmul.f32 %v826, %v826
        %v2646 = vmin.f32 16.0, %v2645
        %v2647 = vmul.f32 %v2646, 2.1237322e-06
        %v2648 = vadd.f32 %v2647, 0.00028619796
        %v2649 = vmul.f32 %v2646, %v2648
        %v2650 = vadd.f32 %v2649, 0.0036580483
        %v2651 = vmul.f32 %v2646, %v2650
        %v2652 = vadd.f32 %v2651, 0.05243302
        %v2653 = vmul.f32 %v2646, %v2652
        %v2654 = vadd.f32 %v2653, 0.18741608
        %v2655 = vmul.f32 %v2646, %v2654
        %v2656 = vadd.f32 %v2655, 1.1283791
        %v2657 = vmul.f32 %v826, %v2656
        %v2658 = vmul.f32 %v2646, 3.8918573e-05
        %v2659 = vadd.f32 %v2658, 0.001143296
        %v2660 = vmul.f32 %v2646, %v2659
        %v2661 = vadd.f32 %v2660, 0.014752088
        %v2662 = vmul.f32 %v2646, %v2661
        %v2663 = vadd.f32 %v2662, 0.112945676
        %v2664 = vmul.f32 %v2646, %v2663
        %v2665 = vadd.f32 %v2664, 0.4994258
        %v2666 = vmul.f32 %v2646, %v2665
        %v2667 = vadd.f32 %v2666, 1.0
        %v2668 = vrcp.pop %v2667
        %v2669 = vmul.f32 %v2667, %v2668
        %v2670 = vsub.f32 1.0, %v2669
        %v2671 = vmul.f32 %v2668, %v2670
        %v2672 = vadd.f32 %v2668, %v2671
        %vm2673 = vweird.f32 %v2667
        %vm2674 = vweird.f32 %v2668
        %vm2675 = vmor %vm2673, %vm2674
        %v2676 = vsel %vm2675, %v2668, %v2672
        %v2677 = vand.u32 2147483647, %v2667
        %vm2678 = vcmp.eq.f32.partialorder %v2677, 8.507059e+37
        %v2679 = vand.u32 %v2667, 2147483648
        %v2680 = vor.u32 1.1754944e-38, %v2679
        %v2681 = vsel %vm2678, %v2680, %v2676
        %v2682 = vmul.f32 %v2657, %v2681
        %v2683 = vmin.f32 %v2682, 1.0
        %v2684 = vmax.f32 %v2683, -1.0
        %v2685 = vmul.f32 %v827, %v827
        %v2686 = vmin.f32 16.0, %v2685
        %v2687 = vmul.f32 %v2686, 2.1237322e-06
        %v2688 = vadd.f32 %v2687, 0.00028619796
        %v2689 = vmul.f32 %v2686, %v2688
        %v2690 = vadd.f32 %v2689, 0.0036580483
        %v2691 = vmul.f32 %v2686, %v2690
        %v2692 = vadd.f32 %v2691, 0.05243302
        %v2693 = vmul.f32 %v2686, %v2692
        %v2694 = vadd.f32 %v2693, 0.18741608
        %v2695 = vmul.f32 %v2686, %v2694
        %v2696 = vadd.f32 %v2695, 1.1283791
        %v2697 = vmul.f32 %v827, %v2696
        %v2698 = vmul.f32 %v2686, 3.8918573e-05
        %v2699 = vadd.f32 %v2698, 0.001143296
        %v2700 = vmul.f32 %v2686, %v2699
        %v2701 = vadd.f32 %v2700, 0.014752088
        %v2702 = vmul.f32 %v2686, %v2701
        %v2703 = vadd.f32 %v2702, 0.112945676
        %v2704 = vmul.f32 %v2686, %v2703
        %v2705 = vadd.f32 %v2704, 0.4994258
        %v2706 = vmul.f32 %v2686, %v2705
        %v2707 = vadd.f32 %v2706, 1.0
        %v2708 = vrcp.pop %v2707
        %v2709 = vmul.f32 %v2707, %v2708
        %v2710 = vsub.f32 1.0, %v2709
        %v2711 = vmul.f32 %v2708, %v2710
        %v2712 = vadd.f32 %v2708, %v2711
        %vm2713 = vweird.f32 %v2707
        %vm2714 = vweird.f32 %v2708
        %vm2715 = vmor %vm2713, %vm2714
        %v2716 = vsel %vm2715, %v2708, %v2712
        %v2717 = vand.u32 2147483647, %v2707
        %vm2718 = vcmp.eq.f32.partialorder %v2717, 8.507059e+37
        %v2719 = vand.u32 %v2707, 2147483648
        %v2720 = vor.u32 1.1754944e-38, %v2719
        %v2721 = vsel %vm2718, %v2720, %v2716
        %v2722 = vmul.f32 %v2697, %v2721
        %v2723 = vmin.f32 %v2722, 1.0
        %v2724 = vmax.f32 %v2723, -1.0
        %v2725 = vmul.f32 %v828, %v828
        %v2726 = vmin.f32 16.0, %v2725
        %v2727 = vmul.f32 %v2726, 2.1237322e-06
        %v2728 = vadd.f32 %v2727, 0.00028619796
        %v2729 = vmul.f32 %v2726, %v2728
        %v2730 = vadd.f32 %v2729, 0.0036580483
        %v2731 = vmul.f32 %v2726, %v2730
        %v2732 = vadd.f32 %v2731, 0.05243302
        %v2733 = vmul.f32 %v2726, %v2732
        %v2734 = vadd.f32 %v2733, 0.18741608
        %v2735 = vmul.f32 %v2726, %v2734
        %v2736 = vadd.f32 %v2735, 1.1283791
        %v2737 = vmul.f32 %v828, %v2736
        %v2738 = vmul.f32 %v2726, 3.8918573e-05
        %v2739 = vadd.f32 %v2738, 0.001143296
        %v2740 = vmul.f32 %v2726, %v2739
        %v2741 = vadd.f32 %v2740, 0.014752088
        %v2742 = vmul.f32 %v2726, %v2741
        %v2743 = vadd.f32 %v2742, 0.112945676
        %v2744 = vmul.f32 %v2726, %v2743
        %v2745 = vadd.f32 %v2744, 0.4994258
        %v2746 = vmul.f32 %v2726, %v2745
        %v2747 = vadd.f32 %v2746, 1.0
        %v2748 = vrcp.pop %v2747
        %v2749 = vmul.f32 %v2747, %v2748
        %v2750 = vsub.f32 1.0, %v2749
        %v2751 = vmul.f32 %v2748, %v2750
        %v2752 = vadd.f32 %v2748, %v2751
        %vm2753 = vweird.f32 %v2747
        %vm2754 = vweird.f32 %v2748
        %vm2755 = vmor %vm2753, %vm2754
        %v2756 = vsel %vm2755, %v2748, %v2752
        %v2757 = vand.u32 2147483647, %v2747
        %vm2758 = vcmp.eq.f32.partialorder %v2757, 8.507059e+37
        %v2759 = vand.u32 %v2747, 2147483648
        %v2760 = vor.u32 1.1754944e-38, %v2759
        %v2761 = vsel %vm2758, %v2760, %v2756
        %v2762 = vmul.f32 %v2737, %v2761
        %v2763 = vmin.f32 %v2762, 1.0
        %v2764 = vmax.f32 %v2763, -1.0
        %v2765 = vmul.f32 %v829, %v829
        %v2766 = vmin.f32 16.0, %v2765
        %v2767 = vmul.f32 %v2766, 2.1237322e-06
        %v2768 = vadd.f32 %v2767, 0.00028619796
        %v2769 = vmul.f32 %v2766, %v2768
        %v2770 = vadd.f32 %v2769, 0.0036580483
        %v2771 = vmul.f32 %v2766, %v2770
        %v2772 = vadd.f32 %v2771, 0.05243302
        %v2773 = vmul.f32 %v2766, %v2772
        %v2774 = vadd.f32 %v2773, 0.18741608
        %v2775 = vmul.f32 %v2766, %v2774
        %v2776 = vadd.f32 %v2775, 1.1283791
        %v2777 = vmul.f32 %v829, %v2776
        %v2778 = vmul.f32 %v2766, 3.8918573e-05
        %v2779 = vadd.f32 %v2778, 0.001143296
        %v2780 = vmul.f32 %v2766, %v2779
        %v2781 = vadd.f32 %v2780, 0.014752088
        %v2782 = vmul.f32 %v2766, %v2781
        %v2783 = vadd.f32 %v2782, 0.112945676
        %v2784 = vmul.f32 %v2766, %v2783
        %v2785 = vadd.f32 %v2784, 0.4994258
        %v2786 = vmul.f32 %v2766, %v2785
        %v2787 = vadd.f32 %v2786, 1.0
        %v2788 = vrcp.pop %v2787
        %v2789 = vmul.f32 %v2787, %v2788
        %v2790 = vsub.f32 1.0, %v2789
        %v2791 = vmul.f32 %v2788, %v2790
        %v2792 = vadd.f32 %v2788, %v2791
        %vm2793 = vweird.f32 %v2787
        %vm2794 = vweird.f32 %v2788
        %vm2795 = vmor %vm2793, %vm2794
        %v2796 = vsel %vm2795, %v2788, %v2792
        %v2797 = vand.u32 2147483647, %v2787
        %vm2798 = vcmp.eq.f32.partialorder %v2797, 8.507059e+37
        %v2799 = vand.u32 %v2787, 2147483648
        %v2800 = vor.u32 1.1754944e-38, %v2799
        %v2801 = vsel %vm2798, %v2800, %v2796
        %v2802 = vmul.f32 %v2777, %v2801
        %v2803 = vmin.f32 %v2802, 1.0
        %v2804 = vmax.f32 %v2803, -1.0
        %v2805 = vmul.f32 %v830, %v830
        %v2806 = vmin.f32 16.0, %v2805
        %v2807 = vmul.f32 %v2806, 2.1237322e-06
        %v2808 = vadd.f32 %v2807, 0.00028619796
        %v2809 = vmul.f32 %v2806, %v2808
        %v2810 = vadd.f32 %v2809, 0.0036580483
        %v2811 = vmul.f32 %v2806, %v2810
        %v2812 = vadd.f32 %v2811, 0.05243302
        %v2813 = vmul.f32 %v2806, %v2812
        %v2814 = vadd.f32 %v2813, 0.18741608
        %v2815 = vmul.f32 %v2806, %v2814
        %v2816 = vadd.f32 %v2815, 1.1283791
        %v2817 = vmul.f32 %v830, %v2816
        %v2818 = vmul.f32 %v2806, 3.8918573e-05
        %v2819 = vadd.f32 %v2818, 0.001143296
        %v2820 = vmul.f32 %v2806, %v2819
        %v2821 = vadd.f32 %v2820, 0.014752088
        %v2822 = vmul.f32 %v2806, %v2821
        %v2823 = vadd.f32 %v2822, 0.112945676
        %v2824 = vmul.f32 %v2806, %v2823
        %v2825 = vadd.f32 %v2824, 0.4994258
        %v2826 = vmul.f32 %v2806, %v2825
        %v2827 = vadd.f32 %v2826, 1.0
        %v2828 = vrcp.pop %v2827
        %v2829 = vmul.f32 %v2827, %v2828
        %v2830 = vsub.f32 1.0, %v2829
        %v2831 = vmul.f32 %v2828, %v2830
        %v2832 = vadd.f32 %v2828, %v2831
        %vm2833 = vweird.f32 %v2827
        %vm2834 = vweird.f32 %v2828
        %vm2835 = vmor %vm2833, %vm2834
        %v2836 = vsel %vm2835, %v2828, %v2832
        %v2837 = vand.u32 2147483647, %v2827
        %vm2838 = vcmp.eq.f32.partialorder %v2837, 8.507059e+37
        %v2839 = vand.u32 %v2827, 2147483648
        %v2840 = vor.u32 1.1754944e-38, %v2839
        %v2841 = vsel %vm2838, %v2840, %v2836
        %v2842 = vmul.f32 %v2817, %v2841
        %v2843 = vmin.f32 %v2842, 1.0
        %v2844 = vmax.f32 %v2843, -1.0
        %v2845 = vmul.f32 %v831, %v831
        %v2846 = vmin.f32 16.0, %v2845
        %v2847 = vmul.f32 %v2846, 2.1237322e-06
        %v2848 = vadd.f32 %v2847, 0.00028619796
        %v2849 = vmul.f32 %v2846, %v2848
        %v2850 = vadd.f32 %v2849, 0.0036580483
        %v2851 = vmul.f32 %v2846, %v2850
        %v2852 = vadd.f32 %v2851, 0.05243302
        %v2853 = vmul.f32 %v2846, %v2852
        %v2854 = vadd.f32 %v2853, 0.18741608
        %v2855 = vmul.f32 %v2846, %v2854
        %v2856 = vadd.f32 %v2855, 1.1283791
        %v2857 = vmul.f32 %v831, %v2856
        %v2858 = vmul.f32 %v2846, 3.8918573e-05
        %v2859 = vadd.f32 %v2858, 0.001143296
        %v2860 = vmul.f32 %v2846, %v2859
        %v2861 = vadd.f32 %v2860, 0.014752088
        %v2862 = vmul.f32 %v2846, %v2861
        %v2863 = vadd.f32 %v2862, 0.112945676
        %v2864 = vmul.f32 %v2846, %v2863
        %v2865 = vadd.f32 %v2864, 0.4994258
        %v2866 = vmul.f32 %v2846, %v2865
        %v2867 = vadd.f32 %v2866, 1.0
        %v2868 = vrcp.pop %v2867
        %v2869 = vmul.f32 %v2867, %v2868
        %v2870 = vsub.f32 1.0, %v2869
        %v2871 = vmul.f32 %v2868, %v2870
        %v2872 = vadd.f32 %v2868, %v2871
        %vm2873 = vweird.f32 %v2867
        %vm2874 = vweird.f32 %v2868
        %vm2875 = vmor %vm2873, %vm2874
        %v2876 = vsel %vm2875, %v2868, %v2872
        %v2877 = vand.u32 2147483647, %v2867
        %vm2878 = vcmp.eq.f32.partialorder %v2877, 8.507059e+37
        %v2879 = vand.u32 %v2867, 2147483648
        %v2880 = vor.u32 1.1754944e-38, %v2879
        %v2881 = vsel %vm2878, %v2880, %v2876
        %v2882 = vmul.f32 %v2857, %v2881
        %v2883 = vmin.f32 %v2882, 1.0
        %v2884 = vmax.f32 %v2883, -1.0
        %v2885 = vmul.f32 %v832, %v832
        %v2886 = vmin.f32 16.0, %v2885
        %v2887 = vmul.f32 %v2886, 2.1237322e-06
        %v2888 = vadd.f32 %v2887, 0.00028619796
        %v2889 = vmul.f32 %v2886, %v2888
        %v2890 = vadd.f32 %v2889, 0.0036580483
        %v2891 = vmul.f32 %v2886, %v2890
        %v2892 = vadd.f32 %v2891, 0.05243302
        %v2893 = vmul.f32 %v2886, %v2892
        %v2894 = vadd.f32 %v2893, 0.18741608
        %v2895 = vmul.f32 %v2886, %v2894
        %v2896 = vadd.f32 %v2895, 1.1283791
        %v2897 = vmul.f32 %v832, %v2896
        %v2898 = vmul.f32 %v2886, 3.8918573e-05
        %v2899 = vadd.f32 %v2898, 0.001143296
        %v2900 = vmul.f32 %v2886, %v2899
        %v2901 = vadd.f32 %v2900, 0.014752088
        %v2902 = vmul.f32 %v2886, %v2901
        %v2903 = vadd.f32 %v2902, 0.112945676
        %v2904 = vmul.f32 %v2886, %v2903
        %v2905 = vadd.f32 %v2904, 0.4994258
        %v2906 = vmul.f32 %v2886, %v2905
        %v2907 = vadd.f32 %v2906, 1.0
        %v2908 = vrcp.pop %v2907
        %v2909 = vmul.f32 %v2907, %v2908
        %v2910 = vsub.f32 1.0, %v2909
        %v2911 = vmul.f32 %v2908, %v2910
        %v2912 = vadd.f32 %v2908, %v2911
        %vm2913 = vweird.f32 %v2907
        %vm2914 = vweird.f32 %v2908
        %vm2915 = vmor %vm2913, %vm2914
        %v2916 = vsel %vm2915, %v2908, %v2912
        %v2917 = vand.u32 2147483647, %v2907
        %vm2918 = vcmp.eq.f32.partialorder %v2917, 8.507059e+37
        %v2919 = vand.u32 %v2907, 2147483648
        %v2920 = vor.u32 1.1754944e-38, %v2919
        %v2921 = vsel %vm2918, %v2920, %v2916
        %v2922 = vmul.f32 %v2897, %v2921
        %v2923 = vmin.f32 %v2922, 1.0
        %v2924 = vmax.f32 %v2923, -1.0
        %v2925 = vmul.f32 %v833, %v833
        %v2926 = vmin.f32 16.0, %v2925
        %v2927 = vmul.f32 %v2926, 2.1237322e-06
        %v2928 = vadd.f32 %v2927, 0.00028619796
        %v2929 = vmul.f32 %v2926, %v2928
        %v2930 = vadd.f32 %v2929, 0.0036580483
        %v2931 = vmul.f32 %v2926, %v2930
        %v2932 = vadd.f32 %v2931, 0.05243302
        %v2933 = vmul.f32 %v2926, %v2932
        %v2934 = vadd.f32 %v2933, 0.18741608
        %v2935 = vmul.f32 %v2926, %v2934
        %v2936 = vadd.f32 %v2935, 1.1283791
        %v2937 = vmul.f32 %v833, %v2936
        %v2938 = vmul.f32 %v2926, 3.8918573e-05
        %v2939 = vadd.f32 %v2938, 0.001143296
        %v2940 = vmul.f32 %v2926, %v2939
        %v2941 = vadd.f32 %v2940, 0.014752088
        %v2942 = vmul.f32 %v2926, %v2941
        %v2943 = vadd.f32 %v2942, 0.112945676
        %v2944 = vmul.f32 %v2926, %v2943
        %v2945 = vadd.f32 %v2944, 0.4994258
        %v2946 = vmul.f32 %v2926, %v2945
        %v2947 = vadd.f32 %v2946, 1.0
        %v2948 = vrcp.pop %v2947
        %v2949 = vmul.f32 %v2947, %v2948
        %v2950 = vsub.f32 1.0, %v2949
        %v2951 = vmul.f32 %v2948, %v2950
        %v2952 = vadd.f32 %v2948, %v2951
        %vm2953 = vweird.f32 %v2947
        %vm2954 = vweird.f32 %v2948
        %vm2955 = vmor %vm2953, %vm2954
        %v2956 = vsel %vm2955, %v2948, %v2952
        %v2957 = vand.u32 2147483647, %v2947
        %vm2958 = vcmp.eq.f32.partialorder %v2957, 8.507059e+37
        %v2959 = vand.u32 %v2947, 2147483648
        %v2960 = vor.u32 1.1754944e-38, %v2959
        %v2961 = vsel %vm2958, %v2960, %v2956
        %v2962 = vmul.f32 %v2937, %v2961
        %v2963 = vmin.f32 %v2962, 1.0
        %v2964 = vmax.f32 %v2963, -1.0
        %v2965 = vmul.f32 %v834, %v834
        %v2966 = vmin.f32 16.0, %v2965
        %v2967 = vmul.f32 %v2966, 2.1237322e-06
        %v2968 = vadd.f32 %v2967, 0.00028619796
        %v2969 = vmul.f32 %v2966, %v2968
        %v2970 = vadd.f32 %v2969, 0.0036580483
        %v2971 = vmul.f32 %v2966, %v2970
        %v2972 = vadd.f32 %v2971, 0.05243302
        %v2973 = vmul.f32 %v2966, %v2972
        %v2974 = vadd.f32 %v2973, 0.18741608
        %v2975 = vmul.f32 %v2966, %v2974
        %v2976 = vadd.f32 %v2975, 1.1283791
        %v2977 = vmul.f32 %v834, %v2976
        %v2978 = vmul.f32 %v2966, 3.8918573e-05
        %v2979 = vadd.f32 %v2978, 0.001143296
        %v2980 = vmul.f32 %v2966, %v2979
        %v2981 = vadd.f32 %v2980, 0.014752088
        %v2982 = vmul.f32 %v2966, %v2981
        %v2983 = vadd.f32 %v2982, 0.112945676
        %v2984 = vmul.f32 %v2966, %v2983
        %v2985 = vadd.f32 %v2984, 0.4994258
        %v2986 = vmul.f32 %v2966, %v2985
        %v2987 = vadd.f32 %v2986, 1.0
        %v2988 = vrcp.pop %v2987
        %v2989 = vmul.f32 %v2987, %v2988
        %v2990 = vsub.f32 1.0, %v2989
        %v2991 = vmul.f32 %v2988, %v2990
        %v2992 = vadd.f32 %v2988, %v2991
        %vm2993 = vweird.f32 %v2987
        %vm2994 = vweird.f32 %v2988
        %vm2995 = vmor %vm2993, %vm2994
        %v2996 = vsel %vm2995, %v2988, %v2992
        %v2997 = vand.u32 2147483647, %v2987
        %vm2998 = vcmp.eq.f32.partialorder %v2997, 8.507059e+37
        %v2999 = vand.u32 %v2987, 2147483648
        %v3000 = vor.u32 1.1754944e-38, %v2999
        %v3001 = vsel %vm2998, %v3000, %v2996
        %v3002 = vmul.f32 %v2977, %v3001
        %v3003 = vmin.f32 %v3002, 1.0
        %v3004 = vmax.f32 %v3003, -1.0
        %v3005 = vmul.f32 %v835, %v835
        %v3006 = vmin.f32 16.0, %v3005
        %v3007 = vmul.f32 %v3006, 2.1237322e-06
        %v3008 = vadd.f32 %v3007, 0.00028619796
        %v3009 = vmul.f32 %v3006, %v3008
        %v3010 = vadd.f32 %v3009, 0.0036580483
        %v3011 = vmul.f32 %v3006, %v3010
        %v3012 = vadd.f32 %v3011, 0.05243302
        %v3013 = vmul.f32 %v3006, %v3012
        %v3014 = vadd.f32 %v3013, 0.18741608
        %v3015 = vmul.f32 %v3006, %v3014
        %v3016 = vadd.f32 %v3015, 1.1283791
        %v3017 = vmul.f32 %v835, %v3016
        %v3018 = vmul.f32 %v3006, 3.8918573e-05
        %v3019 = vadd.f32 %v3018, 0.001143296
        %v3020 = vmul.f32 %v3006, %v3019
        %v3021 = vadd.f32 %v3020, 0.014752088
        %v3022 = vmul.f32 %v3006, %v3021
        %v3023 = vadd.f32 %v3022, 0.112945676
        %v3024 = vmul.f32 %v3006, %v3023
        %v3025 = vadd.f32 %v3024, 0.4994258
        %v3026 = vmul.f32 %v3006, %v3025
        %v3027 = vadd.f32 %v3026, 1.0
        %v3028 = vrcp.pop %v3027
        %v3029 = vmul.f32 %v3027, %v3028
        %v3030 = vsub.f32 1.0, %v3029
        %v3031 = vmul.f32 %v3028, %v3030
        %v3032 = vadd.f32 %v3028, %v3031
        %vm3033 = vweird.f32 %v3027
        %vm3034 = vweird.f32 %v3028
        %vm3035 = vmor %vm3033, %vm3034
        %v3036 = vsel %vm3035, %v3028, %v3032
        %v3037 = vand.u32 2147483647, %v3027
        %vm3038 = vcmp.eq.f32.partialorder %v3037, 8.507059e+37
        %v3039 = vand.u32 %v3027, 2147483648
        %v3040 = vor.u32 1.1754944e-38, %v3039
        %v3041 = vsel %vm3038, %v3040, %v3036
        %v3042 = vmul.f32 %v3017, %v3041
        %v3043 = vmin.f32 %v3042, 1.0
        %v3044 = vmax.f32 %v3043, -1.0
        %v3045 = vmul.f32 %v836, %v836
        %v3046 = vmin.f32 16.0, %v3045
        %v3047 = vmul.f32 %v3046, 2.1237322e-06
        %v3048 = vadd.f32 %v3047, 0.00028619796
        %v3049 = vmul.f32 %v3046, %v3048
        %v3050 = vadd.f32 %v3049, 0.0036580483
        %v3051 = vmul.f32 %v3046, %v3050
        %v3052 = vadd.f32 %v3051, 0.05243302
        %v3053 = vmul.f32 %v3046, %v3052
        %v3054 = vadd.f32 %v3053, 0.18741608
        %v3055 = vmul.f32 %v3046, %v3054
        %v3056 = vadd.f32 %v3055, 1.1283791
        %v3057 = vmul.f32 %v836, %v3056
        %v3058 = vmul.f32 %v3046, 3.8918573e-05
        %v3059 = vadd.f32 %v3058, 0.001143296
        %v3060 = vmul.f32 %v3046, %v3059
        %v3061 = vadd.f32 %v3060, 0.014752088
        %v3062 = vmul.f32 %v3046, %v3061
        %v3063 = vadd.f32 %v3062, 0.112945676
        %v3064 = vmul.f32 %v3046, %v3063
        %v3065 = vadd.f32 %v3064, 0.4994258
        %v3066 = vmul.f32 %v3046, %v3065
        %v3067 = vadd.f32 %v3066, 1.0
        %v3068 = vrcp.pop %v3067
        %v3069 = vmul.f32 %v3067, %v3068
        %v3070 = vsub.f32 1.0, %v3069
        %v3071 = vmul.f32 %v3068, %v3070
        %v3072 = vadd.f32 %v3068, %v3071
        %vm3073 = vweird.f32 %v3067
        %vm3074 = vweird.f32 %v3068
        %vm3075 = vmor %vm3073, %vm3074
        %v3076 = vsel %vm3075, %v3068, %v3072
        %v3077 = vand.u32 2147483647, %v3067
        %vm3078 = vcmp.eq.f32.partialorder %v3077, 8.507059e+37
        %v3079 = vand.u32 %v3067, 2147483648
        %v3080 = vor.u32 1.1754944e-38, %v3079
        %v3081 = vsel %vm3078, %v3080, %v3076
        %v3082 = vmul.f32 %v3057, %v3081
        %v3083 = vmin.f32 %v3082, 1.0
        %v3084 = vmax.f32 %v3083, -1.0
        %v3085 = vmul.f32 %v837, %v837
        %v3086 = vmin.f32 16.0, %v3085
        %v3087 = vmul.f32 %v3086, 2.1237322e-06
        %v3088 = vadd.f32 %v3087, 0.00028619796
        %v3089 = vmul.f32 %v3086, %v3088
        %v3090 = vadd.f32 %v3089, 0.0036580483
        %v3091 = vmul.f32 %v3086, %v3090
        %v3092 = vadd.f32 %v3091, 0.05243302
        %v3093 = vmul.f32 %v3086, %v3092
        %v3094 = vadd.f32 %v3093, 0.18741608
        %v3095 = vmul.f32 %v3086, %v3094
        %v3096 = vadd.f32 %v3095, 1.1283791
        %v3097 = vmul.f32 %v837, %v3096
        %v3098 = vmul.f32 %v3086, 3.8918573e-05
        %v3099 = vadd.f32 %v3098, 0.001143296
        %v3100 = vmul.f32 %v3086, %v3099
        %v3101 = vadd.f32 %v3100, 0.014752088
        %v3102 = vmul.f32 %v3086, %v3101
        %v3103 = vadd.f32 %v3102, 0.112945676
        %v3104 = vmul.f32 %v3086, %v3103
        %v3105 = vadd.f32 %v3104, 0.4994258
        %v3106 = vmul.f32 %v3086, %v3105
        %v3107 = vadd.f32 %v3106, 1.0
        %v3108 = vrcp.pop %v3107
        %v3109 = vmul.f32 %v3107, %v3108
        %v3110 = vsub.f32 1.0, %v3109
        %v3111 = vmul.f32 %v3108, %v3110
        %v3112 = vadd.f32 %v3108, %v3111
        %vm3113 = vweird.f32 %v3107
        %vm3114 = vweird.f32 %v3108
        %vm3115 = vmor %vm3113, %vm3114
        %v3116 = vsel %vm3115, %v3108, %v3112
        %v3117 = vand.u32 2147483647, %v3107
        %vm3118 = vcmp.eq.f32.partialorder %v3117, 8.507059e+37
        %v3119 = vand.u32 %v3107, 2147483648
        %v3120 = vor.u32 1.1754944e-38, %v3119
        %v3121 = vsel %vm3118, %v3120, %v3116
        %v3122 = vmul.f32 %v3097, %v3121
        %v3123 = vmin.f32 %v3122, 1.0
        %v3124 = vmax.f32 %v3123, -1.0
        %v3125 = vmul.f32 %v838, %v838
        %v3126 = vmin.f32 16.0, %v3125
        %v3127 = vmul.f32 %v3126, 2.1237322e-06
        %v3128 = vadd.f32 %v3127, 0.00028619796
        %v3129 = vmul.f32 %v3126, %v3128
        %v3130 = vadd.f32 %v3129, 0.0036580483
        %v3131 = vmul.f32 %v3126, %v3130
        %v3132 = vadd.f32 %v3131, 0.05243302
        %v3133 = vmul.f32 %v3126, %v3132
        %v3134 = vadd.f32 %v3133, 0.18741608
        %v3135 = vmul.f32 %v3126, %v3134
        %v3136 = vadd.f32 %v3135, 1.1283791
        %v3137 = vmul.f32 %v838, %v3136
        %v3138 = vmul.f32 %v3126, 3.8918573e-05
        %v3139 = vadd.f32 %v3138, 0.001143296
        %v3140 = vmul.f32 %v3126, %v3139
        %v3141 = vadd.f32 %v3140, 0.014752088
        %v3142 = vmul.f32 %v3126, %v3141
        %v3143 = vadd.f32 %v3142, 0.112945676
        %v3144 = vmul.f32 %v3126, %v3143
        %v3145 = vadd.f32 %v3144, 0.4994258
        %v3146 = vmul.f32 %v3126, %v3145
        %v3147 = vadd.f32 %v3146, 1.0
        %v3148 = vrcp.pop %v3147
        %v3149 = vmul.f32 %v3147, %v3148
        %v3150 = vsub.f32 1.0, %v3149
        %v3151 = vmul.f32 %v3148, %v3150
        %v3152 = vadd.f32 %v3148, %v3151
        %vm3153 = vweird.f32 %v3147
        %vm3154 = vweird.f32 %v3148
        %vm3155 = vmor %vm3153, %vm3154
        %v3156 = vsel %vm3155, %v3148, %v3152
        %v3157 = vand.u32 2147483647, %v3147
        %vm3158 = vcmp.eq.f32.partialorder %v3157, 8.507059e+37
        %v3159 = vand.u32 %v3147, 2147483648
        %v3160 = vor.u32 1.1754944e-38, %v3159
        %v3161 = vsel %vm3158, %v3160, %v3156
        %v3162 = vmul.f32 %v3137, %v3161
        %v3163 = vmin.f32 %v3162, 1.0
        %v3164 = vmax.f32 %v3163, -1.0
        %v3165 = vmul.f32 %v839, %v839
        %v3166 = vmin.f32 16.0, %v3165
        %v3167 = vmul.f32 %v3166, 2.1237322e-06
        %v3168 = vadd.f32 %v3167, 0.00028619796
        %v3169 = vmul.f32 %v3166, %v3168
        %v3170 = vadd.f32 %v3169, 0.0036580483
        %v3171 = vmul.f32 %v3166, %v3170
        %v3172 = vadd.f32 %v3171, 0.05243302
        %v3173 = vmul.f32 %v3166, %v3172
        %v3174 = vadd.f32 %v3173, 0.18741608
        %v3175 = vmul.f32 %v3166, %v3174
        %v3176 = vadd.f32 %v3175, 1.1283791
        %v3177 = vmul.f32 %v839, %v3176
        %v3178 = vmul.f32 %v3166, 3.8918573e-05
        %v3179 = vadd.f32 %v3178, 0.001143296
        %v3180 = vmul.f32 %v3166, %v3179
        %v3181 = vadd.f32 %v3180, 0.014752088
        %v3182 = vmul.f32 %v3166, %v3181
        %v3183 = vadd.f32 %v3182, 0.112945676
        %v3184 = vmul.f32 %v3166, %v3183
        %v3185 = vadd.f32 %v3184, 0.4994258
        %v3186 = vmul.f32 %v3166, %v3185
        %v3187 = vadd.f32 %v3186, 1.0
        %v3188 = vrcp.pop %v3187
        %v3189 = vmul.f32 %v3187, %v3188
        %v3190 = vsub.f32 1.0, %v3189
        %v3191 = vmul.f32 %v3188, %v3190
        %v3192 = vadd.f32 %v3188, %v3191
        %vm3193 = vweird.f32 %v3187
        %vm3194 = vweird.f32 %v3188
        %vm3195 = vmor %vm3193, %vm3194
        %v3196 = vsel %vm3195, %v3188, %v3192
        %v3197 = vand.u32 2147483647, %v3187
        %vm3198 = vcmp.eq.f32.partialorder %v3197, 8.507059e+37
        %v3199 = vand.u32 %v3187, 2147483648
        %v3200 = vor.u32 1.1754944e-38, %v3199
        %v3201 = vsel %vm3198, %v3200, %v3196
        %v3202 = vmul.f32 %v3177, %v3201
        %v3203 = vmin.f32 %v3202, 1.0
        %v3204 = vmax.f32 %v3203, -1.0
        %v3205 = vmul.f32 %v840, %v840
        %v3206 = vmin.f32 16.0, %v3205
        %v3207 = vmul.f32 %v3206, 2.1237322e-06
        %v3208 = vadd.f32 %v3207, 0.00028619796
        %v3209 = vmul.f32 %v3206, %v3208
        %v3210 = vadd.f32 %v3209, 0.0036580483
        %v3211 = vmul.f32 %v3206, %v3210
        %v3212 = vadd.f32 %v3211, 0.05243302
        %v3213 = vmul.f32 %v3206, %v3212
        %v3214 = vadd.f32 %v3213, 0.18741608
        %v3215 = vmul.f32 %v3206, %v3214
        %v3216 = vadd.f32 %v3215, 1.1283791
        %v3217 = vmul.f32 %v840, %v3216
        %v3218 = vmul.f32 %v3206, 3.8918573e-05
        %v3219 = vadd.f32 %v3218, 0.001143296
        %v3220 = vmul.f32 %v3206, %v3219
        %v3221 = vadd.f32 %v3220, 0.014752088
        %v3222 = vmul.f32 %v3206, %v3221
        %v3223 = vadd.f32 %v3222, 0.112945676
        %v3224 = vmul.f32 %v3206, %v3223
        %v3225 = vadd.f32 %v3224, 0.4994258
        %v3226 = vmul.f32 %v3206, %v3225
        %v3227 = vadd.f32 %v3226, 1.0
        %v3228 = vrcp.pop %v3227
        %v3229 = vmul.f32 %v3227, %v3228
        %v3230 = vsub.f32 1.0, %v3229
        %v3231 = vmul.f32 %v3228, %v3230
        %v3232 = vadd.f32 %v3228, %v3231
        %vm3233 = vweird.f32 %v3227
        %vm3234 = vweird.f32 %v3228
        %vm3235 = vmor %vm3233, %vm3234
        %v3236 = vsel %vm3235, %v3228, %v3232
        %v3237 = vand.u32 2147483647, %v3227
        %vm3238 = vcmp.eq.f32.partialorder %v3237, 8.507059e+37
        %v3239 = vand.u32 %v3227, 2147483648
        %v3240 = vor.u32 1.1754944e-38, %v3239
        %v3241 = vsel %vm3238, %v3240, %v3236
        %v3242 = vmul.f32 %v3217, %v3241
        %v3243 = vmin.f32 %v3242, 1.0
        %v3244 = vmax.f32 %v3243, -1.0
        %v3245 = vmul.f32 %v841, %v841
        %v3246 = vmin.f32 16.0, %v3245
        %v3247 = vmul.f32 %v3246, 2.1237322e-06
        %v3248 = vadd.f32 %v3247, 0.00028619796
        %v3249 = vmul.f32 %v3246, %v3248
        %v3250 = vadd.f32 %v3249, 0.0036580483
        %v3251 = vmul.f32 %v3246, %v3250
        %v3252 = vadd.f32 %v3251, 0.05243302
        %v3253 = vmul.f32 %v3246, %v3252
        %v3254 = vadd.f32 %v3253, 0.18741608
        %v3255 = vmul.f32 %v3246, %v3254
        %v3256 = vadd.f32 %v3255, 1.1283791
        %v3257 = vmul.f32 %v841, %v3256
        %v3258 = vmul.f32 %v3246, 3.8918573e-05
        %v3259 = vadd.f32 %v3258, 0.001143296
        %v3260 = vmul.f32 %v3246, %v3259
        %v3261 = vadd.f32 %v3260, 0.014752088
        %v3262 = vmul.f32 %v3246, %v3261
        %v3263 = vadd.f32 %v3262, 0.112945676
        %v3264 = vmul.f32 %v3246, %v3263
        %v3265 = vadd.f32 %v3264, 0.4994258
        %v3266 = vmul.f32 %v3246, %v3265
        %v3267 = vadd.f32 %v3266, 1.0
        %v3268 = vrcp.pop %v3267
        %v3269 = vmul.f32 %v3267, %v3268
        %v3270 = vsub.f32 1.0, %v3269
        %v3271 = vmul.f32 %v3268, %v3270
        %v3272 = vadd.f32 %v3268, %v3271
        %vm3273 = vweird.f32 %v3267
        %vm3274 = vweird.f32 %v3268
        %vm3275 = vmor %vm3273, %vm3274
        %v3276 = vsel %vm3275, %v3268, %v3272
        %v3277 = vand.u32 2147483647, %v3267
        %vm3278 = vcmp.eq.f32.partialorder %v3277, 8.507059e+37
        %v3279 = vand.u32 %v3267, 2147483648
        %v3280 = vor.u32 1.1754944e-38, %v3279
        %v3281 = vsel %vm3278, %v3280, %v3276
        %v3282 = vmul.f32 %v3257, %v3281
        %v3283 = vmin.f32 %v3282, 1.0
        %v3284 = vmax.f32 %v3283, -1.0
        %v3285 = vmul.f32 %v842, %v842
        %v3286 = vmin.f32 16.0, %v3285
        %v3287 = vmul.f32 %v3286, 2.1237322e-06
        %v3288 = vadd.f32 %v3287, 0.00028619796
        %v3289 = vmul.f32 %v3286, %v3288
        %v3290 = vadd.f32 %v3289, 0.0036580483
        %v3291 = vmul.f32 %v3286, %v3290
        %v3292 = vadd.f32 %v3291, 0.05243302
        %v3293 = vmul.f32 %v3286, %v3292
        %v3294 = vadd.f32 %v3293, 0.18741608
        %v3295 = vmul.f32 %v3286, %v3294
        %v3296 = vadd.f32 %v3295, 1.1283791
        %v3297 = vmul.f32 %v842, %v3296
        %v3298 = vmul.f32 %v3286, 3.8918573e-05
        %v3299 = vadd.f32 %v3298, 0.001143296
        %v3300 = vmul.f32 %v3286, %v3299
        %v3301 = vadd.f32 %v3300, 0.014752088
        %v3302 = vmul.f32 %v3286, %v3301
        %v3303 = vadd.f32 %v3302, 0.112945676
        %v3304 = vmul.f32 %v3286, %v3303
        %v3305 = vadd.f32 %v3304, 0.4994258
        %v3306 = vmul.f32 %v3286, %v3305
        %v3307 = vadd.f32 %v3306, 1.0
        %v3308 = vrcp.pop %v3307
        %v3309 = vmul.f32 %v3307, %v3308
        %v3310 = vsub.f32 1.0, %v3309
        %v3311 = vmul.f32 %v3308, %v3310
        %v3312 = vadd.f32 %v3308, %v3311
        %vm3313 = vweird.f32 %v3307
        %vm3314 = vweird.f32 %v3308
        %vm3315 = vmor %vm3313, %vm3314
        %v3316 = vsel %vm3315, %v3308, %v3312
        %v3317 = vand.u32 2147483647, %v3307
        %vm3318 = vcmp.eq.f32.partialorder %v3317, 8.507059e+37
        %v3319 = vand.u32 %v3307, 2147483648
        %v3320 = vor.u32 1.1754944e-38, %v3319
        %v3321 = vsel %vm3318, %v3320, %v3316
        %v3322 = vmul.f32 %v3297, %v3321
        %v3323 = vmin.f32 %v3322, 1.0
        %v3324 = vmax.f32 %v3323, -1.0
        %v3325 = vmul.f32 %v843, %v843
        %v3326 = vmin.f32 16.0, %v3325
        %v3327 = vmul.f32 %v3326, 2.1237322e-06
        %v3328 = vadd.f32 %v3327, 0.00028619796
        %v3329 = vmul.f32 %v3326, %v3328
        %v3330 = vadd.f32 %v3329, 0.0036580483
        %v3331 = vmul.f32 %v3326, %v3330
        %v3332 = vadd.f32 %v3331, 0.05243302
        %v3333 = vmul.f32 %v3326, %v3332
        %v3334 = vadd.f32 %v3333, 0.18741608
        %v3335 = vmul.f32 %v3326, %v3334
        %v3336 = vadd.f32 %v3335, 1.1283791
        %v3337 = vmul.f32 %v843, %v3336
        %v3338 = vmul.f32 %v3326, 3.8918573e-05
        %v3339 = vadd.f32 %v3338, 0.001143296
        %v3340 = vmul.f32 %v3326, %v3339
        %v3341 = vadd.f32 %v3340, 0.014752088
        %v3342 = vmul.f32 %v3326, %v3341
        %v3343 = vadd.f32 %v3342, 0.112945676
        %v3344 = vmul.f32 %v3326, %v3343
        %v3345 = vadd.f32 %v3344, 0.4994258
        %v3346 = vmul.f32 %v3326, %v3345
        %v3347 = vadd.f32 %v3346, 1.0
        %v3348 = vrcp.pop %v3347
        %v3349 = vmul.f32 %v3347, %v3348
        %v3350 = vsub.f32 1.0, %v3349
        %v3351 = vmul.f32 %v3348, %v3350
        %v3352 = vadd.f32 %v3348, %v3351
        %vm3353 = vweird.f32 %v3347
        %vm3354 = vweird.f32 %v3348
        %vm3355 = vmor %vm3353, %vm3354
        %v3356 = vsel %vm3355, %v3348, %v3352
        %v3357 = vand.u32 2147483647, %v3347
        %vm3358 = vcmp.eq.f32.partialorder %v3357, 8.507059e+37
        %v3359 = vand.u32 %v3347, 2147483648
        %v3360 = vor.u32 1.1754944e-38, %v3359
        %v3361 = vsel %vm3358, %v3360, %v3356
        %v3362 = vmul.f32 %v3337, %v3361
        %v3363 = vmin.f32 %v3362, 1.0
        %v3364 = vmax.f32 %v3363, -1.0
        %v3365 = vmul.f32 %v844, %v844
        %v3366 = vmin.f32 16.0, %v3365
        %v3367 = vmul.f32 %v3366, 2.1237322e-06
        %v3368 = vadd.f32 %v3367, 0.00028619796
        %v3369 = vmul.f32 %v3366, %v3368
        %v3370 = vadd.f32 %v3369, 0.0036580483
        %v3371 = vmul.f32 %v3366, %v3370
        %v3372 = vadd.f32 %v3371, 0.05243302
        %v3373 = vmul.f32 %v3366, %v3372
        %v3374 = vadd.f32 %v3373, 0.18741608
        %v3375 = vmul.f32 %v3366, %v3374
        %v3376 = vadd.f32 %v3375, 1.1283791
        %v3377 = vmul.f32 %v844, %v3376
        %v3378 = vmul.f32 %v3366, 3.8918573e-05
        %v3379 = vadd.f32 %v3378, 0.001143296
        %v3380 = vmul.f32 %v3366, %v3379
        %v3381 = vadd.f32 %v3380, 0.014752088
        %v3382 = vmul.f32 %v3366, %v3381
        %v3383 = vadd.f32 %v3382, 0.112945676
        %v3384 = vmul.f32 %v3366, %v3383
        %v3385 = vadd.f32 %v3384, 0.4994258
        %v3386 = vmul.f32 %v3366, %v3385
        %v3387 = vadd.f32 %v3386, 1.0
        %v3388 = vrcp.pop %v3387
        %v3389 = vmul.f32 %v3387, %v3388
        %v3390 = vsub.f32 1.0, %v3389
        %v3391 = vmul.f32 %v3388, %v3390
        %v3392 = vadd.f32 %v3388, %v3391
        %vm3393 = vweird.f32 %v3387
        %vm3394 = vweird.f32 %v3388
        %vm3395 = vmor %vm3393, %vm3394
        %v3396 = vsel %vm3395, %v3388, %v3392
        %v3397 = vand.u32 2147483647, %v3387
        %vm3398 = vcmp.eq.f32.partialorder %v3397, 8.507059e+37
        %v3399 = vand.u32 %v3387, 2147483648
        %v3400 = vor.u32 1.1754944e-38, %v3399
        %v3401 = vsel %vm3398, %v3400, %v3396
        %v3402 = vmul.f32 %v3377, %v3401
        %v3403 = vmin.f32 %v3402, 1.0
        %v3404 = vmax.f32 %v3403, -1.0
        %v3405 = vadd.f32 %v884, 1.0
        %v3406 = vadd.f32 %v924, 1.0
        %v3407 = vadd.f32 %v964, 1.0
        %v3408 = vadd.f32 %v1004, 1.0
        %v3409 = vadd.f32 %v1044, 1.0
        %v3410 = vadd.f32 %v1084, 1.0
        %v3411 = vadd.f32 %v1124, 1.0
        %v3412 = vadd.f32 %v1164, 1.0
        %v3413 = vadd.f32 %v1204, 1.0
        %v3414 = vadd.f32 %v1244, 1.0
        %v3415 = vadd.f32 %v1284, 1.0
        %v3416 = vadd.f32 %v1324, 1.0
        %v3417 = vadd.f32 %v1364, 1.0
        %v3418 = vadd.f32 %v1404, 1.0
        %v3419 = vadd.f32 %v1444, 1.0
        %v3420 = vadd.f32 %v1484, 1.0
        %v3421 = vadd.f32 %v1524, 1.0
        %v3422 = vadd.f32 %v1564, 1.0
        %v3423 = vadd.f32 %v1604, 1.0
        %v3424 = vadd.f32 %v1644, 1.0
        %v3425 = vadd.f32 %v1684, 1.0
        %v3426 = vadd.f32 %v1724, 1.0
        %v3427 = vadd.f32 %v1764, 1.0
        %v3428 = vadd.f32 %v1804, 1.0
        %v3429 = vadd.f32 %v1844, 1.0
        %v3430 = vadd.f32 %v1884, 1.0
        %v3431 = vadd.f32 %v1924, 1.0
        %v3432 = vadd.f32 %v1964, 1.0
        %v3433 = vadd.f32 %v2004, 1.0
        %v3434 = vadd.f32 %v2044, 1.0
        %v3435 = vadd.f32 %v2084, 1.0
        %v3436 = vadd.f32 %v2124, 1.0
        %v3437 = vadd.f32 %v2164, 1.0
        %v3438 = vadd.f32 %v2204, 1.0
        %v3439 = vadd.f32 %v2244, 1.0
        %v3440 = vadd.f32 %v2284, 1.0
        %v3441 = vadd.f32 %v2324, 1.0
        %v3442 = vadd.f32 %v2364, 1.0
        %v3443 = vadd.f32 %v2404, 1.0
        %v3444 = vadd.f32 %v2444, 1.0
        %v3445 = vadd.f32 %v2484, 1.0
        %v3446 = vadd.f32 %v2524, 1.0
        %v3447 = vadd.f32 %v2564, 1.0
        %v3448 = vadd.f32 %v2604, 1.0
        %v3449 = vadd.f32 %v2644, 1.0
        %v3450 = vadd.f32 %v2684, 1.0
        %v3451 = vadd.f32 %v2724, 1.0
        %v3452 = vadd.f32 %v2764, 1.0
        %v3453 = vadd.f32 %v2804, 1.0
        %v3454 = vadd.f32 %v2844, 1.0
        %v3455 = vadd.f32 %v2884, 1.0
        %v3456 = vadd.f32 %v2924, 1.0
        %v3457 = vadd.f32 %v2964, 1.0
        %v3458 = vadd.f32 %v3004, 1.0
        %v3459 = vadd.f32 %v3044, 1.0
        %v3460 = vadd.f32 %v3084, 1.0
        %v3461 = vadd.f32 %v3124, 1.0
        %v3462 = vadd.f32 %v3164, 1.0
        %v3463 = vadd.f32 %v3204, 1.0
        %v3464 = vadd.f32 %v3244, 1.0
        %v3465 = vadd.f32 %v3284, 1.0
        %v3466 = vadd.f32 %v3324, 1.0
        %v3467 = vadd.f32 %v3364, 1.0
        %v3468 = vadd.f32 %v3404, 1.0
        %v3469 = vmul.f32 %v717, %v3405
        %v3470 = vmul.f32 %v718, %v3406
        %v3471 = vmul.f32 %v719, %v3407
        %v3472 = vmul.f32 %v720, %v3408
        %v3473 = vmul.f32 %v721, %v3409
        %v3474 = vmul.f32 %v722, %v3410
        %v3475 = vmul.f32 %v723, %v3411
        %v3476 = vmul.f32 %v724, %v3412
        %v3477 = vmul.f32 %v725, %v3413
        %v3478 = vmul.f32 %v726, %v3414
        %v3479 = vmul.f32 %v727, %v3415
        %v3480 = vmul.f32 %v728, %v3416
        %v3481 = vmul.f32 %v729, %v3417
        %v3482 = vmul.f32 %v730, %v3418
        %v3483 = vmul.f32 %v731, %v3419
        %v3484 = vmul.f32 %v732, %v3420
        %v3485 = vmul.f32 %v733, %v3421
        %v3486 = vmul.f32 %v734, %v3422
        %v3487 = vmul.f32 %v735, %v3423
        %v3488 = vmul.f32 %v736, %v3424
        %v3489 = vmul.f32 %v737, %v3425
        %v3490 = vmul.f32 %v738, %v3426
        %v3491 = vmul.f32 %v739, %v3427
        %v3492 = vmul.f32 %v740, %v3428
        %v3493 = vmul.f32 %v741, %v3429
        %v3494 = vmul.f32 %v742, %v3430
        %v3495 = vmul.f32 %v743, %v3431
        %v3496 = vmul.f32 %v744, %v3432
        %v3497 = vmul.f32 %v745, %v3433
        %v3498 = vmul.f32 %v746, %v3434
        %v3499 = vmul.f32 %v747, %v3435
        %v3500 = vmul.f32 %v748, %v3436
        %v3501 = vmul.f32 %v749, %v3437
        %v3502 = vmul.f32 %v750, %v3438
        %v3503 = vmul.f32 %v751, %v3439
        %v3504 = vmul.f32 %v752, %v3440
        %v3505 = vmul.f32 %v753, %v3441
        %v3506 = vmul.f32 %v754, %v3442
        %v3507 = vmul.f32 %v755, %v3443
        %v3508 = vmul.f32 %v756, %v3444
        %v3509 = vmul.f32 %v757, %v3445
        %v3510 = vmul.f32 %v758, %v3446
        %v3511 = vmul.f32 %v759, %v3447
        %v3512 = vmul.f32 %v760, %v3448
        %v3513 = vmul.f32 %v761, %v3449
        %v3514 = vmul.f32 %v762, %v3450
        %v3515 = vmul.f32 %v763, %v3451
        %v3516 = vmul.f32 %v764, %v3452
        %v3517 = vmul.f32 %v765, %v3453
        %v3518 = vmul.f32 %v766, %v3454
        %v3519 = vmul.f32 %v767, %v3455
        %v3520 = vmul.f32 %v768, %v3456
        %v3521 = vmul.f32 %v769, %v3457
        %v3522 = vmul.f32 %v770, %v3458
        %v3523 = vmul.f32 %v771, %v3459
        %v3524 = vmul.f32 %v772, %v3460
        %v3525 = vmul.f32 %v773, %v3461
        %v3526 = vmul.f32 %v774, %v3462
        %v3527 = vmul.f32 %v775, %v3463
        %v3528 = vmul.f32 %v776, %v3464
        %v3529 = vmul.f32 %v777, %v3465
        %v3530 = vmul.f32 %v778, %v3466
        %v3531 = vmul.f32 %v779, %v3467
        %v3532 = vmul.f32 %v780, %v3468
        %v3533 = vpack.c.bf16 %v3473, %v3469
        %v3534 = vpack.c.bf16 %v3474, %v3470
        %v3535 = vpack.c.bf16 %v3475, %v3471
        %v3536 = vpack.c.bf16 %v3476, %v3472
        %v3537 = vpack.c.bf16 %v3481, %v3477
        %v3538 = vpack.c.bf16 %v3482, %v3478
        %v3539 = vpack.c.bf16 %v3483, %v3479
        %v3540 = vpack.c.bf16 %v3484, %v3480
        %v3541 = vpack.c.bf16 %v3489, %v3485
        %v3542 = vpack.c.bf16 %v3490, %v3486
        %v3543 = vpack.c.bf16 %v3491, %v3487
        %v3544 = vpack.c.bf16 %v3492, %v3488
        %v3545 = vpack.c.bf16 %v3497, %v3493
        %v3546 = vpack.c.bf16 %v3498, %v3494
        %v3547 = vpack.c.bf16 %v3499, %v3495
        %v3548 = vpack.c.bf16 %v3500, %v3496
        %v3549 = vpack.c.bf16 %v3505, %v3501
        %v3550 = vpack.c.bf16 %v3506, %v3502
        %v3551 = vpack.c.bf16 %v3507, %v3503
        %v3552 = vpack.c.bf16 %v3508, %v3504
        %v3553 = vpack.c.bf16 %v3513, %v3509
        %v3554 = vpack.c.bf16 %v3514, %v3510
        %v3555 = vpack.c.bf16 %v3515, %v3511
        %v3556 = vpack.c.bf16 %v3516, %v3512
        %v3557 = vpack.c.bf16 %v3521, %v3517
        %v3558 = vpack.c.bf16 %v3522, %v3518
        %v3559 = vpack.c.bf16 %v3523, %v3519
        %v3560 = vpack.c.bf16 %v3524, %v3520
        %v3561 = vpack.c.bf16 %v3529, %v3525
        %v3562 = vpack.c.bf16 %v3530, %v3526
        %v3563 = vpack.c.bf16 %v3531, %v3527
        %v3564 = vpack.c.bf16 %v3532, %v3528
        %v3565 = vld [vmem:[#allocation8] sm:$0xf]
        %v3566 = vld [vmem:[#allocation8 + $0x4] sm:$0xf]
        %v3567 = vld [vmem:[#allocation8 + $0x8] sm:$0xf]
        %v3568 = vld [vmem:[#allocation8 + $0xc] sm:$0xf]
        %v3569 = vld [vmem:[#allocation8 + $0x10] sm:$0xf]
        %v3570 = vld [vmem:[#allocation8 + $0x14] sm:$0xf]
        %v3571 = vld [vmem:[#allocation8 + $0x18] sm:$0xf]
        %v3572 = vld [vmem:[#allocation8 + $0x1c] sm:$0xf]
        %v3573 = vld [vmem:[#allocation8 + $0x20] sm:$0xf]
        %v3574 = vld [vmem:[#allocation8 + $0x24] sm:$0xf]
        %v3575 = vld [vmem:[#allocation8 + $0x28] sm:$0xf]
        %v3576 = vld [vmem:[#allocation8 + $0x2c] sm:$0xf]
        %v3577 = vld [vmem:[#allocation8 + $0x30] sm:$0xf]
        %v3578 = vld [vmem:[#allocation8 + $0x34] sm:$0xf]
        %v3579 = vld [vmem:[#allocation8 + $0x38] sm:$0xf]
        %v3580 = vld [vmem:[#allocation8 + $0x3c] sm:$0xf]
        %v3581 = vld [vmem:[#allocation8 + $0x40] sm:$0xf]
        %v3582 = vld [vmem:[#allocation8 + $0x44] sm:$0xf]
        %v3583 = vld [vmem:[#allocation8 + $0x48] sm:$0xf]
        %v3584 = vld [vmem:[#allocation8 + $0x4c] sm:$0xf]
        %v3585 = vld [vmem:[#allocation8 + $0x50] sm:$0xf]
        %v3586 = vld [vmem:[#allocation8 + $0x54] sm:$0xf]
        %v3587 = vld [vmem:[#allocation8 + $0x58] sm:$0xf]
        %v3588 = vld [vmem:[#allocation8 + $0x5c] sm:$0xf]
        %v3589 = vld [vmem:[#allocation8 + $0x60] sm:$0xf]
        %v3590 = vld [vmem:[#allocation8 + $0x64] sm:$0xf]
        %v3591 = vld [vmem:[#allocation8 + $0x68] sm:$0xf]
        %v3592 = vld [vmem:[#allocation8 + $0x6c] sm:$0xf]
        %v3593 = vld [vmem:[#allocation8 + $0x70] sm:$0xf]
        %v3594 = vld [vmem:[#allocation8 + $0x74] sm:$0xf]
        %v3595 = vld [vmem:[#allocation8 + $0x78] sm:$0xf]
        %v3596 = vld [vmem:[#allocation8 + $0x7c] sm:$0xf]
        %v3597 = vld [vmem:[#allocation8 + $0x80] sm:$0xf]
        %v3598 = vld [vmem:[#allocation8 + $0x84] sm:$0xf]
        %v3599 = vld [vmem:[#allocation8 + $0x88] sm:$0xf]
        %v3600 = vld [vmem:[#allocation8 + $0x8c] sm:$0xf]
        %v3601 = vld [vmem:[#allocation8 + $0x90] sm:$0xf]
        %v3602 = vld [vmem:[#allocation8 + $0x94] sm:$0xf]
        %v3603 = vld [vmem:[#allocation8 + $0x98] sm:$0xf]
        %v3604 = vld [vmem:[#allocation8 + $0x9c] sm:$0xf]
        %v3605 = vld [vmem:[#allocation8 + $0xa0] sm:$0xf]
        %v3606 = vld [vmem:[#allocation8 + $0xa4] sm:$0xf]
        %v3607 = vld [vmem:[#allocation8 + $0xa8] sm:$0xf]
        %v3608 = vld [vmem:[#allocation8 + $0xac] sm:$0xf]
        %v3609 = vld [vmem:[#allocation8 + $0xb0] sm:$0xf]
        %v3610 = vld [vmem:[#allocation8 + $0xb4] sm:$0xf]
        %v3611 = vld [vmem:[#allocation8 + $0xb8] sm:$0xf]
        %v3612 = vld [vmem:[#allocation8 + $0xbc] sm:$0xf]
        %v3613 = vld [vmem:[#allocation8 + $0xc0] sm:$0xf]
        %v3614 = vld [vmem:[#allocation8 + $0xc4] sm:$0xf]
        %v3615 = vld [vmem:[#allocation8 + $0xc8] sm:$0xf]
        %v3616 = vld [vmem:[#allocation8 + $0xcc] sm:$0xf]
        %v3617 = vld [vmem:[#allocation8 + $0xd0] sm:$0xf]
        %v3618 = vld [vmem:[#allocation8 + $0xd4] sm:$0xf]
        %v3619 = vld [vmem:[#allocation8 + $0xd8] sm:$0xf]
        %v3620 = vld [vmem:[#allocation8 + $0xdc] sm:$0xf]
        %v3621 = vld [vmem:[#allocation8 + $0xe0] sm:$0xf]
        %v3622 = vld [vmem:[#allocation8 + $0xe4] sm:$0xf]
        %v3623 = vld [vmem:[#allocation8 + $0xe8] sm:$0xf]
        %v3624 = vld [vmem:[#allocation8 + $0xec] sm:$0xf]
        %v3625 = vld [vmem:[#allocation8 + $0xf0] sm:$0xf]
        %v3626 = vld [vmem:[#allocation8 + $0xf4] sm:$0xf]
        %v3627 = vld [vmem:[#allocation8 + $0xf8] sm:$0xf]
        %v3628 = vld [vmem:[#allocation8 + $0xfc] sm:$0xf]
        %v3629 = vld [vmem:[%s4] sm:$0x1]
        %v3631 = vperm.slane %v3629, 0
        %v3697 = vunpack.c.l.b16 %v3565
        %v3698 = vunpack.c.l.b16 %v3566
        %v3699 = vunpack.c.l.b16 %v3567
        %v3700 = vunpack.c.l.b16 %v3568
        %v3701 = vunpack.c.l.b16 %v3569
        %v3702 = vunpack.c.l.b16 %v3570
        %v3703 = vunpack.c.l.b16 %v3571
        %v3704 = vunpack.c.l.b16 %v3572
        %v3705 = vunpack.c.l.b16 %v3573
        %v3706 = vunpack.c.l.b16 %v3574
        %v3707 = vunpack.c.l.b16 %v3575
        %v3708 = vunpack.c.l.b16 %v3576
        %v3709 = vunpack.c.l.b16 %v3577
        %v3710 = vunpack.c.l.b16 %v3578
        %v3711 = vunpack.c.l.b16 %v3579
        %v3712 = vunpack.c.l.b16 %v3580
        %v3713 = vunpack.c.l.b16 %v3581
        %v3714 = vunpack.c.l.b16 %v3582
        %v3715 = vunpack.c.l.b16 %v3583
        %v3716 = vunpack.c.l.b16 %v3584
        %v3717 = vunpack.c.l.b16 %v3585
        %v3718 = vunpack.c.l.b16 %v3586
        %v3719 = vunpack.c.l.b16 %v3587
        %v3720 = vunpack.c.l.b16 %v3588
        %v3721 = vunpack.c.l.b16 %v3589
        %v3722 = vunpack.c.l.b16 %v3590
        %v3723 = vunpack.c.l.b16 %v3591
        %v3724 = vunpack.c.l.b16 %v3592
        %v3725 = vunpack.c.l.b16 %v3593
        %v3726 = vunpack.c.l.b16 %v3594
        %v3727 = vunpack.c.l.b16 %v3595
        %v3728 = vunpack.c.l.b16 %v3596
        %v3729 = vunpack.c.l.b16 %v3597
        %v3730 = vunpack.c.l.b16 %v3598
        %v3731 = vunpack.c.l.b16 %v3599
        %v3732 = vunpack.c.l.b16 %v3600
        %v3733 = vunpack.c.l.b16 %v3601
        %v3734 = vunpack.c.l.b16 %v3602
        %v3735 = vunpack.c.l.b16 %v3603
        %v3736 = vunpack.c.l.b16 %v3604
        %v3737 = vunpack.c.l.b16 %v3605
        %v3738 = vunpack.c.l.b16 %v3606
        %v3739 = vunpack.c.l.b16 %v3607
        %v3740 = vunpack.c.l.b16 %v3608
        %v3741 = vunpack.c.l.b16 %v3609
        %v3742 = vunpack.c.l.b16 %v3610
        %v3743 = vunpack.c.l.b16 %v3611
        %v3744 = vunpack.c.l.b16 %v3612
        %v3745 = vunpack.c.l.b16 %v3613
        %v3746 = vunpack.c.l.b16 %v3614
        %v3747 = vunpack.c.l.b16 %v3615
        %v3748 = vunpack.c.l.b16 %v3616
        %v3749 = vunpack.c.l.b16 %v3617
        %v3750 = vunpack.c.l.b16 %v3618
        %v3751 = vunpack.c.l.b16 %v3619
        %v3752 = vunpack.c.l.b16 %v3620
        %v3753 = vunpack.c.l.b16 %v3621
        %v3754 = vunpack.c.l.b16 %v3622
        %v3755 = vunpack.c.l.b16 %v3623
        %v3756 = vunpack.c.l.b16 %v3624
        %v3757 = vunpack.c.l.b16 %v3625
        %v3758 = vunpack.c.l.b16 %v3626
        %v3759 = vunpack.c.l.b16 %v3627
        %v3760 = vunpack.c.l.b16 %v3628
        %v3761 = vpack.c.b16 %v3698, %v3697
        %v3762 = vpack.c.b16 %v3700, %v3699
        %v3763 = vpack.c.b16 %v3702, %v3701
        %v3764 = vpack.c.b16 %v3704, %v3703
        %v3765 = vpack.c.b16 %v3706, %v3705
        %v3766 = vpack.c.b16 %v3708, %v3707
        %v3767 = vpack.c.b16 %v3710, %v3709
        %v3768 = vpack.c.b16 %v3712, %v3711
        %v3769 = vpack.c.b16 %v3714, %v3713
        %v3770 = vpack.c.b16 %v3716, %v3715
        %v3771 = vpack.c.b16 %v3718, %v3717
        %v3772 = vpack.c.b16 %v3720, %v3719
        %v3773 = vpack.c.b16 %v3722, %v3721
        %v3774 = vpack.c.b16 %v3724, %v3723
        %v3775 = vpack.c.b16 %v3726, %v3725
        %v3776 = vpack.c.b16 %v3728, %v3727
        %v3777 = vpack.c.b16 %v3730, %v3729
        %v3778 = vpack.c.b16 %v3732, %v3731
        %v3779 = vpack.c.b16 %v3734, %v3733
        %v3780 = vpack.c.b16 %v3736, %v3735
        %v3781 = vpack.c.b16 %v3738, %v3737
        %v3782 = vpack.c.b16 %v3740, %v3739
        %v3783 = vpack.c.b16 %v3742, %v3741
        %v3784 = vpack.c.b16 %v3744, %v3743
        %v3785 = vpack.c.b16 %v3746, %v3745
        %v3786 = vpack.c.b16 %v3748, %v3747
        %v3787 = vpack.c.b16 %v3750, %v3749
        %v3788 = vpack.c.b16 %v3752, %v3751
        %v3789 = vpack.c.b16 %v3754, %v3753
        %v3790 = vpack.c.b16 %v3756, %v3755
        %v3791 = vpack.c.b16 %v3758, %v3757
        %v3792 = vpack.c.b16 %v3760, %v3759
        %3825 = vmatpush.bf16.msra.mxu0 %v3768
        %3826 = vmatpush.bf16.msra.mxu0 %v3767
        %3827 = vmatpush.bf16.msra.mxu0 %v3766
        %3828 = vmatpush.bf16.msra.mxu0 %v3765
        %3829 = vmatpush.bf16.msra.mxu0 %v3764
        %3830 = vmatpush.bf16.msra.mxu0 %v3763
        %3831 = vmatpush.bf16.msra.mxu0 %v3762
        %3832 = vmatpush.bf16.msra.mxu0 %v3761
        %3833 = vmatmul.bf16.gmra.mxu0 %v3533
        %v3834 = vpop.f32.mrf.mxu0
        %v3835 = vadd.f32 %v3631, %v3834
        %v3836 = vpop.f32.mrf.mxu0
        %v3837 = vadd.f32 %v3631, %v3836
        %3838 = vmatmul.bf16.gmra.mxu0 %v3537
        %v3839 = vpop.f32.mrf.mxu0
        %v3840 = vadd.f32 %v3631, %v3839
        %v3841 = vpop.f32.mrf.mxu0
        %v3842 = vadd.f32 %v3631, %v3841
        %3843 = vmatmul.bf16.gmra.mxu0 %v3541
        %v3844 = vpop.f32.mrf.mxu0
        %v3845 = vadd.f32 %v3631, %v3844
        %v3846 = vpop.f32.mrf.mxu0
        %v3847 = vadd.f32 %v3631, %v3846
        %3848 = vmatmul.bf16.gmra.mxu0 %v3545
        %v3849 = vpop.f32.mrf.mxu0
        %v3850 = vadd.f32 %v3631, %v3849
        %v3851 = vpop.f32.mrf.mxu0
        %v3852 = vadd.f32 %v3631, %v3851
        %3853 = vmatmul.bf16.gmra.mxu0 %v3549
        %v3854 = vpop.f32.mrf.mxu0
        %v3855 = vadd.f32 %v3631, %v3854
        %v3856 = vpop.f32.mrf.mxu0
        %v3857 = vadd.f32 %v3631, %v3856
        %3858 = vmatmul.bf16.gmra.mxu0 %v3553
        %v3859 = vpop.f32.mrf.mxu0
        %v3860 = vadd.f32 %v3631, %v3859
        %v3861 = vpop.f32.mrf.mxu0
        %v3862 = vadd.f32 %v3631, %v3861
        %3863 = vmatmul.bf16.gmra.mxu0 %v3557
        %v3864 = vpop.f32.mrf.mxu0
        %v3865 = vadd.f32 %v3631, %v3864
        %v3866 = vpop.f32.mrf.mxu0
        %v3867 = vadd.f32 %v3631, %v3866
        %3868 = vmatmul.bf16.gmra.mxu0 %v3561
        %v3869 = vpop.f32.mrf.mxu0
        %v3870 = vadd.f32 %v3631, %v3869
        %v3871 = vpop.f32.mrf.mxu0
        %v3872 = vadd.f32 %v3631, %v3871
        %3873 = vdwg.mxu0
        %3874 = vmatpush.bf16.msra.mxu0 %v3776
        %3875 = vmatpush.bf16.msra.mxu0 %v3775
        %3876 = vmatpush.bf16.msra.mxu0 %v3774
        %3877 = vmatpush.bf16.msra.mxu0 %v3773
        %3878 = vmatpush.bf16.msra.mxu0 %v3772
        %3879 = vmatpush.bf16.msra.mxu0 %v3771
        %3880 = vmatpush.bf16.msra.mxu0 %v3770
        %3881 = vmatpush.bf16.msra.mxu0 %v3769
        %3882 = vmatmul.bf16.gmra.mxu0 %v3534
        %v3883 = vpop.f32.mrf.mxu0
        %v3884 = vadd.f32 %v3835, %v3883
        %v3885 = vpop.f32.mrf.mxu0
        %v3886 = vadd.f32 %v3837, %v3885
        %3887 = vmatmul.bf16.gmra.mxu0 %v3538
        %v3888 = vpop.f32.mrf.mxu0
        %v3889 = vadd.f32 %v3840, %v3888
        %v3890 = vpop.f32.mrf.mxu0
        %v3891 = vadd.f32 %v3842, %v3890
        %3892 = vmatmul.bf16.gmra.mxu0 %v3542
        %v3893 = vpop.f32.mrf.mxu0
        %v3894 = vadd.f32 %v3845, %v3893
        %v3895 = vpop.f32.mrf.mxu0
        %v3896 = vadd.f32 %v3847, %v3895
        %3897 = vmatmul.bf16.gmra.mxu0 %v3546
        %v3898 = vpop.f32.mrf.mxu0
        %v3899 = vadd.f32 %v3850, %v3898
        %v3900 = vpop.f32.mrf.mxu0
        %v3901 = vadd.f32 %v3852, %v3900
        %3902 = vmatmul.bf16.gmra.mxu0 %v3550
        %v3903 = vpop.f32.mrf.mxu0
        %v3904 = vadd.f32 %v3855, %v3903
        %v3905 = vpop.f32.mrf.mxu0
        %v3906 = vadd.f32 %v3857, %v3905
        %3907 = vmatmul.bf16.gmra.mxu0 %v3554
        %v3908 = vpop.f32.mrf.mxu0
        %v3909 = vadd.f32 %v3860, %v3908
        %v3910 = vpop.f32.mrf.mxu0
        %v3911 = vadd.f32 %v3862, %v3910
        %3912 = vmatmul.bf16.gmra.mxu0 %v3558
        %v3913 = vpop.f32.mrf.mxu0
        %v3914 = vadd.f32 %v3865, %v3913
        %v3915 = vpop.f32.mrf.mxu0
        %v3916 = vadd.f32 %v3867, %v3915
        %3917 = vmatmul.bf16.gmra.mxu0 %v3562
        %v3918 = vpop.f32.mrf.mxu0
        %v3919 = vadd.f32 %v3870, %v3918
        %v3920 = vpop.f32.mrf.mxu0
        %v3921 = vadd.f32 %v3872, %v3920
        %3922 = vdwg.mxu0
        %3923 = vmatpush.bf16.msra.mxu0 %v3784
        %3924 = vmatpush.bf16.msra.mxu0 %v3783
        %3925 = vmatpush.bf16.msra.mxu0 %v3782
        %3926 = vmatpush.bf16.msra.mxu0 %v3781
        %3927 = vmatpush.bf16.msra.mxu0 %v3780
        %3928 = vmatpush.bf16.msra.mxu0 %v3779
        %3929 = vmatpush.bf16.msra.mxu0 %v3778
        %3930 = vmatpush.bf16.msra.mxu0 %v3777
        %3931 = vmatmul.bf16.gmra.mxu0 %v3535
        %v3932 = vpop.f32.mrf.mxu0
        %v3933 = vadd.f32 %v3884, %v3932
        %v3934 = vpop.f32.mrf.mxu0
        %v3935 = vadd.f32 %v3886, %v3934
        %3936 = vmatmul.bf16.gmra.mxu0 %v3539
        %v3937 = vpop.f32.mrf.mxu0
        %v3938 = vadd.f32 %v3889, %v3937
        %v3939 = vpop.f32.mrf.mxu0
        %v3940 = vadd.f32 %v3891, %v3939
        %3941 = vmatmul.bf16.gmra.mxu0 %v3543
        %v3942 = vpop.f32.mrf.mxu0
        %v3943 = vadd.f32 %v3894, %v3942
        %v3944 = vpop.f32.mrf.mxu0
        %v3945 = vadd.f32 %v3896, %v3944
        %3946 = vmatmul.bf16.gmra.mxu0 %v3547
        %v3947 = vpop.f32.mrf.mxu0
        %v3948 = vadd.f32 %v3899, %v3947
        %v3949 = vpop.f32.mrf.mxu0
        %v3950 = vadd.f32 %v3901, %v3949
        %3951 = vmatmul.bf16.gmra.mxu0 %v3551
        %v3952 = vpop.f32.mrf.mxu0
        %v3953 = vadd.f32 %v3904, %v3952
        %v3954 = vpop.f32.mrf.mxu0
        %v3955 = vadd.f32 %v3906, %v3954
        %3956 = vmatmul.bf16.gmra.mxu0 %v3555
        %v3957 = vpop.f32.mrf.mxu0
        %v3958 = vadd.f32 %v3909, %v3957
        %v3959 = vpop.f32.mrf.mxu0
        %v3960 = vadd.f32 %v3911, %v3959
        %3961 = vmatmul.bf16.gmra.mxu0 %v3559
        %v3962 = vpop.f32.mrf.mxu0
        %v3963 = vadd.f32 %v3914, %v3962
        %v3964 = vpop.f32.mrf.mxu0
        %v3965 = vadd.f32 %v3916, %v3964
        %3966 = vmatmul.bf16.gmra.mxu0 %v3563
        %v3967 = vpop.f32.mrf.mxu0
        %v3968 = vadd.f32 %v3919, %v3967
        %v3969 = vpop.f32.mrf.mxu0
        %v3970 = vadd.f32 %v3921, %v3969
        %3971 = vdwg.mxu0
        %3972 = vmatpush.bf16.msra.mxu0 %v3792
        %3973 = vmatpush.bf16.msra.mxu0 %v3791
        %3974 = vmatpush.bf16.msra.mxu0 %v3790
        %3975 = vmatpush.bf16.msra.mxu0 %v3789
        %3976 = vmatpush.bf16.msra.mxu0 %v3788
        %3977 = vmatpush.bf16.msra.mxu0 %v3787
        %3978 = vmatpush.bf16.msra.mxu0 %v3786
        %3979 = vmatpush.bf16.msra.mxu0 %v3785
        %3980 = vmatmul.bf16.gmra.mxu0 %v3536
        %v3981 = vpop.f32.mrf.mxu0
        %v3982 = vadd.f32 %v3933, %v3981
        %v3983 = vpop.f32.mrf.mxu0
        %v3984 = vadd.f32 %v3935, %v3983
        %3985 = vmatmul.bf16.gmra.mxu0 %v3540
        %v3986 = vpop.f32.mrf.mxu0
        %v3987 = vadd.f32 %v3938, %v3986
        %v3988 = vpop.f32.mrf.mxu0
        %v3989 = vadd.f32 %v3940, %v3988
        %3990 = vmatmul.bf16.gmra.mxu0 %v3544
        %v3991 = vpop.f32.mrf.mxu0
        %v3992 = vadd.f32 %v3943, %v3991
        %v3993 = vpop.f32.mrf.mxu0
        %v3994 = vadd.f32 %v3945, %v3993
        %3995 = vmatmul.bf16.gmra.mxu0 %v3548
        %v3996 = vpop.f32.mrf.mxu0
        %v3997 = vadd.f32 %v3948, %v3996
        %v3998 = vpop.f32.mrf.mxu0
        %v3999 = vadd.f32 %v3950, %v3998
        %4000 = vmatmul.bf16.gmra.mxu0 %v3552
        %v4001 = vpop.f32.mrf.mxu0
        %v4002 = vadd.f32 %v3953, %v4001
        %v4003 = vpop.f32.mrf.mxu0
        %v4004 = vadd.f32 %v3955, %v4003
        %4005 = vmatmul.bf16.gmra.mxu0 %v3556
        %v4006 = vpop.f32.mrf.mxu0
        %v4007 = vadd.f32 %v3958, %v4006
        %v4008 = vpop.f32.mrf.mxu0
        %v4009 = vadd.f32 %v3960, %v4008
        %4010 = vmatmul.bf16.gmra.mxu0 %v3560
        %v4011 = vpop.f32.mrf.mxu0
        %v4012 = vadd.f32 %v3963, %v4011
        %v4013 = vpop.f32.mrf.mxu0
        %v4014 = vadd.f32 %v3965, %v4013
        %4015 = vmatmul.bf16.gmra.mxu0 %v3564
        %v4016 = vpop.f32.mrf.mxu0
        %v4017 = vadd.f32 %v3968, %v4016
        %v4018 = vpop.f32.mrf.mxu0
        %v4019 = vadd.f32 %v3970, %v4018
        %4020 = vdwg.mxu0
        %4021 = vst [vmem:[%s292] sm:$0xff] %v3982
        %4022 = vst [vmem:[%s292 + $0x8] sm:$0xff] %v3984
        %4023 = vst [vmem:[%s292 + $0x10] sm:$0xff] %v3987
        %4024 = vst [vmem:[%s292 + $0x18] sm:$0xff] %v3989
        %4025 = vst [vmem:[%s292 + $0x20] sm:$0xff] %v3992
        %4026 = vst [vmem:[%s292 + $0x28] sm:$0xff] %v3994
        %4027 = vst [vmem:[%s292 + $0x30] sm:$0xff] %v3997
        %4028 = vst [vmem:[%s292 + $0x38] sm:$0xff] %v3999
        %4029 = vst [vmem:[%s292 + $0x40] sm:$0xff] %v4002
        %4030 = vst [vmem:[%s292 + $0x48] sm:$0xff] %v4004
        %4031 = vst [vmem:[%s292 + $0x50] sm:$0xff] %v4007
        %4032 = vst [vmem:[%s292 + $0x58] sm:$0xff] %v4009
        %4033 = vst [vmem:[%s292 + $0x60] sm:$0xff] %v4012
        %4034 = vst [vmem:[%s292 + $0x68] sm:$0xff] %v4014
        %4035 = vst [vmem:[%s292 + $0x70] sm:$0xff] %v4017
        %4036 = vst [vmem:[%s292 + $0x78] sm:$0xff] %v4019
        %s4037 = sand.u32 %s142, 1
        %s4038 = scalar_lea.sflag [#allocation4], %s4037
        %s4039 = sand.u32 %s142, 1
        %s4040 = smul.addr %s4039, 128
        %s4041 = scalar_lea.vmem [#allocation10], %s4040
        // Predicated region
        $region57: #{tpu_custom_call.1} parent=39 // pred_check
          %p4042 = pneg %p152
        $region58: #{tpu_custom_call.1} parent=39 // pred_check_branch
          %4044 = sbr.rel (%p4042) target = $region60
        $region59: #{tpu_custom_call.1} parent=39 // pred_region
          %s4045 = smul.u32 16, %s24
          %4047 = vsyncadd %s4038, 0
          %s4048 = smul.addr %s4045, 8
          %s4049 = scalar_lea.hbm %s5, %s4048
          %s4050 = sshll.u32 %s4041, 4
          %s4051 = int_to_ptr.vmem [resolvable:$true] %s4050
          %s4052 = sshll.u32 %s4049, 4
          %s4053 = int_to_ptr.hbm [resolvable:$true] %s4052
          %4058 = dma.vmem_to_hbm [thread:$0]  %s4051, 2048, %s4053, %s4038, 128, 128, 8
        $region60: #{tpu_custom_call.1} parent=39 // pred_fallthru
          _
      $region40: #{tpu_custom_call.1} parent=5 // pred_fallthru
        _
      %p4059 = scmp.le.s32.totalorder 2, %s19
      // Predicated region
      $region61: #{tpu_custom_call.1} parent=5 // pred_check
        %p4060 = pneg %p4059
      $region62: #{tpu_custom_call.1} parent=5 // pred_check_branch
        %4062 = sbr.rel (%p4060) target = $region64
      $region63: #{tpu_custom_call.1} parent=5 // pred_region
        %s4063 = ssub.s32 %s19, 2
        // Predicated region
        $region65: #{tpu_custom_call.1} parent=63 // pred_check
          %p4064 = pneg %p158
        $region66: #{tpu_custom_call.1} parent=63 // pred_check_branch
          %4066 = sbr.rel (%p4064) target = $region68
        $region67: #{tpu_custom_call.1} parent=63 // pred_region
          %s4067 = sand.u32 %s143, 1
          %s4068 = scalar_lea.sflag [#allocation4], %s4067
          %s4069 = sand.u32 %s143, 1
          %s4070 = smul.addr %s4069, 128
          %s4071 = scalar_lea.vmem [#allocation10], %s4070
          %4073 = dma.done %s4068, 2048
        $region68: #{tpu_custom_call.1} parent=63 // pred_fallthru
          _
      $region64: #{tpu_custom_call.1} parent=5 // pred_fallthru
        _
    $region6: #{tpu_custom_call.1} parent=1 // loop_footer
      %s23 = sadd.s32 1, %s19
    $region7: #{tpu_custom_call.1} parent=1 // loop_footer_branch
      %18 = sbr.rel target = $region3
    $region8: #{tpu_custom_call.1} parent=1 // loop_exit
      _
    %4074 = vsyncpa [#allocation3], 1
    %s4075 = scalar_lea.sflag [#allocation3], 1
    %4076 = vsyncpa %s4075, 1
    %4077 = vsyncpa [#allocation6], 1
    %4078 = vsyncpa [#allocation9], 1
    %4079 = vsyncpa [#allocation4], 1
    %s4080 = scalar_lea.sflag [#allocation4], 1
    %4081 = vsyncpa %s4080, 1

</llo_original>
